<compile_context>
chip_gen: v5e
topology: v5e:2x2
jax: 0.10.0
libtpu: 0.0.40
codegen_flags: <defaults>
</compile_context>

<pallas_src>
import functools

import numpy as np
import jax
import jax.numpy as jnp
from jax.experimental import pallas as pl
from jax.experimental.pallas import tpu as pltpu

EPS = 1e-5                    # nn.BatchNorm2d default eps
MXU_DTYPE = jnp.bfloat16      # MXU operand + HBM-side activation dtype


# ---------------------------------------------------------------------------
# Weight repacking: fold 3x3 kx taps + Cin->Cout mixing into 3 banded matrices.
# ---------------------------------------------------------------------------
def _banded_conv_weights(w_hwio, width):
    """(3, 3, Cin, Cout) -> (3, width*Cin, width*Cout).

    T[ky, xin*Cin + ci, x*Cout + co] = w[ky, kx, ci, co] with xin = x + kx - 1;
    out-of-range xin are dropped (this implements the W-direction zero pad).
    """
    kh, kw, cin, cout = w_hwio.shape
    assert kh == 3 and kw == 3
    # sel[kx, xin, x] = 1 iff xin == x + kx - 1
    sel = jnp.stack(
        [jnp.eye(width, k=1 - kx, dtype=w_hwio.dtype) for kx in range(3)])
    t = jnp.einsum("kax,ykio->yaixo", sel, w_hwio)
    return t.reshape(3, width * cin, width * cout)


# ---------------------------------------------------------------------------
# Kernel helpers
# ---------------------------------------------------------------------------
def _conv3x3_rows(rows, t_ref, img_h):
    """3x3 conv (stride 1, pad 1) over a stack of images laid out as rows.

    rows:  (R, W*Cin) value, R = imgs_per_step * img_h (any float dtype).
    t_ref: (3, W*Cin, W*Cout) banded weights ref (MXU dtype).
    Returns (R, W*Cout) float32.
    """
    rows = rows.astype(t_ref.dtype)
    nrows = rows.shape[0]
    # Three full-M unshifted matmuls; the ky (vertical) tap shift is applied
    # to the *outputs* with XLU rolls + row masks -- no misaligned operand
    # slices, no zero-halo scratch.
    z0 = jnp.dot(rows, t_ref[0], preferred_element_type=jnp.float32)
    z1 = jnp.dot(rows, t_ref[1], preferred_element_type=jnp.float32)
    z2 = jnp.dot(rows, t_ref[2], preferred_element_type=jnp.float32)

    row_idx = jax.lax.broadcasted_iota(jnp.int32, z1.shape, 0)
    not_first = (row_idx % img_h) != 0             # row h=0: no (h-1) tap
    not_last = (row_idx % img_h) != (img_h - 1)    # row h=H-1: no (h+1) tap

    down = pltpu.roll(z0, shift=1, axis=0)          # down[h] = z0[h-1]
    up = pltpu.roll(z2, shift=nrows - 1, axis=0)    # up[h]   = z2[h+1]
    return (z1 + jnp.where(not_first, down, 0.0)
            + jnp.where(not_last, up, 0.0))


def _emit_stats(stats_ref, vals_f32):
    """Per-step, per-lane partial sum / sum-of-squares for training-mode BN,
    packed into a single (1, 2, W*C) output block (one output stream)."""
    wc = vals_f32.shape[-1]
    stats_ref[:, 0:1, :] = jnp.sum(
        vals_f32, axis=0, keepdims=True).reshape(1, 1, wc)
    stats_ref[:, 1:2, :] = jnp.sum(
        vals_f32 * vals_f32, axis=0, keepdims=True).reshape(1, 1, wc)


# ---------------------------------------------------------------------------
# Kernels (grid = (n_steps,): imgs_per_step images per step, auto-pipelined)
# ---------------------------------------------------------------------------
def conv1_kernel(x_ref, t_ref, y_ref, stats_ref, *, img_h):
    """y1 = conv1(x); emit packed BN1 partial sums."""
    acc = _conv3x3_rows(x_ref[...], t_ref, img_h)
    y = acc.astype(y_ref.dtype)
    y_ref[...] = y
    # Stats from the stored (bf16-rounded) values so BN1 is consistent with
    # the activations it is later applied to.
    _emit_stats(stats_ref, y.astype(jnp.float32))


def bn1_relu_conv2_kernel(y1_ref, s1_ref, b1_ref, t_ref, y2_ref, stats_ref,
                          *, img_h):
    """h = relu(y1*scale1 + bias1); y2 = conv2(h); emit packed BN2 sums."""
    act = jnp.maximum(
        y1_ref[...].astype(jnp.float32) * s1_ref[...] + b1_ref[...], 0.0)
    acc = _conv3x3_rows(act, t_ref, img_h)
    y = acc.astype(y2_ref.dtype)
    y2_ref[...] = y
    _emit_stats(stats_ref, y.astype(jnp.float32))


def bn2_add_relu_kernel(y2_ref, s2_ref, b2_ref, x_ref, out_ref):
    """out = relu(y2*scale2 + bias2 + x): lane-dense FMA + add + max (f32)."""
    out_ref[...] = jnp.maximum(
        y2_ref[...].astype(jnp.float32) * s2_ref[...] + b2_ref[...]
        + x_ref[...].astype(jnp.float32), 0.0)


# ---------------------------------------------------------------------------
# Host-side BN finalize: reduce packed partial sums, fold mean/var/gamma/beta
# into a single per-lane (scale, bias) pair (one FMA in the next kernel).
# ---------------------------------------------------------------------------
def _bn_scale_bias(stats, gamma, beta, count, width, channels):
    s1 = stats[:, 0, :].sum(axis=0).reshape(width, channels).sum(axis=0)
    s2 = stats[:, 1, :].sum(axis=0).reshape(width, channels).sum(axis=0)
    mean = s1 / count
    # Biased variance (PyTorch training-mode normalization).  Note this is the
    # cancellation-prone form; fine at O(1) activation magnitudes.
    var = s2 / count - mean * mean
    scale = gamma * jax.lax.rsqrt(var + EPS)
    bias = beta - mean * scale
    # lane = x*C + c  ->  tile per-channel vectors across W
    return (jnp.tile(scale, width).reshape(1, width * channels),
            jnp.tile(bias, width).reshape(1, width * channels))


def _pick_imgs_per_step(n_imgs, img_h, target_rows=512, min_steps=2):
    """Largest divisor of N with imgs*H <= target_rows, keeping >= min_steps
    grid steps when possible (so v7x can use both TensorCores)."""
    best = 1
    for d in range(1, n_imgs + 1):
        if (n_imgs % d == 0 and d * img_h <= target_rows
                and n_imgs // d >= min(min_steps, n_imgs)):
            best = d
    return best


def basic_block_forward(x_nchw, w1_hwio, gamma1, beta1, w2_hwio, gamma2, beta2):
    """BasicBlock forward. x_nchw: (N, C, H, W); returns (N, C, H, W) f32."""
    x_nhwc = jnp.transpose(x_nchw, (0, 2, 3, 1))
    N, H, W, C = x_nhwc.shape
    P = w1_hwio.shape[-1]
    assert C == P, "downsample=None path requires inplanes == planes"
    wc_in, wc_out = W * C, W * P
    count = N * H * W
    total_rows = N * H

    imgs = _pick_imgs_per_step(N, H)
    n_steps = N // imgs
    rows = imgs * H                       # rows per grid step (matmul M)
    assert rows % 8 == 0 and wc_in % 128 == 0 and wc_out % 128 == 0, (
        "lane-dense layout needs (rows, W*C) tiles aligned to (8, 128)")
    # TODO(synk): relax with W-axis tiling / padding for general shapes.

    # Activations live in HBM as bf16 (half the traffic, incl. the residual
    # read in pass 3); all accumulation / BN / elementwise math stays f32.
    x2d = x_nhwc.reshape(total_rows, wc_in).astype(MXU_DTYPE)

    # One-time weight repack: 3x3 HWIO -> 3 banded (W*Cin, W*Cout) matrices.
    t1 = _banded_conv_weights(w1_hwio.astype(jnp.float32), W).astype(MXU_DTYPE)
    t2 = _banded_conv_weights(w2_hwio.astype(jnp.float32), W).astype(MXU_DTYPE)

    params = pltpu.CompilerParams(
        dimension_semantics=("parallel",),     # independent steps -> both TCs
        vmem_limit_bytes=32 * 1024 * 1024,
    )

    row_in = pl.BlockSpec((rows, wc_in), lambda n: (n, 0))
    row_out = pl.BlockSpec((rows, wc_out), lambda n: (n, 0))
    w1_spec = pl.BlockSpec((3, wc_in, wc_out), lambda n: (0, 0, 0))
    w2_spec = pl.BlockSpec((3, wc_out, wc_out), lambda n: (0, 0, 0))
    vec_spec = pl.BlockSpec((1, wc_out), lambda n: (0, 0))
    stat_spec = pl.BlockSpec((1, 2, wc_out), lambda n: (n, 0, 0))
    stat_shape = jax.ShapeDtypeStruct((n_steps, 2, wc_out), jnp.float32)

    mm_flops = 2 * total_rows * wc_in * wc_out * 3
    ew_flops = 8 * total_rows * wc_out
    act_bf16 = total_rows * wc_out * 2
    stat_bytes = n_steps * 2 * wc_out * 4
    vec_bytes = 2 * wc_out * 4

    # ---- pass 1: conv1 + packed BN1 partial stats --------------------------
    y1, stats1 = pl.pallas_call(
        functools.partial(conv1_kernel, img_h=H),
        grid=(n_steps,),
        in_specs=[row_in, w1_spec],
        out_specs=[row_out, stat_spec],
        out_shape=[jax.ShapeDtypeStruct((total_rows, wc_out), MXU_DTYPE),
                   stat_shape],
        compiler_params=params,
        cost_estimate=pl.CostEstimate(
            flops=mm_flops + ew_flops, transcendentals=0,
            bytes_accessed=(total_rows * wc_in * 2 + t1.size * 2
                            + act_bf16 + stat_bytes)),
    )(x2d, t1)

    scale1, bias1 = _bn_scale_bias(stats1, gamma1, beta1, count, W, P)

    # ---- pass 2: BN1-apply + ReLU + conv2 + packed BN2 partial stats -------
    y2, stats2 = pl.pallas_call(
        functools.partial(bn1_relu_conv2_kernel, img_h=H),
        grid=(n_steps,),
        in_specs=[row_out, vec_spec, vec_spec, w2_spec],
        out_specs=[row_out, stat_spec],
        out_shape=[jax.ShapeDtypeStruct((total_rows, wc_out), MXU_DTYPE),
                   stat_shape],
        compiler_params=params,
        cost_estimate=pl.CostEstimate(
            flops=mm_flops + 2 * ew_flops, transcendentals=0,
            bytes_accessed=(2 * act_bf16 + t2.size * 2
                            + vec_bytes + stat_bytes)),
    )(y1, scale1, bias1, t2)

    scale2, bias2 = _bn_scale_bias(stats2, gamma2, beta2, count, W, P)

    # ---- pass 3: BN2-apply + residual add + ReLU (pure elementwise,
    #              HBM-bound: biggest row blocks, bf16 y2 + bf16 residual) ----
    out2d = pl.pallas_call(
        bn2_add_relu_kernel,
        grid=(n_steps,),
        in_specs=[row_out, vec_spec, vec_spec, row_in],
        out_specs=pl.BlockSpec((rows, wc_out), lambda n: (n, 0)),
        out_shape=jax.ShapeDtypeStruct((total_rows, wc_out), jnp.float32),
        compiler_params=params,
        cost_estimate=pl.CostEstimate(
            flops=ew_flops, transcendentals=0,
            bytes_accessed=(2 * act_bf16 + vec_bytes
                            + total_rows * wc_out * 4)),
    )(y2, scale2, bias2, x2d)

    out = out2d.reshape(N, H, W, P)
    return jnp.transpose(out, (0, 3, 1, 2))      # back to NCHW


def reference_forward(x_nchw, w1_hwio, gamma1, beta1, w2_hwio, gamma2, beta2):
    """Pure-JAX f32 reference (same math, lax.conv), for correctness check."""
    def conv(x, w_hwio):
        w_oihw = jnp.transpose(w_hwio, (3, 2, 0, 1))
        return jax.lax.conv_general_dilated(
            x, w_oihw, window_strides=(1, 1), padding=((1, 1), (1, 1)),
            dimension_numbers=("NCHW", "OIHW", "NCHW"))

    def bn(x, g, b):
        mean = jnp.mean(x, axis=(0, 2, 3), keepdims=True)
        var = jnp.mean(jnp.square(x - mean), axis=(0, 2, 3), keepdims=True)
        return ((x - mean) * jax.lax.rsqrt(var + EPS)
                * g.reshape(1, -1, 1, 1) + b.reshape(1, -1, 1, 1))

    out = jax.nn.relu(bn(conv(x_nchw, w1_hwio), gamma1, beta1))
    out = bn(conv(out, w2_hwio), gamma2, beta2)
    return jax.nn.relu(out + x_nchw)


if __name__ == "__main__":
    # Small shapes consistent with the module (inplanes == planes required by
    # the residual add with downsample=None).  C=8, W=16 -> W*C = 128 lanes;
    # N=16, H=16 -> 8 images / step = 128-row matmul M, grid of 2 steps.
    N, C, H, W = 16, 8, 16, 16
    planes = C

    key = jax.random.PRNGKey(0)
    k0, k1, k2, k3, k4, k5, k6 = jax.random.split(key, 7)

    x = jax.random.normal(k0, (N, C, H, W), dtype=jnp.float32)
    # conv weights stored HWIO (3, 3, in, out); synthetic BN affine params.
    w1 = jax.random.normal(k1, (3, 3, C, planes), dtype=jnp.float32) * 0.1
    w2 = jax.random.normal(k2, (3, 3, planes, planes), dtype=jnp.float32) * 0.1
    gamma1 = 1.0 + 0.1 * jax.random.normal(k3, (planes,), dtype=jnp.float32)
    beta1 = 0.1 * jax.random.normal(k4, (planes,), dtype=jnp.float32)
    gamma2 = 1.0 + 0.1 * jax.random.normal(k5, (planes,), dtype=jnp.float32)
    beta2 = 0.1 * jax.random.normal(k6, (planes,), dtype=jnp.float32)

    out = jax.jit(basic_block_forward)(x, w1, gamma1, beta1, w2, gamma2, beta2)
    out = jax.block_until_ready(out)

    ref = jax.block_until_ready(
        reference_forward(x, w1, gamma1, beta1, w2, gamma2, beta2))

    # bf16 MXU operands / bf16 HBM-side activations vs an all-f32 reference ->
    # loose tolerance (f32 accumulation keeps the error well below this bound).
    np.testing.assert_allclose(np.asarray(out), np.asarray(ref),
                               atol=5e-2, rtol=5e-2)
    assert out.shape == (N, C, H, W)
    print("KERNEL_OK")
</pallas_src>

<mosaic_0001>
module attributes {stable_mosaic.version = 11 : i64} {
  func.func @conv1_kernel(%arg0: i32, %arg1: memref<128x128xbf16, #tpu.memory_space<vmem>>, %arg2: memref<3x128x128xbf16, #tpu.memory_space<vmem>>, %arg3: memref<128x128xbf16, #tpu.memory_space<vmem>>, %arg4: memref<1x2x128xf32, #tpu.memory_space<vmem>>) attributes {dimension_semantics = [#tpu.dimension_semantics<parallel>], iteration_bounds = array<i64: 2>, scalar_prefetch = 0 : i64, scratch_operands = 0 : i64, tpu.core_type = #tpu.core_type<tc>, window_params = [{transform_indices = @transform_0, window_bounds = array<i64: 128, 128>}, {pipeline_mode = #tpu.pipeline_mode<synchronous>, transform_indices = @transform_1, window_bounds = array<i64: 3, 128, 128>}, {transform_indices = @transform_2, window_bounds = array<i64: 128, 128>}, {transform_indices = @transform_3, window_bounds = array<i64: 1, 2, 128>}]} {
    %c0 = arith.constant 0 : index
    %c0_0 = arith.constant 0 : index
    %0 = vector.load %arg1[%c0, %c0_0] : memref<128x128xbf16, #tpu.memory_space<vmem>>, vector<128x128xbf16>
    %c0_1 = arith.constant 0 : index
    %c0_2 = arith.constant 0 : index
    %c0_3 = arith.constant 0 : index
    %1 = vector.load %arg2[%c0_1, %c0_2, %c0_3] : memref<3x128x128xbf16, #tpu.memory_space<vmem>>, vector<1x128x128xbf16>
    %2 = vector.shape_cast %1 : vector<1x128x128xbf16> to vector<128x128xbf16>
    %cst = arith.constant dense<0.000000e+00> : vector<128x128xf32>
    %3 = tpu.matmul %0, %2, %cst {dimension_numbers = #tpu.dot_dimension_numbers<[1], [0], [0], [1], [0, 0, 1, 1], [], []>} : vector<128x128xbf16>, vector<128x128xbf16>, vector<128x128xf32> -> vector<128x128xf32>
    %c1 = arith.constant 1 : index
    %c0_4 = arith.constant 0 : index
    %c0_5 = arith.constant 0 : index
    %4 = vector.load %arg2[%c1, %c0_4, %c0_5] : memref<3x128x128xbf16, #tpu.memory_space<vmem>>, vector<1x128x128xbf16>
    %5 = vector.shape_cast %4 : vector<1x128x128xbf16> to vector<128x128xbf16>
    %cst_6 = arith.constant dense<0.000000e+00> : vector<128x128xf32>
    %6 = tpu.matmul %0, %5, %cst_6 {dimension_numbers = #tpu.dot_dimension_numbers<[1], [0], [0], [1], [0, 0, 1, 1], [], []>} : vector<128x128xbf16>, vector<128x128xbf16>, vector<128x128xf32> -> vector<128x128xf32>
    %c2 = arith.constant 2 : index
    %c0_7 = arith.constant 0 : index
    %c0_8 = arith.constant 0 : index
    %7 = vector.load %arg2[%c2, %c0_7, %c0_8] : memref<3x128x128xbf16, #tpu.memory_space<vmem>>, vector<1x128x128xbf16>
    %8 = vector.shape_cast %7 : vector<1x128x128xbf16> to vector<128x128xbf16>
    %cst_9 = arith.constant dense<0.000000e+00> : vector<128x128xf32>
    %9 = tpu.matmul %0, %8, %cst_9 {dimension_numbers = #tpu.dot_dimension_numbers<[1], [0], [0], [1], [0, 0, 1, 1], [], []>} : vector<128x128xbf16>, vector<128x128xbf16>, vector<128x128xf32> -> vector<128x128xf32>
    %10 = tpu.iota {dimensions = array<i32: 0>} : vector<128x128xi32>
    %c16_i32 = arith.constant 16 : i32
    %c0_i32 = arith.constant 0 : i32
    %11 = arith.cmpi eq, %c16_i32, %c0_i32 : i32
    %c1_i32 = arith.constant 1 : i32
    %12 = arith.select %11, %c1_i32, %c16_i32 : i32
    %13 = vector.broadcast %12 : i32 to vector<128x128xi32>
    %14 = arith.remsi %10, %13 : vector<128x128xi32>
    %c0_i32_10 = arith.constant 0 : i32
    %15 = vector.broadcast %c0_i32_10 : i32 to vector<128x128xi32>
    %16 = arith.cmpi ne, %14, %15 : vector<128x128xi32>
    %c0_i32_11 = arith.constant 0 : i32
    %17 = vector.broadcast %c0_i32_11 : i32 to vector<128x128xi32>
    %18 = arith.cmpi slt, %14, %17 : vector<128x128xi32>
    %c0_i32_12 = arith.constant 0 : i32
    %19 = arith.cmpi slt, %12, %c0_i32_12 : i32
    %20 = vector.broadcast %19 : i1 to vector<128x128xi1>
    %21 = vector.broadcast %20 : vector<128x128xi1> to vector<128x128xi1>
    %22 = arith.xori %18, %21 : vector<128x128xi1>
    %23 = arith.andi %22, %16 : vector<128x128xi1>
    %24 = vector.broadcast %12 : i32 to vector<128x128xi32>
    %25 = arith.addi %14, %24 : vector<128x128xi32>
    %26 = arith.select %23, %25, %14 : vector<128x128xi1>, vector<128x128xi32>
    %c0_i32_13 = arith.constant 0 : i32
    %27 = vector.broadcast %c0_i32_13 : i32 to vector<128x128xi32>
    %28 = arith.cmpi ne, %26, %27 : vector<128x128xi32>
    %c16_i32_14 = arith.constant 16 : i32
    %c0_i32_15 = arith.constant 0 : i32
    %29 = arith.cmpi eq, %c16_i32_14, %c0_i32_15 : i32
    %c1_i32_16 = arith.constant 1 : i32
    %30 = arith.select %29, %c1_i32_16, %c16_i32_14 : i32
    %31 = vector.broadcast %30 : i32 to vector<128x128xi32>
    %32 = arith.remsi %10, %31 : vector<128x128xi32>
    %c0_i32_17 = arith.constant 0 : i32
    %33 = vector.broadcast %c0_i32_17 : i32 to vector<128x128xi32>
    %34 = arith.cmpi ne, %32, %33 : vector<128x128xi32>
    %c0_i32_18 = arith.constant 0 : i32
    %35 = vector.broadcast %c0_i32_18 : i32 to vector<128x128xi32>
    %36 = arith.cmpi slt, %32, %35 : vector<128x128xi32>
    %c0_i32_19 = arith.constant 0 : i32
    %37 = arith.cmpi slt, %30, %c0_i32_19 : i32
    %38 = vector.broadcast %37 : i1 to vector<128x128xi1>
    %39 = vector.broadcast %38 : vector<128x128xi1> to vector<128x128xi1>
    %40 = arith.xori %36, %39 : vector<128x128xi1>
    %41 = arith.andi %40, %34 : vector<128x128xi1>
    %42 = vector.broadcast %30 : i32 to vector<128x128xi32>
    %43 = arith.addi %32, %42 : vector<128x128xi32>
    %44 = arith.select %41, %43, %32 : vector<128x128xi1>, vector<128x128xi32>
    %c15_i32 = arith.constant 15 : i32
    %45 = vector.broadcast %c15_i32 : i32 to vector<128x128xi32>
    %46 = arith.cmpi ne, %44, %45 : vector<128x128xi32>
    %c1_i32_20 = arith.constant 1 : i32
    %47 = tpu.dynamic_rotate %3 by %c1_i32_20 dim 0 : vector<128x128xf32>, i32 -> vector<128x128xf32>
    %c127_i32 = arith.constant 127 : i32
    %48 = tpu.dynamic_rotate %9 by %c127_i32 dim 0 : vector<128x128xf32>, i32 -> vector<128x128xf32>
    %cst_21 = arith.constant 0.000000e+00 : f32
    %49 = vector.broadcast %cst_21 : f32 to vector<128x128xf32>
    %50 = arith.select %28, %47, %49 : vector<128x128xi1>, vector<128x128xf32>
    %51 = arith.addf %6, %50 : vector<128x128xf32>
    %cst_22 = arith.constant 0.000000e+00 : f32
    %52 = vector.broadcast %cst_22 : f32 to vector<128x128xf32>
    %53 = arith.select %46, %48, %52 : vector<128x128xi1>, vector<128x128xf32>
    %54 = arith.addf %51, %53 : vector<128x128xf32>
    %55 = arith.truncf %54 : vector<128x128xf32> to vector<128x128xbf16>
    %c0_23 = arith.constant 0 : index
    %c0_24 = arith.constant 0 : index
    %56 = vector.load %arg3[%c0_23, %c0_24] : memref<128x128xbf16, #tpu.memory_space<vmem>>, vector<128x128xbf16>
    tpu.vector_store %arg3[%c0_23, %c0_24], %55 {strides = array<i32>} : memref<128x128xbf16, #tpu.memory_space<vmem>>, vector<128x128xbf16>,
    %57 = arith.extf %55 : vector<128x128xbf16> to vector<128x128xf32>
    %cst_25 = arith.constant dense<0.000000e+00> : vector<128xf32>
    %58 = vector.multi_reduction <add>, %57, %cst_25 [0] : vector<128x128xf32> to vector<128xf32>
    %59 = vector.shape_cast %58 : vector<128xf32> to vector<1x128xf32>
    %60 = vector.shape_cast %59 : vector<1x128xf32> to vector<1x1x128xf32>
    %c0_26 = arith.constant 0 : index
    %c0_27 = arith.constant 0 : index
    %c0_28 = arith.constant 0 : index
    %61 = vector.load %arg4[%c0_26, %c0_27, %c0_28] : memref<1x2x128xf32, #tpu.memory_space<vmem>>, vector<1x1x128xf32>
    tpu.vector_store %arg4[%c0_26, %c0_27, %c0_28], %60 {strides = array<i32>} : memref<1x2x128xf32, #tpu.memory_space<vmem>>, vector<1x1x128xf32>,
    %62 = arith.mulf %57, %57 : vector<128x128xf32>
    %cst_29 = arith.constant dense<0.000000e+00> : vector<128xf32>
    %63 = vector.multi_reduction <add>, %62, %cst_29 [0] : vector<128x128xf32> to vector<128xf32>
    %64 = vector.shape_cast %63 : vector<128xf32> to vector<1x128xf32>
    %65 = vector.shape_cast %64 : vector<1x128xf32> to vector<1x1x128xf32>
    %c0_30 = arith.constant 0 : index
    %c1_31 = arith.constant 1 : index
    %c0_32 = arith.constant 0 : index
    %66 = vector.load %arg4[%c0_30, %c1_31, %c0_32] : memref<1x2x128xf32, #tpu.memory_space<vmem>>, vector<1x1x128xf32>
    tpu.vector_store %arg4[%c0_30, %c1_31, %c0_32], %65 {strides = array<i32>} : memref<1x2x128xf32, #tpu.memory_space<vmem>>, vector<1x1x128xf32>,
    return
  }
  func.func @transform_0(%arg0: i32) -> (i32, i32) {
    %c0_i32 = arith.constant 0 : i32
    %c0_i32_0 = arith.constant 0 : i32
    return %arg0, %c0_i32 : i32, i32
  }
  func.func @transform_1(%arg0: i32) -> (i32, i32, i32) {
    %c0_i32 = arith.constant 0 : i32
    %c0_i32_0 = arith.constant 0 : i32
    %c0_i32_1 = arith.constant 0 : i32
    %c0_i32_2 = arith.constant 0 : i32
    return %c0_i32, %c0_i32_0, %c0_i32_1 : i32, i32, i32
  }
  func.func @transform_2(%arg0: i32) -> (i32, i32) {
    %c0_i32 = arith.constant 0 : i32
    %c0_i32_0 = arith.constant 0 : i32
    return %arg0, %c0_i32 : i32, i32
  }
  func.func @transform_3(%arg0: i32) -> (i32, i32, i32) {
    %c0_i32 = arith.constant 0 : i32
    %c0_i32_0 = arith.constant 0 : i32
    %c0_i32_1 = arith.constant 0 : i32
    return %arg0, %c0_i32, %c0_i32_0 : i32, i32, i32
  }
}

module attributes {stable_mosaic.version = 11 : i64} {
  func.func @bn1_relu_conv2_kernel(%arg0: i32, %arg1: memref<128x128xbf16, #tpu.memory_space<vmem>>, %arg2: memref<1x128xf32, #tpu.memory_space<vmem>>, %arg3: memref<1x128xf32, #tpu.memory_space<vmem>>, %arg4: memref<3x128x128xbf16, #tpu.memory_space<vmem>>, %arg5: memref<128x128xbf16, #tpu.memory_space<vmem>>, %arg6: memref<1x2x128xf32, #tpu.memory_space<vmem>>) attributes {dimension_semantics = [#tpu.dimension_semantics<parallel>], iteration_bounds = array<i64: 2>, scalar_prefetch = 0 : i64, scratch_operands = 0 : i64, tpu.core_type = #tpu.core_type<tc>, window_params = [{transform_indices = @transform_0, window_bounds = array<i64: 128, 128>}, {pipeline_mode = #tpu.pipeline_mode<synchronous>, transform_indices = @transform_1, window_bounds = array<i64: 1, 128>}, {pipeline_mode = #tpu.pipeline_mode<synchronous>, transform_indices = @transform_2, window_bounds = array<i64: 1, 128>}, {pipeline_mode = #tpu.pipeline_mode<synchronous>, transform_indices = @transform_3, window_bounds = array<i64: 3, 128, 128>}, {transform_indices = @transform_4, window_bounds = array<i64: 128, 128>}, {transform_indices = @transform_5, window_bounds = array<i64: 1, 2, 128>}]} {
    %c0 = arith.constant 0 : index
    %c0_0 = arith.constant 0 : index
    %0 = vector.load %arg1[%c0, %c0_0] : memref<128x128xbf16, #tpu.memory_space<vmem>>, vector<128x128xbf16>
    %1 = arith.extf %0 : vector<128x128xbf16> to vector<128x128xf32>
    %c0_1 = arith.constant 0 : index
    %c0_2 = arith.constant 0 : index
    %2 = vector.load %arg2[%c0_1, %c0_2] : memref<1x128xf32, #tpu.memory_space<vmem>>, vector<1x128xf32>
    %3 = vector.broadcast %2 : vector<1x128xf32> to vector<128x128xf32>
    %4 = arith.mulf %1, %3 : vector<128x128xf32>
    %c0_3 = arith.constant 0 : index
    %c0_4 = arith.constant 0 : index
    %5 = vector.load %arg3[%c0_3, %c0_4] : memref<1x128xf32, #tpu.memory_space<vmem>>, vector<1x128xf32>
    %6 = vector.broadcast %5 : vector<1x128xf32> to vector<128x128xf32>
    %7 = arith.addf %4, %6 : vector<128x128xf32>
    %cst = arith.constant 0.000000e+00 : f32
    %8 = vector.broadcast %cst : f32 to vector<128x128xf32>
    %9 = arith.maximumf %7, %8 : vector<128x128xf32>
    %10 = arith.truncf %9 : vector<128x128xf32> to vector<128x128xbf16>
    %c0_5 = arith.constant 0 : index
    %c0_6 = arith.constant 0 : index
    %c0_7 = arith.constant 0 : index
    %11 = vector.load %arg4[%c0_5, %c0_6, %c0_7] : memref<3x128x128xbf16, #tpu.memory_space<vmem>>, vector<1x128x128xbf16>
    %12 = vector.shape_cast %11 : vector<1x128x128xbf16> to vector<128x128xbf16>
    %cst_8 = arith.constant dense<0.000000e+00> : vector<128x128xf32>
    %13 = tpu.matmul %10, %12, %cst_8 {dimension_numbers = #tpu.dot_dimension_numbers<[1], [0], [0], [1], [0, 0, 1, 1], [], []>} : vector<128x128xbf16>, vector<128x128xbf16>, vector<128x128xf32> -> vector<128x128xf32>
    %c1 = arith.constant 1 : index
    %c0_9 = arith.constant 0 : index
    %c0_10 = arith.constant 0 : index
    %14 = vector.load %arg4[%c1, %c0_9, %c0_10] : memref<3x128x128xbf16, #tpu.memory_space<vmem>>, vector<1x128x128xbf16>
    %15 = vector.shape_cast %14 : vector<1x128x128xbf16> to vector<128x128xbf16>
    %cst_11 = arith.constant dense<0.000000e+00> : vector<128x128xf32>
    %16 = tpu.matmul %10, %15, %cst_11 {dimension_numbers = #tpu.dot_dimension_numbers<[1], [0], [0], [1], [0, 0, 1, 1], [], []>} : vector<128x128xbf16>, vector<128x128xbf16>, vector<128x128xf32> -> vector<128x128xf32>
    %c2 = arith.constant 2 : index
    %c0_12 = arith.constant 0 : index
    %c0_13 = arith.constant 0 : index
    %17 = vector.load %arg4[%c2, %c0_12, %c0_13] : memref<3x128x128xbf16, #tpu.memory_space<vmem>>, vector<1x128x128xbf16>
    %18 = vector.shape_cast %17 : vector<1x128x128xbf16> to vector<128x128xbf16>
    %cst_14 = arith.constant dense<0.000000e+00> : vector<128x128xf32>
    %19 = tpu.matmul %10, %18, %cst_14 {dimension_numbers = #tpu.dot_dimension_numbers<[1], [0], [0], [1], [0, 0, 1, 1], [], []>} : vector<128x128xbf16>, vector<128x128xbf16>, vector<128x128xf32> -> vector<128x128xf32>
    %20 = tpu.iota {dimensions = array<i32: 0>} : vector<128x128xi32>
    %c16_i32 = arith.constant 16 : i32
    %c0_i32 = arith.constant 0 : i32
    %21 = arith.cmpi eq, %c16_i32, %c0_i32 : i32
    %c1_i32 = arith.constant 1 : i32
    %22 = arith.select %21, %c1_i32, %c16_i32 : i32
    %23 = vector.broadcast %22 : i32 to vector<128x128xi32>
    %24 = arith.remsi %20, %23 : vector<128x128xi32>
    %c0_i32_15 = arith.constant 0 : i32
    %25 = vector.broadcast %c0_i32_15 : i32 to vector<128x128xi32>
    %26 = arith.cmpi ne, %24, %25 : vector<128x128xi32>
    %c0_i32_16 = arith.constant 0 : i32
    %27 = vector.broadcast %c0_i32_16 : i32 to vector<128x128xi32>
    %28 = arith.cmpi slt, %24, %27 : vector<128x128xi32>
    %c0_i32_17 = arith.constant 0 : i32
    %29 = arith.cmpi slt, %22, %c0_i32_17 : i32
    %30 = vector.broadcast %29 : i1 to vector<128x128xi1>
    %31 = vector.broadcast %30 : vector<128x128xi1> to vector<128x128xi1>
    %32 = arith.xori %28, %31 : vector<128x128xi1>
    %33 = arith.andi %32, %26 : vector<128x128xi1>
    %34 = vector.broadcast %22 : i32 to vector<128x128xi32>
    %35 = arith.addi %24, %34 : vector<128x128xi32>
    %36 = arith.select %33, %35, %24 : vector<128x128xi1>, vector<128x128xi32>
    %c0_i32_18 = arith.constant 0 : i32
    %37 = vector.broadcast %c0_i32_18 : i32 to vector<128x128xi32>
    %38 = arith.cmpi ne, %36, %37 : vector<128x128xi32>
    %c16_i32_19 = arith.constant 16 : i32
    %c0_i32_20 = arith.constant 0 : i32
    %39 = arith.cmpi eq, %c16_i32_19, %c0_i32_20 : i32
    %c1_i32_21 = arith.constant 1 : i32
    %40 = arith.select %39, %c1_i32_21, %c16_i32_19 : i32
    %41 = vector.broadcast %40 : i32 to vector<128x128xi32>
    %42 = arith.remsi %20, %41 : vector<128x128xi32>
    %c0_i32_22 = arith.constant 0 : i32
    %43 = vector.broadcast %c0_i32_22 : i32 to vector<128x128xi32>
    %44 = arith.cmpi ne, %42, %43 : vector<128x128xi32>
    %c0_i32_23 = arith.constant 0 : i32
    %45 = vector.broadcast %c0_i32_23 : i32 to vector<128x128xi32>
    %46 = arith.cmpi slt, %42, %45 : vector<128x128xi32>
    %c0_i32_24 = arith.constant 0 : i32
    %47 = arith.cmpi slt, %40, %c0_i32_24 : i32
    %48 = vector.broadcast %47 : i1 to vector<128x128xi1>
    %49 = vector.broadcast %48 : vector<128x128xi1> to vector<128x128xi1>
    %50 = arith.xori %46, %49 : vector<128x128xi1>
    %51 = arith.andi %50, %44 : vector<128x128xi1>
    %52 = vector.broadcast %40 : i32 to vector<128x128xi32>
    %53 = arith.addi %42, %52 : vector<128x128xi32>
    %54 = arith.select %51, %53, %42 : vector<128x128xi1>, vector<128x128xi32>
    %c15_i32 = arith.constant 15 : i32
    %55 = vector.broadcast %c15_i32 : i32 to vector<128x128xi32>
    %56 = arith.cmpi ne, %54, %55 : vector<128x128xi32>
    %c1_i32_25 = arith.constant 1 : i32
    %57 = tpu.dynamic_rotate %13 by %c1_i32_25 dim 0 : vector<128x128xf32>, i32 -> vector<128x128xf32>
    %c127_i32 = arith.constant 127 : i32
    %58 = tpu.dynamic_rotate %19 by %c127_i32 dim 0 : vector<128x128xf32>, i32 -> vector<128x128xf32>
    %cst_26 = arith.constant 0.000000e+00 : f32
    %59 = vector.broadcast %cst_26 : f32 to vector<128x128xf32>
    %60 = arith.select %38, %57, %59 : vector<128x128xi1>, vector<128x128xf32>
    %61 = arith.addf %16, %60 : vector<128x128xf32>
    %cst_27 = arith.constant 0.000000e+00 : f32
    %62 = vector.broadcast %cst_27 : f32 to vector<128x128xf32>
    %63 = arith.select %56, %58, %62 : vector<128x128xi1>, vector<128x128xf32>
    %64 = arith.addf %61, %63 : vector<128x128xf32>
    %65 = arith.truncf %64 : vector<128x128xf32> to vector<128x128xbf16>
    %c0_28 = arith.constant 0 : index
    %c0_29 = arith.constant 0 : index
    %66 = vector.load %arg5[%c0_28, %c0_29] : memref<128x128xbf16, #tpu.memory_space<vmem>>, vector<128x128xbf16>
    tpu.vector_store %arg5[%c0_28, %c0_29], %65 {strides = array<i32>} : memref<128x128xbf16, #tpu.memory_space<vmem>>, vector<128x128xbf16>,
    %67 = arith.extf %65 : vector<128x128xbf16> to vector<128x128xf32>
    %cst_30 = arith.constant dense<0.000000e+00> : vector<128xf32>
    %68 = vector.multi_reduction <add>, %67, %cst_30 [0] : vector<128x128xf32> to vector<128xf32>
    %69 = vector.shape_cast %68 : vector<128xf32> to vector<1x128xf32>
    %70 = vector.shape_cast %69 : vector<1x128xf32> to vector<1x1x128xf32>
    %c0_31 = arith.constant 0 : index
    %c0_32 = arith.constant 0 : index
    %c0_33 = arith.constant 0 : index
    %71 = vector.load %arg6[%c0_31, %c0_32, %c0_33] : memref<1x2x128xf32, #tpu.memory_space<vmem>>, vector<1x1x128xf32>
    tpu.vector_store %arg6[%c0_31, %c0_32, %c0_33], %70 {strides = array<i32>} : memref<1x2x128xf32, #tpu.memory_space<vmem>>, vector<1x1x128xf32>,
    %72 = arith.mulf %67, %67 : vector<128x128xf32>
    %cst_34 = arith.constant dense<0.000000e+00> : vector<128xf32>
    %73 = vector.multi_reduction <add>, %72, %cst_34 [0] : vector<128x128xf32> to vector<128xf32>
    %74 = vector.shape_cast %73 : vector<128xf32> to vector<1x128xf32>
    %75 = vector.shape_cast %74 : vector<1x128xf32> to vector<1x1x128xf32>
    %c0_35 = arith.constant 0 : index
    %c1_36 = arith.constant 1 : index
    %c0_37 = arith.constant 0 : index
    %76 = vector.load %arg6[%c0_35, %c1_36, %c0_37] : memref<1x2x128xf32, #tpu.memory_space<vmem>>, vector<1x1x128xf32>
    tpu.vector_store %arg6[%c0_35, %c1_36, %c0_37], %75 {strides = array<i32>} : memref<1x2x128xf32, #tpu.memory_space<vmem>>, vector<1x1x128xf32>,
    return
  }
  func.func @transform_0(%arg0: i32) -> (i32, i32) {
    %c0_i32 = arith.constant 0 : i32
    %c0_i32_0 = arith.constant 0 : i32
    return %arg0, %c0_i32 : i32, i32
  }
  func.func @transform_1(%arg0: i32) -> (i32, i32) {
    %c0_i32 = arith.constant 0 : i32
    %c0_i32_0 = arith.constant 0 : i32
    %c0_i32_1 = arith.constant 0 : i32
    return %c0_i32, %c0_i32_0 : i32, i32
  }
  func.func @transform_2(%arg0: i32) -> (i32, i32) {
    %c0_i32 = arith.constant 0 : i32
    %c0_i32_0 = arith.constant 0 : i32
    %c0_i32_1 = arith.constant 0 : i32
    return %c0_i32, %c0_i32_0 : i32, i32
  }
  func.func @transform_3(%arg0: i32) -> (i32, i32, i32) {
    %c0_i32 = arith.constant 0 : i32
    %c0_i32_0 = arith.constant 0 : i32
    %c0_i32_1 = arith.constant 0 : i32
    %c0_i32_2 = arith.constant 0 : i32
    return %c0_i32, %c0_i32_0, %c0_i32_1 : i32, i32, i32
  }
  func.func @transform_4(%arg0: i32) -> (i32, i32) {
    %c0_i32 = arith.constant 0 : i32
    %c0_i32_0 = arith.constant 0 : i32
    return %arg0, %c0_i32 : i32, i32
  }
  func.func @transform_5(%arg0: i32) -> (i32, i32, i32) {
    %c0_i32 = arith.constant 0 : i32
    %c0_i32_0 = arith.constant 0 : i32
    %c0_i32_1 = arith.constant 0 : i32
    return %arg0, %c0_i32, %c0_i32_0 : i32, i32, i32
  }
}

module attributes {stable_mosaic.version = 11 : i64} {
  func.func @bn2_add_relu_kernel(%arg0: i32, %arg1: memref<128x128xbf16, #tpu.memory_space<vmem>>, %arg2: memref<1x128xf32, #tpu.memory_space<vmem>>, %arg3: memref<1x128xf32, #tpu.memory_space<vmem>>, %arg4: memref<128x128xbf16, #tpu.memory_space<vmem>>, %arg5: memref<128x128xf32, #tpu.memory_space<vmem>>) attributes {dimension_semantics = [#tpu.dimension_semantics<parallel>], iteration_bounds = array<i64: 2>, scalar_prefetch = 0 : i64, scratch_operands = 0 : i64, tpu.core_type = #tpu.core_type<tc>, window_params = [{transform_indices = @transform_0, window_bounds = array<i64: 128, 128>}, {pipeline_mode = #tpu.pipeline_mode<synchronous>, transform_indices = @transform_1, window_bounds = array<i64: 1, 128>}, {pipeline_mode = #tpu.pipeline_mode<synchronous>, transform_indices = @transform_2, window_bounds = array<i64: 1, 128>}, {transform_indices = @transform_3, window_bounds = array<i64: 128, 128>}, {transform_indices = @transform_4, window_bounds = array<i64: 128, 128>}]} {
    %c0 = arith.constant 0 : index
    %c0_0 = arith.constant 0 : index
    %0 = vector.load %arg1[%c0, %c0_0] : memref<128x128xbf16, #tpu.memory_space<vmem>>, vector<128x128xbf16>
    %1 = arith.extf %0 : vector<128x128xbf16> to vector<128x128xf32>
    %c0_1 = arith.constant 0 : index
    %c0_2 = arith.constant 0 : index
    %2 = vector.load %arg2[%c0_1, %c0_2] : memref<1x128xf32, #tpu.memory_space<vmem>>, vector<1x128xf32>
    %3 = vector.broadcast %2 : vector<1x128xf32> to vector<128x128xf32>
    %4 = arith.mulf %1, %3 : vector<128x128xf32>
    %c0_3 = arith.constant 0 : index
    %c0_4 = arith.constant 0 : index
    %5 = vector.load %arg3[%c0_3, %c0_4] : memref<1x128xf32, #tpu.memory_space<vmem>>, vector<1x128xf32>
    %6 = vector.broadcast %5 : vector<1x128xf32> to vector<128x128xf32>
    %7 = arith.addf %4, %6 : vector<128x128xf32>
    %c0_5 = arith.constant 0 : index
    %c0_6 = arith.constant 0 : index
    %8 = vector.load %arg4[%c0_5, %c0_6] : memref<128x128xbf16, #tpu.memory_space<vmem>>, vector<128x128xbf16>
    %9 = arith.extf %8 : vector<128x128xbf16> to vector<128x128xf32>
    %10 = arith.addf %7, %9 : vector<128x128xf32>
    %cst = arith.constant 0.000000e+00 : f32
    %11 = vector.broadcast %cst : f32 to vector<128x128xf32>
    %12 = arith.maximumf %10, %11 : vector<128x128xf32>
    %c0_7 = arith.constant 0 : index
    %c0_8 = arith.constant 0 : index
    %13 = vector.load %arg5[%c0_7, %c0_8] : memref<128x128xf32, #tpu.memory_space<vmem>>, vector<128x128xf32>
    tpu.vector_store %arg5[%c0_7, %c0_8], %12 {strides = array<i32>} : memref<128x128xf32, #tpu.memory_space<vmem>>, vector<128x128xf32>,
    return
  }
  func.func @transform_0(%arg0: i32) -> (i32, i32) {
    %c0_i32 = arith.constant 0 : i32
    %c0_i32_0 = arith.constant 0 : i32
    return %arg0, %c0_i32 : i32, i32
  }
  func.func @transform_1(%arg0: i32) -> (i32, i32) {
    %c0_i32 = arith.constant 0 : i32
    %c0_i32_0 = arith.constant 0 : i32
    %c0_i32_1 = arith.constant 0 : i32
    return %c0_i32, %c0_i32_0 : i32, i32
  }
  func.func @transform_2(%arg0: i32) -> (i32, i32) {
    %c0_i32 = arith.constant 0 : i32
    %c0_i32_0 = arith.constant 0 : i32
    %c0_i32_1 = arith.constant 0 : i32
    return %c0_i32, %c0_i32_0 : i32, i32
  }
  func.func @transform_3(%arg0: i32) -> (i32, i32) {
    %c0_i32 = arith.constant 0 : i32
    %c0_i32_0 = arith.constant 0 : i32
    return %arg0, %c0_i32 : i32, i32
  }
  func.func @transform_4(%arg0: i32) -> (i32, i32) {
    %c0_i32 = arith.constant 0 : i32
    %c0_i32_0 = arith.constant 0 : i32
    return %arg0, %c0_i32 : i32, i32
  }
}

</mosaic_0001>

<llo_original>
// kernel: basic_block_forward.3
$region0: #{basic_block_forward.3}
  #allocation0 [shape = 'u32[]', space=smem, size = 0x4, offset = 0x4, fixed_abs, tag = 'smem constant byte address 0x4 - core index']
  #allocation1 [shape = 'u32[72,128]{1,0:T(1,128)}', space=vmem, size = 0x9000, scoped, tag = 'internal scratch']
  %s0 = inlined_call_operand.vmem [shape: bf16[256,128], index: 0, kind: input, shape index: {}]
  %s1 = inlined_call_operand.vmem [shape: bf16[3,128,128], index: 1, kind: input, shape index: {}]
  %s2 = inlined_call_operand.vmem [shape: bf16[256,128], index: 2, kind: output, shape index: {0}]
  %s3 = inlined_call_operand.vmem [shape: f32[2,2,128], index: 3, kind: output, shape index: {1}]
  %4 = xla_tuple %s2, %s3
  %s5 = sld [smem:[#allocation0]]
  $region49: #{basic_block_forward.3} parent=0
    _
  %s7 = ssub.s32 1, %s5
  %s8 = scalar_select 0, %s7, %s5
  loop: start=0, step=1, limit=4
  $region2: #{basic_block_forward.3} parent=0 // loop_pre_header
    _
  $region3: #{basic_block_forward.3} parent=0 // loop_header
    %s10 = sphi 0, %s14
    %p11 = scmp.ge.s32.totalorder %s10, 4
    %s20 = sphi 0, %s22
    %s23 = sphi 0, %s20
    %s24 = sphi 0, %s23
    %s40 = sphi 0, %s24
    %s44 = sphi 0, %s44
    %s46 = sphi 0, %s44
    %s47 = sphi 0, %s46
    %s61 = sphi 0, %s47
    %s67 = sphi 0, %s69
    %s70 = sphi 0, %s67
    %s71 = sphi 0, %s70
    %s87 = sphi 0, %s71
    %s93 = sphi 0, %s95
    %s96 = sphi 0, %s93
    %s97 = sphi 0, %s96
    %s113 = sphi 0, %s97
  $region4: #{basic_block_forward.3} parent=0 // loop_header_branch
    %13 = sbr.rel (%p11) target = $region8
  $region5: #{basic_block_forward.3} parent=0 // loop_body
    %s15 = ssub.s32 %s10, 1
    %s16 = ssub.s32 %s10, 2
    %s17 = sadd.s32 %s10, 1
    %s18 = ssub.s32 %s10, %s17
    %p19 = scmp.eq.s32.totalorder %s18, 0
    %s21 = sadd.s32 %s20, 1
    %s22 = scalar_select %p19, %s20, %s21
    %p25 = pneg %p19
    %p26 = scmp.eq.s32.totalorder %s10, 1
    %p27 = por %p25, %p26
    %p28 = scmp.ne.s32.totalorder %s20, %s23
    %p29 = scmp.eq.s32.totalorder %s10, 0
    %p30 = por %p28, %p29
    %p31 = scmp.ne.s32.totalorder %s20, %s23
    %p32 = scmp.eq.s32.totalorder %s15, 1
    %p33 = por %p31, %p32
    %p34 = scmp.ne.s32.totalorder %s23, %s24
    %p35 = scmp.eq.s32.totalorder %s15, 0
    %p36 = por %p34, %p35
    %p37 = scmp.ne.s32.totalorder %s23, %s24
    %p38 = scmp.eq.s32.totalorder %s16, 1
    %p39 = por %p37, %p38
    %p41 = scmp.ne.s32.totalorder %s24, %s40
    %p42 = scmp.eq.s32.totalorder %s16, 0
    %p43 = por %p41, %p42
    %s45 = sadd.s32 %s44, 1
    %p48 = scmp.eq.s32.totalorder %s10, 1
    %p49 = scmp.ne.s32.totalorder %s44, %s46
    %p50 = scmp.eq.s32.totalorder %s10, 0
    %p51 = por %p49, %p50
    %p52 = scmp.ne.s32.totalorder %s44, %s46
    %p53 = scmp.eq.s32.totalorder %s15, 1
    %p54 = por %p52, %p53
    %p55 = scmp.ne.s32.totalorder %s46, %s47
    %p56 = scmp.eq.s32.totalorder %s15, 0
    %p57 = por %p55, %p56
    %p58 = scmp.ne.s32.totalorder %s46, %s47
    %p59 = scmp.eq.s32.totalorder %s16, 1
    %p60 = por %p58, %p59
    %p62 = scmp.ne.s32.totalorder %s47, %s61
    %p63 = scmp.eq.s32.totalorder %s16, 0
    %p64 = por %p62, %p63
    %s65 = ssub.s32 %s10, %s17
    %p66 = scmp.eq.s32.totalorder %s65, 0
    %s68 = sadd.s32 %s67, 1
    %s69 = scalar_select %p66, %s67, %s68
    %p72 = pneg %p66
    %p73 = scmp.eq.s32.totalorder %s10, 1
    %p74 = por %p72, %p73
    %p75 = scmp.ne.s32.totalorder %s67, %s70
    %p76 = scmp.eq.s32.totalorder %s10, 0
    %p77 = por %p75, %p76
    %p78 = scmp.ne.s32.totalorder %s67, %s70
    %p79 = scmp.eq.s32.totalorder %s15, 1
    %p80 = por %p78, %p79
    %p81 = scmp.ne.s32.totalorder %s70, %s71
    %p82 = scmp.eq.s32.totalorder %s15, 0
    %p83 = por %p81, %p82
    %p84 = scmp.ne.s32.totalorder %s70, %s71
    %p85 = scmp.eq.s32.totalorder %s16, 1
    %p86 = por %p84, %p85
    %p88 = scmp.ne.s32.totalorder %s71, %s87
    %p89 = scmp.eq.s32.totalorder %s16, 0
    %p90 = por %p88, %p89
    %s91 = ssub.s32 %s10, %s17
    %p92 = scmp.eq.s32.totalorder %s91, 0
    %s94 = sadd.s32 %s93, 1
    %s95 = scalar_select %p92, %s93, %s94
    %p98 = pneg %p92
    %p99 = scmp.eq.s32.totalorder %s10, 1
    %p100 = por %p98, %p99
    %p101 = scmp.ne.s32.totalorder %s93, %s96
    %p102 = scmp.eq.s32.totalorder %s10, 0
    %p103 = por %p101, %p102
    %p104 = scmp.ne.s32.totalorder %s93, %s96
    %p105 = scmp.eq.s32.totalorder %s15, 1
    %p106 = por %p104, %p105
    %p107 = scmp.ne.s32.totalorder %s96, %s97
    %p108 = scmp.eq.s32.totalorder %s15, 0
    %p109 = por %p107, %p108
    %p110 = scmp.ne.s32.totalorder %s96, %s97
    %p111 = scmp.eq.s32.totalorder %s16, 1
    %p112 = por %p110, %p111
    %p114 = scmp.ne.s32.totalorder %s97, %s113
    %p115 = scmp.eq.s32.totalorder %s16, 0
    %p116 = por %p114, %p115
    %p117 = scmp.le.s32.totalorder 1, %s10
    %p118 = scmp.lt.s32.totalorder %s10, 3
    %p119 = pnand %p117, %p118
    %p120 = pneg %p119
    // Predicated region
    $region9: #{basic_block_forward.3} parent=5 // pred_check
      _
    $region10: #{basic_block_forward.3} parent=5 // pred_check_branch
      %122 = sbr.rel (%p119) target = $region12
    $region11: #{basic_block_forward.3} parent=5 // pred_region
      %s123 = ssub.s32 %s10, 1
      // Predicated region
      $region13: #{basic_block_forward.3} parent=11 // pred_check
        %p124 = pneg %p57
      $region14: #{basic_block_forward.3} parent=11 // pred_check_branch
        %126 = sbr.rel (%p124) target = $region16
      $region15: #{basic_block_forward.3} parent=11 // pred_region
        _
      $region16: #{basic_block_forward.3} parent=11 // pred_fallthru
        _
    $region12: #{basic_block_forward.3} parent=5 // pred_fallthru
      _
    %p127 = scmp.lt.s32.totalorder %s10, 2
    // Predicated region
    $region17: #{basic_block_forward.3} parent=5 // pred_check
      %p128 = pneg %p127
    $region18: #{basic_block_forward.3} parent=5 // pred_check_branch
      %130 = sbr.rel (%p128) target = $region20
    $region19: #{basic_block_forward.3} parent=5 // pred_region
      // Predicated region
      $region21: #{basic_block_forward.3} parent=19 // pred_check
        %p131 = pneg %p30
      $region22: #{basic_block_forward.3} parent=19 // pred_check_branch
        %133 = sbr.rel (%p131) target = $region24
      $region23: #{basic_block_forward.3} parent=19 // pred_region
        %s134 = smul.u32 16, %s10
        %p135 = scmp.lt.s32.totalorder %s134, 31
        %s136 = scalar_select %p135, %s134, 31
        %s137 = smul.addr %s136, 4
        %s138 = scalar_lea.vmem %s0, %s137
        %s139 = smul.u32 16, %s10
      $region24: #{basic_block_forward.3} parent=19 // pred_fallthru
        _
    $region20: #{basic_block_forward.3} parent=5 // pred_fallthru
      _
    %p140 = scmp.le.s32.totalorder 1, %s10
    %p141 = scmp.lt.s32.totalorder %s10, 3
    %p142 = pnand %p140, %p141
    %p143 = pneg %p142
    // Predicated region
    $region25: #{basic_block_forward.3} parent=5 // pred_check
      _
    $region26: #{basic_block_forward.3} parent=5 // pred_check_branch
      %145 = sbr.rel (%p142) target = $region28
    $region27: #{basic_block_forward.3} parent=5 // pred_region
      %s146 = ssub.s32 %s10, 1
      %s147 = smul.u32 16, %s15
      %p148 = scmp.lt.s32.totalorder %s147, 31
      %s149 = scalar_select %p148, %s147, 31
      %s150 = smul.addr %s149, 4
      %s151 = scalar_lea.vmem %s0, %s150
      %p152 = pneg %p36
      %p153 = pneg %p33
      %p154 = pneg %p57
      %p155 = pneg %p54
      %p156 = pneg %p83
      %p157 = pneg %p80
      %s158 = smul.u32 16, %s15
      %p159 = scmp.lt.s32.totalorder %s158, 31
      %s160 = scalar_select %p159, %s158, 31
      %s161 = smul.addr %s160, 4
      %s162 = scalar_lea.vmem %s2, %s161
      %p163 = pneg %p109
      %p164 = pneg %p106
      %p165 = scmp.lt.s32.totalorder %s15, 1
      %s166 = scalar_select %p165, %s15, 1
      %s167 = smul.addr %s166, 2
      %s168 = scalar_lea.vmem %s3, %s167
      %s169 = smul.u32 16, %s15
      %p170 = scmp.lt.s32.totalorder %s169, 31
      %s171 = scalar_select %p170, %s169, 31
      %s172 = smul.addr %s171, 4
      %s173 = scalar_lea.vmem %s0, %s172
      %s174 = smul.u32 16, %s15
      %s175 = smul.u32 16, %s15
      %p176 = scmp.lt.s32.totalorder %s175, 31
      %s177 = scalar_select %p176, %s175, 31
      %s178 = smul.addr %s177, 4
      %s179 = scalar_lea.vmem %s2, %s178
      %s180 = smul.u32 16, %s15
      %p181 = scmp.lt.s32.totalorder %s15, 1
      %s182 = scalar_select %p181, %s15, 1
      %s183 = smul.addr %s182, 2
      %s184 = scalar_lea.vmem %s3, %s183
      %v185 = vld [vmem:[%s173] sm:$0xf]
      %v186 = vld [vmem:[%s173 + $0x4] sm:$0xf]
      %v187 = vld [vmem:[%s173 + $0x8] sm:$0xf]
      %v188 = vld [vmem:[%s173 + $0xc] sm:$0xf]
      %v189 = vld [vmem:[%s173 + $0x10] sm:$0xf]
      %v190 = vld [vmem:[%s173 + $0x14] sm:$0xf]
      %v191 = vld [vmem:[%s173 + $0x18] sm:$0xf]
      %v192 = vld [vmem:[%s173 + $0x1c] sm:$0xf]
      %v193 = vld [vmem:[%s173 + $0x20] sm:$0xf]
      %v194 = vld [vmem:[%s173 + $0x24] sm:$0xf]
      %v195 = vld [vmem:[%s173 + $0x28] sm:$0xf]
      %v196 = vld [vmem:[%s173 + $0x2c] sm:$0xf]
      %v197 = vld [vmem:[%s173 + $0x30] sm:$0xf]
      %v198 = vld [vmem:[%s173 + $0x34] sm:$0xf]
      %v199 = vld [vmem:[%s173 + $0x38] sm:$0xf]
      %v200 = vld [vmem:[%s173 + $0x3c] sm:$0xf]
      %v201 = vld [vmem:[%s1] sm:$0xf]
      %v202 = vld [vmem:[%s1 + $0x4] sm:$0xf]
      %v203 = vld [vmem:[%s1 + $0x8] sm:$0xf]
      %v204 = vld [vmem:[%s1 + $0xc] sm:$0xf]
      %v205 = vld [vmem:[%s1 + $0x10] sm:$0xf]
      %v206 = vld [vmem:[%s1 + $0x14] sm:$0xf]
      %v207 = vld [vmem:[%s1 + $0x18] sm:$0xf]
      %v208 = vld [vmem:[%s1 + $0x1c] sm:$0xf]
      %v209 = vld [vmem:[%s1 + $0x20] sm:$0xf]
      %v210 = vld [vmem:[%s1 + $0x24] sm:$0xf]
      %v211 = vld [vmem:[%s1 + $0x28] sm:$0xf]
      %v212 = vld [vmem:[%s1 + $0x2c] sm:$0xf]
      %v213 = vld [vmem:[%s1 + $0x30] sm:$0xf]
      %v214 = vld [vmem:[%s1 + $0x34] sm:$0xf]
      %v215 = vld [vmem:[%s1 + $0x38] sm:$0xf]
      %v216 = vld [vmem:[%s1 + $0x3c] sm:$0xf]
      %v233 = vunpack.c.l.b16 %v185
      %v234 = vunpack.c.l.b16 %v186
      %v235 = vunpack.c.l.b16 %v187
      %v236 = vunpack.c.l.b16 %v188
      %v237 = vunpack.c.l.b16 %v189
      %v238 = vunpack.c.l.b16 %v190
      %v239 = vunpack.c.l.b16 %v191
      %v240 = vunpack.c.l.b16 %v192
      %v241 = vunpack.c.l.b16 %v193
      %v242 = vunpack.c.l.b16 %v194
      %v243 = vunpack.c.l.b16 %v195
      %v244 = vunpack.c.l.b16 %v196
      %v245 = vunpack.c.l.b16 %v197
      %v246 = vunpack.c.l.b16 %v198
      %v247 = vunpack.c.l.b16 %v199
      %v248 = vunpack.c.l.b16 %v200
      %v249 = vpack.c.b16 %v234, %v233
      %v250 = vpack.c.b16 %v236, %v235
      %v251 = vpack.c.b16 %v238, %v237
      %v252 = vpack.c.b16 %v240, %v239
      %v253 = vpack.c.b16 %v242, %v241
      %v254 = vpack.c.b16 %v244, %v243
      %v255 = vpack.c.b16 %v246, %v245
      %v256 = vpack.c.b16 %v248, %v247
      %v281 = vunpack.c.l.b16 %v201
      %v282 = vunpack.c.l.b16 %v202
      %v283 = vunpack.c.l.b16 %v203
      %v284 = vunpack.c.l.b16 %v204
      %v285 = vunpack.c.l.b16 %v205
      %v286 = vunpack.c.l.b16 %v206
      %v287 = vunpack.c.l.b16 %v207
      %v288 = vunpack.c.l.b16 %v208
      %v289 = vunpack.c.l.b16 %v209
      %v290 = vunpack.c.l.b16 %v210
      %v291 = vunpack.c.l.b16 %v211
      %v292 = vunpack.c.l.b16 %v212
      %v293 = vunpack.c.l.b16 %v213
      %v294 = vunpack.c.l.b16 %v214
      %v295 = vunpack.c.l.b16 %v215
      %v296 = vunpack.c.l.b16 %v216
      %v297 = vpack.c.b16 %v282, %v281
      %v298 = vpack.c.b16 %v284, %v283
      %v299 = vpack.c.b16 %v286, %v285
      %v300 = vpack.c.b16 %v288, %v287
      %v301 = vpack.c.b16 %v290, %v289
      %v302 = vpack.c.b16 %v292, %v291
      %v303 = vpack.c.b16 %v294, %v293
      %v304 = vpack.c.b16 %v296, %v295
      %313 = vmatpush.bf16.msra.mxu0 %v304
      %314 = vmatpush.bf16.msra.mxu0 %v303
      %315 = vmatpush.bf16.msra.mxu0 %v302
      %316 = vmatpush.bf16.msra.mxu0 %v301
      %317 = vmatpush.bf16.msra.mxu0 %v300
      %318 = vmatpush.bf16.msra.mxu0 %v299
      %319 = vmatpush.bf16.msra.mxu0 %v298
      %320 = vmatpush.bf16.msra.mxu0 %v297
      %321 = vmatmul.bf16.gmra.mxu0 %v249
      %v322 = vpop.f32.mrf.mxu0
      %v323 = vadd.f32 0.0, %v322
      %v324 = vpop.f32.mrf.mxu0
      %v325 = vadd.f32 0.0, %v324
      %326 = vmatmul.bf16.gmra.mxu0 %v250
      %v327 = vpop.f32.mrf.mxu0
      %v328 = vadd.f32 0.0, %v327
      %v329 = vpop.f32.mrf.mxu0
      %v330 = vadd.f32 0.0, %v329
      %331 = vmatmul.bf16.gmra.mxu0 %v251
      %v332 = vpop.f32.mrf.mxu0
      %v333 = vadd.f32 0.0, %v332
      %v334 = vpop.f32.mrf.mxu0
      %v335 = vadd.f32 0.0, %v334
      %336 = vmatmul.bf16.gmra.mxu0 %v252
      %v337 = vpop.f32.mrf.mxu0
      %v338 = vadd.f32 0.0, %v337
      %v339 = vpop.f32.mrf.mxu0
      %v340 = vadd.f32 0.0, %v339
      %341 = vmatmul.bf16.gmra.mxu0 %v253
      %v342 = vpop.f32.mrf.mxu0
      %v343 = vadd.f32 0.0, %v342
      %v344 = vpop.f32.mrf.mxu0
      %v345 = vadd.f32 0.0, %v344
      %346 = vmatmul.bf16.gmra.mxu0 %v254
      %v347 = vpop.f32.mrf.mxu0
      %v348 = vadd.f32 0.0, %v347
      %v349 = vpop.f32.mrf.mxu0
      %v350 = vadd.f32 0.0, %v349
      %351 = vmatmul.bf16.gmra.mxu0 %v255
      %v352 = vpop.f32.mrf.mxu0
      %v353 = vadd.f32 0.0, %v352
      %v354 = vpop.f32.mrf.mxu0
      %v355 = vadd.f32 0.0, %v354
      %356 = vmatmul.bf16.gmra.mxu0 %v256
      %v357 = vpop.f32.mrf.mxu0
      %v358 = vadd.f32 0.0, %v357
      %v359 = vpop.f32.mrf.mxu0
      %v360 = vadd.f32 0.0, %v359
      %361 = vdwg.mxu0
      %s362 = scalar_lea.vmem %s1, 64
      %v363 = vld [vmem:[%s362] sm:$0xf]
      %v364 = vld [vmem:[%s362 + $0x4] sm:$0xf]
      %v365 = vld [vmem:[%s362 + $0x8] sm:$0xf]
      %v366 = vld [vmem:[%s362 + $0xc] sm:$0xf]
      %v367 = vld [vmem:[%s362 + $0x10] sm:$0xf]
      %v368 = vld [vmem:[%s362 + $0x14] sm:$0xf]
      %v369 = vld [vmem:[%s362 + $0x18] sm:$0xf]
      %v370 = vld [vmem:[%s362 + $0x1c] sm:$0xf]
      %v371 = vld [vmem:[%s362 + $0x20] sm:$0xf]
      %v372 = vld [vmem:[%s362 + $0x24] sm:$0xf]
      %v373 = vld [vmem:[%s362 + $0x28] sm:$0xf]
      %v374 = vld [vmem:[%s362 + $0x2c] sm:$0xf]
      %v375 = vld [vmem:[%s362 + $0x30] sm:$0xf]
      %v376 = vld [vmem:[%s362 + $0x34] sm:$0xf]
      %v377 = vld [vmem:[%s362 + $0x38] sm:$0xf]
      %v378 = vld [vmem:[%s362 + $0x3c] sm:$0xf]
      %s379 = scalar_lea.vmem %s1, 128
      %v380 = vld [vmem:[%s379] sm:$0xf]
      %v381 = vld [vmem:[%s379 + $0x4] sm:$0xf]
      %v382 = vld [vmem:[%s379 + $0x8] sm:$0xf]
      %v383 = vld [vmem:[%s379 + $0xc] sm:$0xf]
      %v384 = vld [vmem:[%s379 + $0x10] sm:$0xf]
      %v385 = vld [vmem:[%s379 + $0x14] sm:$0xf]
      %v386 = vld [vmem:[%s379 + $0x18] sm:$0xf]
      %v387 = vld [vmem:[%s379 + $0x1c] sm:$0xf]
      %v388 = vld [vmem:[%s379 + $0x20] sm:$0xf]
      %v389 = vld [vmem:[%s379 + $0x24] sm:$0xf]
      %v390 = vld [vmem:[%s379 + $0x28] sm:$0xf]
      %v391 = vld [vmem:[%s379 + $0x2c] sm:$0xf]
      %v392 = vld [vmem:[%s379 + $0x30] sm:$0xf]
      %v393 = vld [vmem:[%s379 + $0x34] sm:$0xf]
      %v394 = vld [vmem:[%s379 + $0x38] sm:$0xf]
      %v395 = vld [vmem:[%s379 + $0x3c] sm:$0xf]
      %v412 = vunpack.c.l.b16 %v380
      %v413 = vunpack.c.l.b16 %v381
      %v414 = vunpack.c.l.b16 %v382
      %v415 = vunpack.c.l.b16 %v383
      %v416 = vunpack.c.l.b16 %v384
      %v417 = vunpack.c.l.b16 %v385
      %v418 = vunpack.c.l.b16 %v386
      %v419 = vunpack.c.l.b16 %v387
      %v420 = vunpack.c.l.b16 %v388
      %v421 = vunpack.c.l.b16 %v389
      %v422 = vunpack.c.l.b16 %v390
      %v423 = vunpack.c.l.b16 %v391
      %v424 = vunpack.c.l.b16 %v392
      %v425 = vunpack.c.l.b16 %v393
      %v426 = vunpack.c.l.b16 %v394
      %v427 = vunpack.c.l.b16 %v395
      %v428 = vpack.c.b16 %v413, %v412
      %v429 = vpack.c.b16 %v415, %v414
      %v430 = vpack.c.b16 %v417, %v416
      %v431 = vpack.c.b16 %v419, %v418
      %v432 = vpack.c.b16 %v421, %v420
      %v433 = vpack.c.b16 %v423, %v422
      %v434 = vpack.c.b16 %v425, %v424
      %v435 = vpack.c.b16 %v427, %v426
      %444 = vmatpush.bf16.msra.mxu0 %v435
      %445 = vmatpush.bf16.msra.mxu0 %v434
      %446 = vmatpush.bf16.msra.mxu0 %v433
      %447 = vmatpush.bf16.msra.mxu0 %v432
      %448 = vmatpush.bf16.msra.mxu0 %v431
      %449 = vmatpush.bf16.msra.mxu0 %v430
      %450 = vmatpush.bf16.msra.mxu0 %v429
      %451 = vmatpush.bf16.msra.mxu0 %v428
      %452 = vmatmul.bf16.gmra.mxu0 %v249
      %v453 = vpop.f32.mrf.mxu0
      %v454 = vadd.f32 0.0, %v453
      %v455 = vpop.f32.mrf.mxu0
      %v456 = vadd.f32 0.0, %v455
      %457 = vmatmul.bf16.gmra.mxu0 %v250
      %v458 = vpop.f32.mrf.mxu0
      %v459 = vadd.f32 0.0, %v458
      %v460 = vpop.f32.mrf.mxu0
      %v461 = vadd.f32 0.0, %v460
      %462 = vmatmul.bf16.gmra.mxu0 %v251
      %v463 = vpop.f32.mrf.mxu0
      %v464 = vadd.f32 0.0, %v463
      %v465 = vpop.f32.mrf.mxu0
      %v466 = vadd.f32 0.0, %v465
      %467 = vmatmul.bf16.gmra.mxu0 %v252
      %v468 = vpop.f32.mrf.mxu0
      %v469 = vadd.f32 0.0, %v468
      %v470 = vpop.f32.mrf.mxu0
      %v471 = vadd.f32 0.0, %v470
      %472 = vmatmul.bf16.gmra.mxu0 %v253
      %v473 = vpop.f32.mrf.mxu0
      %v474 = vadd.f32 0.0, %v473
      %v475 = vpop.f32.mrf.mxu0
      %v476 = vadd.f32 0.0, %v475
      %477 = vmatmul.bf16.gmra.mxu0 %v254
      %v478 = vpop.f32.mrf.mxu0
      %v479 = vadd.f32 0.0, %v478
      %v480 = vpop.f32.mrf.mxu0
      %v481 = vadd.f32 0.0, %v480
      %482 = vmatmul.bf16.gmra.mxu0 %v255
      %v483 = vpop.f32.mrf.mxu0
      %v484 = vadd.f32 0.0, %v483
      %v485 = vpop.f32.mrf.mxu0
      %v486 = vadd.f32 0.0, %v485
      %487 = vmatmul.bf16.gmra.mxu0 %v256
      %v488 = vpop.f32.mrf.mxu0
      %v489 = vadd.f32 0.0, %v488
      %v490 = vpop.f32.mrf.mxu0
      %v491 = vadd.f32 0.0, %v490
      %492 = vdwg.mxu0
      %v493 = vlaneseq
      %v494 = vshrl.u32 %v493, 7
      %v495 = vadd.s32 %v494, 8
      %v496 = vadd.s32 %v494, 16
      %v497 = vadd.s32 %v494, 24
      %v498 = vadd.s32 %v494, 32
      %v499 = vadd.s32 %v494, 40
      %v500 = vadd.s32 %v494, 48
      %v501 = vadd.s32 %v494, 56
      %v502 = vadd.s32 %v494, 64
      %v503 = vadd.s32 %v494, 72
      %v504 = vadd.s32 %v494, 80
      %v505 = vadd.s32 %v494, 88
      %v506 = vadd.s32 %v494, 96
      %v507 = vadd.s32 %v494, 104
      %v508 = vadd.s32 %v494, 112
      %v509 = vadd.s32 %v494, 120
      %vm510 = vcmp.lt.s32.totalorder %v494, 0
      %v511 = vsub.s32 0, %v494
      %v512 = vsel %vm510, %v511, %v494
      %v513 = vshrl.u32 %v512, 4
      %v514 = vand.u32 %v512, 15
      %v515 = vsub.s32 0, %v514
      %v516 = vsel %vm510, %v515, %v514
      %vm517 = vcmp.lt.s32.totalorder %v495, 0
      %v518 = vsub.s32 0, %v495
      %v519 = vsel %vm517, %v518, %v495
      %v520 = vshrl.u32 %v519, 4
      %v521 = vand.u32 %v519, 15
      %v522 = vsub.s32 0, %v521
      %v523 = vsel %vm517, %v522, %v521
      %vm524 = vcmp.lt.s32.totalorder %v496, 0
      %v525 = vsub.s32 0, %v496
      %v526 = vsel %vm524, %v525, %v496
      %v527 = vshrl.u32 %v526, 4
      %v528 = vand.u32 %v526, 15
      %v529 = vsub.s32 0, %v528
      %v530 = vsel %vm524, %v529, %v528
      %vm531 = vcmp.lt.s32.totalorder %v497, 0
      %v532 = vsub.s32 0, %v497
      %v533 = vsel %vm531, %v532, %v497
      %v534 = vshrl.u32 %v533, 4
      %v535 = vand.u32 %v533, 15
      %v536 = vsub.s32 0, %v535
      %v537 = vsel %vm531, %v536, %v535
      %vm538 = vcmp.lt.s32.totalorder %v498, 0
      %v539 = vsub.s32 0, %v498
      %v540 = vsel %vm538, %v539, %v498
      %v541 = vshrl.u32 %v540, 4
      %v542 = vand.u32 %v540, 15
      %v543 = vsub.s32 0, %v542
      %v544 = vsel %vm538, %v543, %v542
      %vm545 = vcmp.lt.s32.totalorder %v499, 0
      %v546 = vsub.s32 0, %v499
      %v547 = vsel %vm545, %v546, %v499
      %v548 = vshrl.u32 %v547, 4
      %v549 = vand.u32 %v547, 15
      %v550 = vsub.s32 0, %v549
      %v551 = vsel %vm545, %v550, %v549
      %vm552 = vcmp.lt.s32.totalorder %v500, 0
      %v553 = vsub.s32 0, %v500
      %v554 = vsel %vm552, %v553, %v500
      %v555 = vshrl.u32 %v554, 4
      %v556 = vand.u32 %v554, 15
      %v557 = vsub.s32 0, %v556
      %v558 = vsel %vm552, %v557, %v556
      %vm559 = vcmp.lt.s32.totalorder %v501, 0
      %v560 = vsub.s32 0, %v501
      %v561 = vsel %vm559, %v560, %v501
      %v562 = vshrl.u32 %v561, 4
      %v563 = vand.u32 %v561, 15
      %v564 = vsub.s32 0, %v563
      %v565 = vsel %vm559, %v564, %v563
      %vm566 = vcmp.lt.s32.totalorder %v502, 0
      %v567 = vsub.s32 0, %v502
      %v568 = vsel %vm566, %v567, %v502
      %v569 = vshrl.u32 %v568, 4
      %v570 = vand.u32 %v568, 15
      %v571 = vsub.s32 0, %v570
      %v572 = vsel %vm566, %v571, %v570
      %vm573 = vcmp.lt.s32.totalorder %v503, 0
      %v574 = vsub.s32 0, %v503
      %v575 = vsel %vm573, %v574, %v503
      %v576 = vshrl.u32 %v575, 4
      %v577 = vand.u32 %v575, 15
      %v578 = vsub.s32 0, %v577
      %v579 = vsel %vm573, %v578, %v577
      %vm580 = vcmp.lt.s32.totalorder %v504, 0
      %v581 = vsub.s32 0, %v504
      %v582 = vsel %vm580, %v581, %v504
      %v583 = vshrl.u32 %v582, 4
      %v584 = vand.u32 %v582, 15
      %v585 = vsub.s32 0, %v584
      %v586 = vsel %vm580, %v585, %v584
      %vm587 = vcmp.lt.s32.totalorder %v505, 0
      %v588 = vsub.s32 0, %v505
      %v589 = vsel %vm587, %v588, %v505
      %v590 = vshrl.u32 %v589, 4
      %v591 = vand.u32 %v589, 15
      %v592 = vsub.s32 0, %v591
      %v593 = vsel %vm587, %v592, %v591
      %vm594 = vcmp.lt.s32.totalorder %v506, 0
      %v595 = vsub.s32 0, %v506
      %v596 = vsel %vm594, %v595, %v506
      %v597 = vshrl.u32 %v596, 4
      %v598 = vand.u32 %v596, 15
      %v599 = vsub.s32 0, %v598
      %v600 = vsel %vm594, %v599, %v598
      %vm601 = vcmp.lt.s32.totalorder %v507, 0
      %v602 = vsub.s32 0, %v507
      %v603 = vsel %vm601, %v602, %v507
      %v604 = vshrl.u32 %v603, 4
      %v605 = vand.u32 %v603, 15
      %v606 = vsub.s32 0, %v605
      %v607 = vsel %vm601, %v606, %v605
      %vm608 = vcmp.lt.s32.totalorder %v508, 0
      %v609 = vsub.s32 0, %v508
      %v610 = vsel %vm608, %v609, %v508
      %v611 = vshrl.u32 %v610, 4
      %v612 = vand.u32 %v610, 15
      %v613 = vsub.s32 0, %v612
      %v614 = vsel %vm608, %v613, %v612
      %vm615 = vcmp.lt.s32.totalorder %v509, 0
      %v616 = vsub.s32 0, %v509
      %v617 = vsel %vm615, %v616, %v509
      %v618 = vshrl.u32 %v617, 4
      %v619 = vand.u32 %v617, 15
      %v620 = vsub.s32 0, %v619
      %v621 = vsel %vm615, %v620, %v619
      %vm622 = vcmp.ne.s32.totalorder %v516, 0
      %vm623 = vcmp.ne.s32.totalorder %v523, 0
      %vm624 = vcmp.ne.s32.totalorder %v530, 0
      %vm625 = vcmp.ne.s32.totalorder %v537, 0
      %vm626 = vcmp.ne.s32.totalorder %v544, 0
      %vm627 = vcmp.ne.s32.totalorder %v551, 0
      %vm628 = vcmp.ne.s32.totalorder %v558, 0
      %vm629 = vcmp.ne.s32.totalorder %v565, 0
      %vm630 = vcmp.ne.s32.totalorder %v572, 0
      %vm631 = vcmp.ne.s32.totalorder %v579, 0
      %vm632 = vcmp.ne.s32.totalorder %v586, 0
      %vm633 = vcmp.ne.s32.totalorder %v593, 0
      %vm634 = vcmp.ne.s32.totalorder %v600, 0
      %vm635 = vcmp.ne.s32.totalorder %v607, 0
      %vm636 = vcmp.ne.s32.totalorder %v614, 0
      %vm637 = vcmp.ne.s32.totalorder %v621, 0
      %vm638 = vcmp.lt.s32.totalorder %v516, 0
      %vm639 = vcmp.lt.s32.totalorder %v523, 0
      %vm640 = vcmp.lt.s32.totalorder %v530, 0
      %vm641 = vcmp.lt.s32.totalorder %v537, 0
      %vm642 = vcmp.lt.s32.totalorder %v544, 0
      %vm643 = vcmp.lt.s32.totalorder %v551, 0
      %vm644 = vcmp.lt.s32.totalorder %v558, 0
      %vm645 = vcmp.lt.s32.totalorder %v565, 0
      %vm646 = vcmp.lt.s32.totalorder %v572, 0
      %vm647 = vcmp.lt.s32.totalorder %v579, 0
      %vm648 = vcmp.lt.s32.totalorder %v586, 0
      %vm649 = vcmp.lt.s32.totalorder %v593, 0
      %vm650 = vcmp.lt.s32.totalorder %v600, 0
      %vm651 = vcmp.lt.s32.totalorder %v607, 0
      %vm652 = vcmp.lt.s32.totalorder %v614, 0
      %vm653 = vcmp.lt.s32.totalorder %v621, 0
      %vm654 = vmand %vm638, %vm622
      %vm655 = vmand %vm639, %vm623
      %vm656 = vmand %vm640, %vm624
      %vm657 = vmand %vm641, %vm625
      %vm658 = vmand %vm642, %vm626
      %vm659 = vmand %vm643, %vm627
      %vm660 = vmand %vm644, %vm628
      %vm661 = vmand %vm645, %vm629
      %vm662 = vmand %vm646, %vm630
      %vm663 = vmand %vm647, %vm631
      %vm664 = vmand %vm648, %vm632
      %vm665 = vmand %vm649, %vm633
      %vm666 = vmand %vm650, %vm634
      %vm667 = vmand %vm651, %vm635
      %vm668 = vmand %vm652, %vm636
      %vm669 = vmand %vm653, %vm637
      %v670 = vadd.s32 %v516, 16
      %v671 = vadd.s32 %v523, 16
      %v672 = vadd.s32 %v530, 16
      %v673 = vadd.s32 %v537, 16
      %v674 = vadd.s32 %v544, 16
      %v675 = vadd.s32 %v551, 16
      %v676 = vadd.s32 %v558, 16
      %v677 = vadd.s32 %v565, 16
      %v678 = vadd.s32 %v572, 16
      %v679 = vadd.s32 %v579, 16
      %v680 = vadd.s32 %v586, 16
      %v681 = vadd.s32 %v593, 16
      %v682 = vadd.s32 %v600, 16
      %v683 = vadd.s32 %v607, 16
      %v684 = vadd.s32 %v614, 16
      %v685 = vadd.s32 %v621, 16
      %v686 = vsel %vm654, %v670, %v516
      %v687 = vsel %vm655, %v671, %v523
      %v688 = vsel %vm656, %v672, %v530
      %v689 = vsel %vm657, %v673, %v537
      %v690 = vsel %vm658, %v674, %v544
      %v691 = vsel %vm659, %v675, %v551
      %v692 = vsel %vm660, %v676, %v558
      %v693 = vsel %vm661, %v677, %v565
      %v694 = vsel %vm662, %v678, %v572
      %v695 = vsel %vm663, %v679, %v579
      %v696 = vsel %vm664, %v680, %v586
      %v697 = vsel %vm665, %v681, %v593
      %v698 = vsel %vm666, %v682, %v600
      %v699 = vsel %vm667, %v683, %v607
      %v700 = vsel %vm668, %v684, %v614
      %v701 = vsel %vm669, %v685, %v621
      %vm702 = vcmp.ne.s32.totalorder %v686, 0
      %vm703 = vcmp.ne.s32.totalorder %v687, 0
      %vm704 = vcmp.ne.s32.totalorder %v688, 0
      %vm705 = vcmp.ne.s32.totalorder %v689, 0
      %vm706 = vcmp.ne.s32.totalorder %v690, 0
      %vm707 = vcmp.ne.s32.totalorder %v691, 0
      %vm708 = vcmp.ne.s32.totalorder %v692, 0
      %vm709 = vcmp.ne.s32.totalorder %v693, 0
      %vm710 = vcmp.ne.s32.totalorder %v694, 0
      %vm711 = vcmp.ne.s32.totalorder %v695, 0
      %vm712 = vcmp.ne.s32.totalorder %v696, 0
      %vm713 = vcmp.ne.s32.totalorder %v697, 0
      %vm714 = vcmp.ne.s32.totalorder %v698, 0
      %vm715 = vcmp.ne.s32.totalorder %v699, 0
      %vm716 = vcmp.ne.s32.totalorder %v700, 0
      %vm717 = vcmp.ne.s32.totalorder %v701, 0
      %vm718 = vcmp.ne.s32.totalorder %v686, 15
      %vm719 = vcmp.ne.s32.totalorder %v687, 15
      %vm720 = vcmp.ne.s32.totalorder %v688, 15
      %vm721 = vcmp.ne.s32.totalorder %v689, 15
      %vm722 = vcmp.ne.s32.totalorder %v690, 15
      %vm723 = vcmp.ne.s32.totalorder %v691, 15
      %vm724 = vcmp.ne.s32.totalorder %v692, 15
      %vm725 = vcmp.ne.s32.totalorder %v693, 15
      %vm726 = vcmp.ne.s32.totalorder %v694, 15
      %vm727 = vcmp.ne.s32.totalorder %v695, 15
      %vm728 = vcmp.ne.s32.totalorder %v696, 15
      %vm729 = vcmp.ne.s32.totalorder %v697, 15
      %vm730 = vcmp.ne.s32.totalorder %v698, 15
      %vm731 = vcmp.ne.s32.totalorder %v699, 15
      %vm732 = vcmp.ne.s32.totalorder %v700, 15
      %vm733 = vcmp.ne.s32.totalorder %v701, 15
      %v734 = vrot.slane %v323, 7
      %v735 = vrot.slane %v325, 7
      %v736 = vrot.slane %v328, 7
      %v737 = vrot.slane %v330, 7
      %v738 = vrot.slane %v333, 7
      %v739 = vrot.slane %v335, 7
      %v740 = vrot.slane %v338, 7
      %v741 = vrot.slane %v340, 7
      %v742 = vrot.slane %v343, 7
      %v743 = vrot.slane %v345, 7
      %v744 = vrot.slane %v348, 7
      %v745 = vrot.slane %v350, 7
      %v746 = vrot.slane %v353, 7
      %v747 = vrot.slane %v355, 7
      %v748 = vrot.slane %v358, 7
      %v749 = vrot.slane %v360, 7
      %vm750 = vcmp.lt.s32.totalorder %v494, 1
      %v751 = vsel %vm750, %v748, %v749
      %v752 = vsel %vm750, %v747, %v748
      %v753 = vsel %vm750, %v746, %v747
      %v754 = vsel %vm750, %v745, %v746
      %v755 = vsel %vm750, %v744, %v745
      %v756 = vsel %vm750, %v743, %v744
      %v757 = vsel %vm750, %v742, %v743
      %v758 = vsel %vm750, %v741, %v742
      %v759 = vsel %vm750, %v740, %v741
      %v760 = vsel %vm750, %v739, %v740
      %v761 = vsel %vm750, %v738, %v739
      %v762 = vsel %vm750, %v737, %v738
      %v763 = vsel %vm750, %v736, %v737
      %v764 = vsel %vm750, %v735, %v736
      %v765 = vsel %vm750, %v734, %v735
      %v766 = vsel %vm750, %v749, %v734
      %v767 = vrot.slane %v454, 1
      %v768 = vrot.slane %v456, 1
      %v769 = vrot.slane %v459, 1
      %v770 = vrot.slane %v461, 1
      %v771 = vrot.slane %v464, 1
      %v772 = vrot.slane %v466, 1
      %v773 = vrot.slane %v469, 1
      %v774 = vrot.slane %v471, 1
      %v775 = vrot.slane %v474, 1
      %v776 = vrot.slane %v476, 1
      %v777 = vrot.slane %v479, 1
      %v778 = vrot.slane %v481, 1
      %v779 = vrot.slane %v484, 1
      %v780 = vrot.slane %v486, 1
      %v781 = vrot.slane %v489, 1
      %v782 = vrot.slane %v491, 1
      %vm783 = vcmp.lt.s32.totalorder %v494, 7
      %v784 = vsel %vm783, %v781, %v782
      %v785 = vsel %vm783, %v780, %v781
      %v786 = vsel %vm783, %v779, %v780
      %v787 = vsel %vm783, %v778, %v779
      %v788 = vsel %vm783, %v777, %v778
      %v789 = vsel %vm783, %v776, %v777
      %v790 = vsel %vm783, %v775, %v776
      %v791 = vsel %vm783, %v774, %v775
      %v792 = vsel %vm783, %v773, %v774
      %v793 = vsel %vm783, %v772, %v773
      %v794 = vsel %vm783, %v771, %v772
      %v795 = vsel %vm783, %v770, %v771
      %v796 = vsel %vm783, %v769, %v770
      %v797 = vsel %vm783, %v768, %v769
      %v798 = vsel %vm783, %v767, %v768
      %v799 = vsel %vm783, %v782, %v767
      %v800 = vsel %vm702, %v766, 0.0
      %v801 = vsel %vm703, %v765, 0.0
      %v802 = vsel %vm704, %v764, 0.0
      %v803 = vsel %vm705, %v763, 0.0
      %v804 = vsel %vm706, %v762, 0.0
      %v805 = vsel %vm707, %v761, 0.0
      %v806 = vsel %vm708, %v760, 0.0
      %v807 = vsel %vm709, %v759, 0.0
      %v808 = vsel %vm710, %v758, 0.0
      %v809 = vsel %vm711, %v757, 0.0
      %v810 = vsel %vm712, %v756, 0.0
      %v811 = vsel %vm713, %v755, 0.0
      %v812 = vsel %vm714, %v754, 0.0
      %v813 = vsel %vm715, %v753, 0.0
      %v814 = vsel %vm716, %v752, 0.0
      %v815 = vsel %vm717, %v751, 0.0
      %v832 = vunpack.c.l.b16 %v363
      %v833 = vunpack.c.l.b16 %v364
      %v834 = vunpack.c.l.b16 %v365
      %v835 = vunpack.c.l.b16 %v366
      %v836 = vunpack.c.l.b16 %v367
      %v837 = vunpack.c.l.b16 %v368
      %v838 = vunpack.c.l.b16 %v369
      %v839 = vunpack.c.l.b16 %v370
      %v840 = vunpack.c.l.b16 %v371
      %v841 = vunpack.c.l.b16 %v372
      %v842 = vunpack.c.l.b16 %v373
      %v843 = vunpack.c.l.b16 %v374
      %v844 = vunpack.c.l.b16 %v375
      %v845 = vunpack.c.l.b16 %v376
      %v846 = vunpack.c.l.b16 %v377
      %v847 = vunpack.c.l.b16 %v378
      %v848 = vpack.c.b16 %v833, %v832
      %v849 = vpack.c.b16 %v835, %v834
      %v850 = vpack.c.b16 %v837, %v836
      %v851 = vpack.c.b16 %v839, %v838
      %v852 = vpack.c.b16 %v841, %v840
      %v853 = vpack.c.b16 %v843, %v842
      %v854 = vpack.c.b16 %v845, %v844
      %v855 = vpack.c.b16 %v847, %v846
      %864 = vmatpush.bf16.msra.mxu0 %v855
      %865 = vmatpush.bf16.msra.mxu0 %v854
      %866 = vmatpush.bf16.msra.mxu0 %v853
      %867 = vmatpush.bf16.msra.mxu0 %v852
      %868 = vmatpush.bf16.msra.mxu0 %v851
      %869 = vmatpush.bf16.msra.mxu0 %v850
      %870 = vmatpush.bf16.msra.mxu0 %v849
      %871 = vmatpush.bf16.msra.mxu0 %v848
      %872 = vmatmul.bf16.gmra.mxu0 %v249
      %v873 = vpop.f32.mrf.mxu0
      %v874 = vadd.f32 %v800, %v873
      %v875 = vpop.f32.mrf.mxu0
      %v876 = vadd.f32 %v801, %v875
      %877 = vmatmul.bf16.gmra.mxu0 %v250
      %v878 = vpop.f32.mrf.mxu0
      %v879 = vadd.f32 %v802, %v878
      %v880 = vpop.f32.mrf.mxu0
      %v881 = vadd.f32 %v803, %v880
      %882 = vmatmul.bf16.gmra.mxu0 %v251
      %v883 = vpop.f32.mrf.mxu0
      %v884 = vadd.f32 %v804, %v883
      %v885 = vpop.f32.mrf.mxu0
      %v886 = vadd.f32 %v805, %v885
      %887 = vmatmul.bf16.gmra.mxu0 %v252
      %v888 = vpop.f32.mrf.mxu0
      %v889 = vadd.f32 %v806, %v888
      %v890 = vpop.f32.mrf.mxu0
      %v891 = vadd.f32 %v807, %v890
      %892 = vmatmul.bf16.gmra.mxu0 %v253
      %v893 = vpop.f32.mrf.mxu0
      %v894 = vadd.f32 %v808, %v893
      %v895 = vpop.f32.mrf.mxu0
      %v896 = vadd.f32 %v809, %v895
      %897 = vmatmul.bf16.gmra.mxu0 %v254
      %v898 = vpop.f32.mrf.mxu0
      %v899 = vadd.f32 %v810, %v898
      %v900 = vpop.f32.mrf.mxu0
      %v901 = vadd.f32 %v811, %v900
      %902 = vmatmul.bf16.gmra.mxu0 %v255
      %v903 = vpop.f32.mrf.mxu0
      %v904 = vadd.f32 %v812, %v903
      %v905 = vpop.f32.mrf.mxu0
      %v906 = vadd.f32 %v813, %v905
      %907 = vmatmul.bf16.gmra.mxu0 %v256
      %v908 = vpop.f32.mrf.mxu0
      %v909 = vadd.f32 %v814, %v908
      %v910 = vpop.f32.mrf.mxu0
      %v911 = vadd.f32 %v815, %v910
      %912 = vdwg.mxu0
      %v913 = vsel %vm718, %v798, 0.0
      %v914 = vsel %vm719, %v797, 0.0
      %v915 = vsel %vm720, %v796, 0.0
      %v916 = vsel %vm721, %v795, 0.0
      %v917 = vsel %vm722, %v794, 0.0
      %v918 = vsel %vm723, %v793, 0.0
      %v919 = vsel %vm724, %v792, 0.0
      %v920 = vsel %vm725, %v791, 0.0
      %v921 = vsel %vm726, %v790, 0.0
      %v922 = vsel %vm727, %v789, 0.0
      %v923 = vsel %vm728, %v788, 0.0
      %v924 = vsel %vm729, %v787, 0.0
      %v925 = vsel %vm730, %v786, 0.0
      %v926 = vsel %vm731, %v785, 0.0
      %v927 = vsel %vm732, %v784, 0.0
      %v928 = vsel %vm733, %v799, 0.0
      %v929 = vadd.f32 %v874, %v913
      %v930 = vadd.f32 %v876, %v914
      %v931 = vadd.f32 %v879, %v915
      %v932 = vadd.f32 %v881, %v916
      %v933 = vadd.f32 %v884, %v917
      %v934 = vadd.f32 %v886, %v918
      %v935 = vadd.f32 %v889, %v919
      %v936 = vadd.f32 %v891, %v920
      %v937 = vadd.f32 %v894, %v921
      %v938 = vadd.f32 %v896, %v922
      %v939 = vadd.f32 %v899, %v923
      %v940 = vadd.f32 %v901, %v924
      %v941 = vadd.f32 %v904, %v925
      %v942 = vadd.f32 %v906, %v926
      %v943 = vadd.f32 %v909, %v927
      %v944 = vadd.f32 %v911, %v928
      %v945 = vpack.c.bf16 %v929, %v929
      %v946 = vpack.c.bf16 %v930, %v930
      %v947 = vpack.c.bf16 %v931, %v931
      %v948 = vpack.c.bf16 %v932, %v932
      %v949 = vpack.c.bf16 %v933, %v933
      %v950 = vpack.c.bf16 %v934, %v934
      %v951 = vpack.c.bf16 %v935, %v935
      %v952 = vpack.c.bf16 %v936, %v936
      %v953 = vpack.c.bf16 %v937, %v937
      %v954 = vpack.c.bf16 %v938, %v938
      %v955 = vpack.c.bf16 %v939, %v939
      %v956 = vpack.c.bf16 %v940, %v940
      %v957 = vpack.c.bf16 %v941, %v941
      %v958 = vpack.c.bf16 %v942, %v942
      %v959 = vpack.c.bf16 %v943, %v943
      %v960 = vpack.c.bf16 %v944, %v944
      %961 = vst [vmem:[%s179] sm:$0xf] %v945
      %962 = vst [vmem:[%s179 + $0x4] sm:$0xf] %v946
      %963 = vst [vmem:[%s179 + $0x8] sm:$0xf] %v947
      %964 = vst [vmem:[%s179 + $0xc] sm:$0xf] %v948
      %965 = vst [vmem:[%s179 + $0x10] sm:$0xf] %v949
      %966 = vst [vmem:[%s179 + $0x14] sm:$0xf] %v950
      %967 = vst [vmem:[%s179 + $0x18] sm:$0xf] %v951
      %968 = vst [vmem:[%s179 + $0x1c] sm:$0xf] %v952
      %969 = vst [vmem:[%s179 + $0x20] sm:$0xf] %v953
      %970 = vst [vmem:[%s179 + $0x24] sm:$0xf] %v954
      %971 = vst [vmem:[%s179 + $0x28] sm:$0xf] %v955
      %972 = vst [vmem:[%s179 + $0x2c] sm:$0xf] %v956
      %973 = vst [vmem:[%s179 + $0x30] sm:$0xf] %v957
      %974 = vst [vmem:[%s179 + $0x34] sm:$0xf] %v958
      %975 = vst [vmem:[%s179 + $0x38] sm:$0xf] %v959
      %976 = vst [vmem:[%s179 + $0x3c] sm:$0xf] %v960
      %v977 = vunpack.c.l.bf16 %v945
      %v978 = vunpack.c.l.bf16 %v946
      %v979 = vunpack.c.l.bf16 %v947
      %v980 = vunpack.c.l.bf16 %v948
      %v981 = vunpack.c.l.bf16 %v949
      %v982 = vunpack.c.l.bf16 %v950
      %v983 = vunpack.c.l.bf16 %v951
      %v984 = vunpack.c.l.bf16 %v952
      %v985 = vunpack.c.l.bf16 %v953
      %v986 = vunpack.c.l.bf16 %v954
      %v987 = vunpack.c.l.bf16 %v955
      %v988 = vunpack.c.l.bf16 %v956
      %v989 = vunpack.c.l.bf16 %v957
      %v990 = vunpack.c.l.bf16 %v958
      %v991 = vunpack.c.l.bf16 %v959
      %v992 = vunpack.c.l.bf16 %v960
      %v993 = vadd.f32 %v977, %v978
      %v994 = vadd.f32 %v993, %v979
      %v995 = vadd.f32 %v994, %v980
      %v996 = vadd.f32 %v995, %v981
      %v997 = vadd.f32 %v996, %v982
      %v998 = vadd.f32 %v997, %v983
      %v999 = vadd.f32 %v998, %v984
      %v1000 = vadd.f32 %v999, %v985
      %v1001 = vadd.f32 %v1000, %v986
      %v1002 = vadd.f32 %v1001, %v987
      %v1003 = vadd.f32 %v1002, %v988
      %v1004 = vadd.f32 %v1003, %v989
      %v1005 = vadd.f32 %v1004, %v990
      %v1006 = vadd.f32 %v1005, %v991
      %v1007 = vadd.f32 %v1006, %v992
      %v1008 = vrot.slane %v1007, 4
      %v1009 = vadd.f32 %v1007, %v1008
      %v1010 = vrot.slane %v1009, 2
      %v1011 = vadd.f32 %v1009, %v1010
      %v1012 = vrot.slane %v1011, 1
      %v1013 = vadd.f32 %v1011, %v1012
      %1014 = vst [vmem:[%s184] sm:$0x1] %v1013
      %v1015 = vmul.f32 %v977, %v977
      %v1016 = vmul.f32 %v978, %v978
      %v1017 = vmul.f32 %v979, %v979
      %v1018 = vmul.f32 %v980, %v980
      %v1019 = vmul.f32 %v981, %v981
      %v1020 = vmul.f32 %v982, %v982
      %v1021 = vmul.f32 %v983, %v983
      %v1022 = vmul.f32 %v984, %v984
      %v1023 = vmul.f32 %v985, %v985
      %v1024 = vmul.f32 %v986, %v986
      %v1025 = vmul.f32 %v987, %v987
      %v1026 = vmul.f32 %v988, %v988
      %v1027 = vmul.f32 %v989, %v989
      %v1028 = vmul.f32 %v990, %v990
      %v1029 = vmul.f32 %v991, %v991
      %v1030 = vmul.f32 %v992, %v992
      %v1031 = vadd.f32 %v1015, %v1016
      %v1032 = vadd.f32 %v1031, %v1017
      %v1033 = vadd.f32 %v1032, %v1018
      %v1034 = vadd.f32 %v1033, %v1019
      %v1035 = vadd.f32 %v1034, %v1020
      %v1036 = vadd.f32 %v1035, %v1021
      %v1037 = vadd.f32 %v1036, %v1022
      %v1038 = vadd.f32 %v1037, %v1023
      %v1039 = vadd.f32 %v1038, %v1024
      %v1040 = vadd.f32 %v1039, %v1025
      %v1041 = vadd.f32 %v1040, %v1026
      %v1042 = vadd.f32 %v1041, %v1027
      %v1043 = vadd.f32 %v1042, %v1028
      %v1044 = vadd.f32 %v1043, %v1029
      %v1045 = vadd.f32 %v1044, %v1030
      %v1046 = vrot.slane %v1045, 4
      %v1047 = vadd.f32 %v1045, %v1046
      %v1048 = vrot.slane %v1047, 2
      %v1049 = vadd.f32 %v1047, %v1048
      %v1050 = vrot.slane %v1049, 1
      %v1051 = vadd.f32 %v1049, %v1050
      %1052 = vst [vmem:[%s184 + $0x1] sm:$0x1] %v1051
      %s1053 = smul.u32 16, %s15
      %p1054 = scmp.lt.s32.totalorder %s1053, 31
      %s1055 = scalar_select %p1054, %s1053, 31
      %s1056 = smul.addr %s1055, 4
      %s1057 = scalar_lea.vmem %s2, %s1056
      %p1058 = scmp.lt.s32.totalorder %s15, 1
      %s1059 = scalar_select %p1058, %s15, 1
      %s1060 = smul.addr %s1059, 2
      %s1061 = scalar_lea.vmem %s3, %s1060
      // Predicated region
      $region29: #{basic_block_forward.3} parent=27 // pred_check
        %p1062 = pneg %p80
      $region30: #{basic_block_forward.3} parent=27 // pred_check_branch
        %1064 = sbr.rel (%p1062) target = $region32
      $region31: #{basic_block_forward.3} parent=27 // pred_region
        %s1065 = smul.u32 16, %s15
      $region32: #{basic_block_forward.3} parent=27 // pred_fallthru
        _
      // Predicated region
      $region33: #{basic_block_forward.3} parent=27 // pred_check
        %p1066 = pneg %p106
      $region34: #{basic_block_forward.3} parent=27 // pred_check_branch
        %1068 = sbr.rel (%p1066) target = $region36
      $region35: #{basic_block_forward.3} parent=27 // pred_region
        _
      $region36: #{basic_block_forward.3} parent=27 // pred_fallthru
        _
    $region28: #{basic_block_forward.3} parent=5 // pred_fallthru
      _
    %p1069 = scmp.le.s32.totalorder 2, %s10
    // Predicated region
    $region37: #{basic_block_forward.3} parent=5 // pred_check
      %p1070 = pneg %p1069
    $region38: #{basic_block_forward.3} parent=5 // pred_check_branch
      %1072 = sbr.rel (%p1070) target = $region40
    $region39: #{basic_block_forward.3} parent=5 // pred_region
      %s1073 = ssub.s32 %s10, 2
      // Predicated region
      $region41: #{basic_block_forward.3} parent=39 // pred_check
        %p1074 = pneg %p86
      $region42: #{basic_block_forward.3} parent=39 // pred_check_branch
        %1076 = sbr.rel (%p1074) target = $region44
      $region43: #{basic_block_forward.3} parent=39 // pred_region
        %s1077 = smul.u32 16, %s16
        %p1078 = scmp.lt.s32.totalorder %s1077, 31
        %s1079 = scalar_select %p1078, %s1077, 31
        %s1080 = smul.addr %s1079, 4
        %s1081 = scalar_lea.vmem %s2, %s1080
      $region44: #{basic_block_forward.3} parent=39 // pred_fallthru
        _
      // Predicated region
      $region45: #{basic_block_forward.3} parent=39 // pred_check
        %p1082 = pneg %p112
      $region46: #{basic_block_forward.3} parent=39 // pred_check_branch
        %1084 = sbr.rel (%p1082) target = $region48
      $region47: #{basic_block_forward.3} parent=39 // pred_region
        %p1085 = scmp.lt.s32.totalorder %s16, 1
        %s1086 = scalar_select %p1085, %s16, 1
        %s1087 = smul.addr %s1086, 2
        %s1088 = scalar_lea.vmem %s3, %s1087
      $region48: #{basic_block_forward.3} parent=39 // pred_fallthru
        _
    $region40: #{basic_block_forward.3} parent=5 // pred_fallthru
      _
  $region6: #{basic_block_forward.3} parent=0 // loop_footer
    %s14 = sadd.s32 1, %s10
  $region7: #{basic_block_forward.3} parent=0 // loop_footer_branch
    %9 = sbr.rel target = $region3
  $region8: #{basic_block_forward.3} parent=0 // loop_exit
    _

// kernel: tile.23
$region0: #{tile.23}
  #allocation0 [shape = 's32[1]{0}', space=sflag, size = 0x4, scoped, tag = 'scoped memory for tile.23']
  %s0 = inlined_call_operand.vmem [shape: f32[8], index: 0, kind: input, shape index: {}]
  %s1 = inlined_call_operand.vmem [shape: f32[16,8], index: 1, kind: output, shape index: {}]
  // Predicated region
  $region2: #{tile.23} parent=0 // pred_check
    _
  $region3: #{tile.23} parent=0 // pred_check_branch
    %3 = sbr.rel (0) target = $region5
  $region4: #{tile.23} parent=0 // pred_region
    _
  $region5: #{tile.23} parent=0 // pred_fallthru
    _
  %v4 = vld [vmem:[%s0] ss:$0 sm:$0xff]
  %5 = vst [vmem:[%s1] sm:$0xff] %v4
  %s6 = scalar_lea.vmem %s1, 8
  %7 = vst [vmem:[%s6] sm:$0xff] %v4

// kernel: tile.24
$region0: #{tile.24}
  %s0 = inlined_call_operand.vmem [shape: f32[16,8], index: 0, kind: input, shape index: {}]
  %s1 = inlined_call_operand.vmem [shape: f32[1,128], index: 1, kind: output, shape index: {}]
  $region1: #{tile.24} parent=0
    #allocation0 [shape = 'u8[4096]{0}', space=vmem, size = 0x1000, scoped, tag = 'scoped mem for output reshape']
    %v2 = vld [vmem:[%s0] sm:$0x1]
    %vm3 = vcmask 64512
    %4 = vst.msk [vmem:[#allocation0] sm:$0x1] %vm3, %v2
    %s5 = scalar_lea.vmem %s0, 15
    %v6 = vld [vmem:[%s5] sm:$0x1]
    %7 = vrot.lane.b32.xlu0 %v6, 120
    %v8 = vpop.permute.xlu0 %7
    %vm9 = vcmask 1048512
    %10 = vst.msk [vmem:[#allocation0] sm:$0x1] %vm9, %v8
    %s11 = scalar_lea.vmem %s0, 14
    %v12 = vld [vmem:[%s11] sm:$0x1]
    %13 = vrot.lane.b32.xlu0 %v12, 112
    %v14 = vpop.permute.xlu0 %13
    %vm15 = vcmask 982912
    %16 = vst.msk [vmem:[#allocation0] sm:$0x1] %vm15, %v14
    %s17 = scalar_lea.vmem %s0, 13
    %v18 = vld [vmem:[%s17] sm:$0x1]
    %19 = vrot.lane.b32.xlu0 %v18, 104
    %v20 = vpop.permute.xlu0 %19
    %vm21 = vcmask 917312
    %22 = vst.msk [vmem:[#allocation0] sm:$0x1] %vm21, %v20
    %s23 = scalar_lea.vmem %s0, 12
    %v24 = vld [vmem:[%s23] sm:$0x1]
    %25 = vrot.lane.b32.xlu0 %v24, 96
    %v26 = vpop.permute.xlu0 %25
    %vm27 = vcmask 851712
    %28 = vst.msk [vmem:[#allocation0] sm:$0x1] %vm27, %v26
    %s29 = scalar_lea.vmem %s0, 11
    %v30 = vld [vmem:[%s29] sm:$0x1]
    %31 = vrot.lane.b32.xlu0 %v30, 88
    %v32 = vpop.permute.xlu0 %31
    %vm33 = vcmask 786112
    %34 = vst.msk [vmem:[#allocation0] sm:$0x1] %vm33, %v32
    %s35 = scalar_lea.vmem %s0, 10
    %v36 = vld [vmem:[%s35] sm:$0x1]
    %37 = vrot.lane.b32.xlu0 %v36, 80
    %v38 = vpop.permute.xlu0 %37
    %vm39 = vcmask 720512
    %40 = vst.msk [vmem:[#allocation0] sm:$0x1] %vm39, %v38
    %s41 = scalar_lea.vmem %s0, 9
    %v42 = vld [vmem:[%s41] sm:$0x1]
    %43 = vrot.lane.b32.xlu0 %v42, 72
    %v44 = vpop.permute.xlu0 %43
    %vm45 = vcmask 654912
    %46 = vst.msk [vmem:[#allocation0] sm:$0x1] %vm45, %v44
    %s47 = scalar_lea.vmem %s0, 8
    %v48 = vld [vmem:[%s47] sm:$0x1]
    %49 = vrot.lane.b32.xlu0 %v48, 64
    %v50 = vpop.permute.xlu0 %49
    %vm51 = vcmask 589312
    %52 = vst.msk [vmem:[#allocation0] sm:$0x1] %vm51, %v50
    %s53 = scalar_lea.vmem %s0, 7
    %v54 = vld [vmem:[%s53] sm:$0x1]
    %55 = vrot.lane.b32.xlu0 %v54, 56
    %v56 = vpop.permute.xlu0 %55
    %vm57 = vcmask 523712
    %58 = vst.msk [vmem:[#allocation0] sm:$0x1] %vm57, %v56
    %s59 = scalar_lea.vmem %s0, 6
    %v60 = vld [vmem:[%s59] sm:$0x1]
    %61 = vrot.lane.b32.xlu0 %v60, 48
    %v62 = vpop.permute.xlu0 %61
    %vm63 = vcmask 458112
    %64 = vst.msk [vmem:[#allocation0] sm:$0x1] %vm63, %v62
    %s65 = scalar_lea.vmem %s0, 5
    %v66 = vld [vmem:[%s65] sm:$0x1]
    %67 = vrot.lane.b32.xlu0 %v66, 40
    %v68 = vpop.permute.xlu0 %67
    %vm69 = vcmask 392512
    %70 = vst.msk [vmem:[#allocation0] sm:$0x1] %vm69, %v68
    %s71 = scalar_lea.vmem %s0, 4
    %v72 = vld [vmem:[%s71] sm:$0x1]
    %73 = vrot.lane.b32.xlu0 %v72, 32
    %v74 = vpop.permute.xlu0 %73
    %vm75 = vcmask 326912
    %76 = vst.msk [vmem:[#allocation0] sm:$0x1] %vm75, %v74
    %s77 = scalar_lea.vmem %s0, 3
    %v78 = vld [vmem:[%s77] sm:$0x1]
    %79 = vrot.lane.b32.xlu0 %v78, 24
    %v80 = vpop.permute.xlu0 %79
    %vm81 = vcmask 261312
    %82 = vst.msk [vmem:[#allocation0] sm:$0x1] %vm81, %v80
    %s83 = scalar_lea.vmem %s0, 2
    %v84 = vld [vmem:[%s83] sm:$0x1]
    %85 = vrot.lane.b32.xlu0 %v84, 16
    %v86 = vpop.permute.xlu0 %85
    %vm87 = vcmask 195712
    %88 = vst.msk [vmem:[#allocation0] sm:$0x1] %vm87, %v86
    %s89 = scalar_lea.vmem %s0, 1
    %v90 = vld [vmem:[%s89] sm:$0x1]
    %91 = vrot.lane.b32.xlu0 %v90, 8
    %v92 = vpop.permute.xlu0 %91
    %vm93 = vcmask 130112
    %94 = vst.msk [vmem:[#allocation0] sm:$0x1] %vm93, %v92
    %s96 = ssub.s32 2, 1
    %v97 = vld [vmem:[#allocation0] sm:%s96]
    %s99 = ssub.s32 2, 1
    %100 = vst [vmem:[%s1] sm:%s99] %v97

// kernel: basic_block_forward.4
$region0: #{basic_block_forward.4}
  #allocation0 [shape = 'u32[]', space=smem, size = 0x4, offset = 0x4, fixed_abs, tag = 'smem constant byte address 0x4 - core index']
  #allocation1 [shape = 'u32[72,128]{1,0:T(1,128)}', space=vmem, size = 0x9000, scoped, tag = 'internal scratch']
  %s0 = inlined_call_operand.vmem [shape: bf16[256,128], index: 0, kind: input, shape index: {}]
  %s1 = inlined_call_operand.vmem [shape: f32[1,128], index: 1, kind: input, shape index: {}]
  %s2 = inlined_call_operand.vmem [shape: f32[1,128], index: 2, kind: input, shape index: {}]
  %s3 = inlined_call_operand.vmem [shape: bf16[3,128,128], index: 3, kind: input, shape index: {}]
  %s4 = inlined_call_operand.vmem [shape: bf16[256,128], index: 4, kind: output, shape index: {0}]
  %s5 = inlined_call_operand.vmem [shape: f32[2,2,128], index: 5, kind: output, shape index: {1}]
  %6 = xla_tuple %s4, %s5
  %s7 = sld [smem:[#allocation0]]
  $region57: #{basic_block_forward.4} parent=0
    _
  %s9 = ssub.s32 1, %s7
  %s10 = scalar_select 0, %s9, %s7
  loop: start=0, step=1, limit=4
  $region2: #{basic_block_forward.4} parent=0 // loop_pre_header
    _
  $region3: #{basic_block_forward.4} parent=0 // loop_header
    %s12 = sphi 0, %s16
    %p13 = scmp.ge.s32.totalorder %s12, 4
    %s22 = sphi 0, %s24
    %s25 = sphi 0, %s22
    %s26 = sphi 0, %s25
    %s42 = sphi 0, %s26
    %s46 = sphi 0, %s46
    %s48 = sphi 0, %s46
    %s49 = sphi 0, %s48
    %s63 = sphi 0, %s49
    %s67 = sphi 0, %s67
    %s69 = sphi 0, %s67
    %s70 = sphi 0, %s69
    %s84 = sphi 0, %s70
    %s88 = sphi 0, %s88
    %s90 = sphi 0, %s88
    %s91 = sphi 0, %s90
    %s105 = sphi 0, %s91
    %s111 = sphi 0, %s113
    %s114 = sphi 0, %s111
    %s115 = sphi 0, %s114
    %s131 = sphi 0, %s115
    %s137 = sphi 0, %s139
    %s140 = sphi 0, %s137
    %s141 = sphi 0, %s140
    %s157 = sphi 0, %s141
  $region4: #{basic_block_forward.4} parent=0 // loop_header_branch
    %15 = sbr.rel (%p13) target = $region8
  $region5: #{basic_block_forward.4} parent=0 // loop_body
    %s17 = ssub.s32 %s12, 1
    %s18 = ssub.s32 %s12, 2
    %s19 = sadd.s32 %s12, 1
    %s20 = ssub.s32 %s12, %s19
    %p21 = scmp.eq.s32.totalorder %s20, 0
    %s23 = sadd.s32 %s22, 1
    %s24 = scalar_select %p21, %s22, %s23
    %p27 = pneg %p21
    %p28 = scmp.eq.s32.totalorder %s12, 1
    %p29 = por %p27, %p28
    %p30 = scmp.ne.s32.totalorder %s22, %s25
    %p31 = scmp.eq.s32.totalorder %s12, 0
    %p32 = por %p30, %p31
    %p33 = scmp.ne.s32.totalorder %s22, %s25
    %p34 = scmp.eq.s32.totalorder %s17, 1
    %p35 = por %p33, %p34
    %p36 = scmp.ne.s32.totalorder %s25, %s26
    %p37 = scmp.eq.s32.totalorder %s17, 0
    %p38 = por %p36, %p37
    %p39 = scmp.ne.s32.totalorder %s25, %s26
    %p40 = scmp.eq.s32.totalorder %s18, 1
    %p41 = por %p39, %p40
    %p43 = scmp.ne.s32.totalorder %s26, %s42
    %p44 = scmp.eq.s32.totalorder %s18, 0
    %p45 = por %p43, %p44
    %s47 = sadd.s32 %s46, 1
    %p50 = scmp.eq.s32.totalorder %s12, 1
    %p51 = scmp.ne.s32.totalorder %s46, %s48
    %p52 = scmp.eq.s32.totalorder %s12, 0
    %p53 = por %p51, %p52
    %p54 = scmp.ne.s32.totalorder %s46, %s48
    %p55 = scmp.eq.s32.totalorder %s17, 1
    %p56 = por %p54, %p55
    %p57 = scmp.ne.s32.totalorder %s48, %s49
    %p58 = scmp.eq.s32.totalorder %s17, 0
    %p59 = por %p57, %p58
    %p60 = scmp.ne.s32.totalorder %s48, %s49
    %p61 = scmp.eq.s32.totalorder %s18, 1
    %p62 = por %p60, %p61
    %p64 = scmp.ne.s32.totalorder %s49, %s63
    %p65 = scmp.eq.s32.totalorder %s18, 0
    %p66 = por %p64, %p65
    %s68 = sadd.s32 %s67, 1
    %p71 = scmp.eq.s32.totalorder %s12, 1
    %p72 = scmp.ne.s32.totalorder %s67, %s69
    %p73 = scmp.eq.s32.totalorder %s12, 0
    %p74 = por %p72, %p73
    %p75 = scmp.ne.s32.totalorder %s67, %s69
    %p76 = scmp.eq.s32.totalorder %s17, 1
    %p77 = por %p75, %p76
    %p78 = scmp.ne.s32.totalorder %s69, %s70
    %p79 = scmp.eq.s32.totalorder %s17, 0
    %p80 = por %p78, %p79
    %p81 = scmp.ne.s32.totalorder %s69, %s70
    %p82 = scmp.eq.s32.totalorder %s18, 1
    %p83 = por %p81, %p82
    %p85 = scmp.ne.s32.totalorder %s70, %s84
    %p86 = scmp.eq.s32.totalorder %s18, 0
    %p87 = por %p85, %p86
    %s89 = sadd.s32 %s88, 1
    %p92 = scmp.eq.s32.totalorder %s12, 1
    %p93 = scmp.ne.s32.totalorder %s88, %s90
    %p94 = scmp.eq.s32.totalorder %s12, 0
    %p95 = por %p93, %p94
    %p96 = scmp.ne.s32.totalorder %s88, %s90
    %p97 = scmp.eq.s32.totalorder %s17, 1
    %p98 = por %p96, %p97
    %p99 = scmp.ne.s32.totalorder %s90, %s91
    %p100 = scmp.eq.s32.totalorder %s17, 0
    %p101 = por %p99, %p100
    %p102 = scmp.ne.s32.totalorder %s90, %s91
    %p103 = scmp.eq.s32.totalorder %s18, 1
    %p104 = por %p102, %p103
    %p106 = scmp.ne.s32.totalorder %s91, %s105
    %p107 = scmp.eq.s32.totalorder %s18, 0
    %p108 = por %p106, %p107
    %s109 = ssub.s32 %s12, %s19
    %p110 = scmp.eq.s32.totalorder %s109, 0
    %s112 = sadd.s32 %s111, 1
    %s113 = scalar_select %p110, %s111, %s112
    %p116 = pneg %p110
    %p117 = scmp.eq.s32.totalorder %s12, 1
    %p118 = por %p116, %p117
    %p119 = scmp.ne.s32.totalorder %s111, %s114
    %p120 = scmp.eq.s32.totalorder %s12, 0
    %p121 = por %p119, %p120
    %p122 = scmp.ne.s32.totalorder %s111, %s114
    %p123 = scmp.eq.s32.totalorder %s17, 1
    %p124 = por %p122, %p123
    %p125 = scmp.ne.s32.totalorder %s114, %s115
    %p126 = scmp.eq.s32.totalorder %s17, 0
    %p127 = por %p125, %p126
    %p128 = scmp.ne.s32.totalorder %s114, %s115
    %p129 = scmp.eq.s32.totalorder %s18, 1
    %p130 = por %p128, %p129
    %p132 = scmp.ne.s32.totalorder %s115, %s131
    %p133 = scmp.eq.s32.totalorder %s18, 0
    %p134 = por %p132, %p133
    %s135 = ssub.s32 %s12, %s19
    %p136 = scmp.eq.s32.totalorder %s135, 0
    %s138 = sadd.s32 %s137, 1
    %s139 = scalar_select %p136, %s137, %s138
    %p142 = pneg %p136
    %p143 = scmp.eq.s32.totalorder %s12, 1
    %p144 = por %p142, %p143
    %p145 = scmp.ne.s32.totalorder %s137, %s140
    %p146 = scmp.eq.s32.totalorder %s12, 0
    %p147 = por %p145, %p146
    %p148 = scmp.ne.s32.totalorder %s137, %s140
    %p149 = scmp.eq.s32.totalorder %s17, 1
    %p150 = por %p148, %p149
    %p151 = scmp.ne.s32.totalorder %s140, %s141
    %p152 = scmp.eq.s32.totalorder %s17, 0
    %p153 = por %p151, %p152
    %p154 = scmp.ne.s32.totalorder %s140, %s141
    %p155 = scmp.eq.s32.totalorder %s18, 1
    %p156 = por %p154, %p155
    %p158 = scmp.ne.s32.totalorder %s141, %s157
    %p159 = scmp.eq.s32.totalorder %s18, 0
    %p160 = por %p158, %p159
    %p161 = scmp.le.s32.totalorder 1, %s12
    %p162 = scmp.lt.s32.totalorder %s12, 3
    %p163 = pnand %p161, %p162
    %p164 = pneg %p163
    // Predicated region
    $region9: #{basic_block_forward.4} parent=5 // pred_check
      _
    $region10: #{basic_block_forward.4} parent=5 // pred_check_branch
      %166 = sbr.rel (%p163) target = $region12
    $region11: #{basic_block_forward.4} parent=5 // pred_region
      %s167 = ssub.s32 %s12, 1
      // Predicated region
      $region13: #{basic_block_forward.4} parent=11 // pred_check
        %p168 = pneg %p59
      $region14: #{basic_block_forward.4} parent=11 // pred_check_branch
        %170 = sbr.rel (%p168) target = $region16
      $region15: #{basic_block_forward.4} parent=11 // pred_region
        _
      $region16: #{basic_block_forward.4} parent=11 // pred_fallthru
        _
      // Predicated region
      $region17: #{basic_block_forward.4} parent=11 // pred_check
        %p171 = pneg %p80
      $region18: #{basic_block_forward.4} parent=11 // pred_check_branch
        %173 = sbr.rel (%p171) target = $region20
      $region19: #{basic_block_forward.4} parent=11 // pred_region
        _
      $region20: #{basic_block_forward.4} parent=11 // pred_fallthru
        _
      // Predicated region
      $region21: #{basic_block_forward.4} parent=11 // pred_check
        %p174 = pneg %p101
      $region22: #{basic_block_forward.4} parent=11 // pred_check_branch
        %176 = sbr.rel (%p174) target = $region24
      $region23: #{basic_block_forward.4} parent=11 // pred_region
        _
      $region24: #{basic_block_forward.4} parent=11 // pred_fallthru
        _
    $region12: #{basic_block_forward.4} parent=5 // pred_fallthru
      _
    %p177 = scmp.lt.s32.totalorder %s12, 2
    // Predicated region
    $region25: #{basic_block_forward.4} parent=5 // pred_check
      %p178 = pneg %p177
    $region26: #{basic_block_forward.4} parent=5 // pred_check_branch
      %180 = sbr.rel (%p178) target = $region28
    $region27: #{basic_block_forward.4} parent=5 // pred_region
      // Predicated region
      $region29: #{basic_block_forward.4} parent=27 // pred_check
        %p181 = pneg %p32
      $region30: #{basic_block_forward.4} parent=27 // pred_check_branch
        %183 = sbr.rel (%p181) target = $region32
      $region31: #{basic_block_forward.4} parent=27 // pred_region
        %s184 = smul.u32 16, %s12
        %p185 = scmp.lt.s32.totalorder %s184, 31
        %s186 = scalar_select %p185, %s184, 31
        %s187 = smul.addr %s186, 4
        %s188 = scalar_lea.vmem %s0, %s187
        %s189 = smul.u32 16, %s12
      $region32: #{basic_block_forward.4} parent=27 // pred_fallthru
        _
    $region28: #{basic_block_forward.4} parent=5 // pred_fallthru
      _
    %p190 = scmp.le.s32.totalorder 1, %s12
    %p191 = scmp.lt.s32.totalorder %s12, 3
    %p192 = pnand %p190, %p191
    %p193 = pneg %p192
    // Predicated region
    $region33: #{basic_block_forward.4} parent=5 // pred_check
      _
    $region34: #{basic_block_forward.4} parent=5 // pred_check_branch
      %195 = sbr.rel (%p192) target = $region36
    $region35: #{basic_block_forward.4} parent=5 // pred_region
      %s196 = ssub.s32 %s12, 1
      %s197 = smul.u32 16, %s17
      %p198 = scmp.lt.s32.totalorder %s197, 31
      %s199 = scalar_select %p198, %s197, 31
      %s200 = smul.addr %s199, 4
      %s201 = scalar_lea.vmem %s0, %s200
      %p202 = pneg %p38
      %p203 = pneg %p35
      %p204 = pneg %p59
      %p205 = pneg %p56
      %p206 = pneg %p80
      %p207 = pneg %p77
      %p208 = pneg %p101
      %p209 = pneg %p98
      %p210 = pneg %p127
      %p211 = pneg %p124
      %s212 = smul.u32 16, %s17
      %p213 = scmp.lt.s32.totalorder %s212, 31
      %s214 = scalar_select %p213, %s212, 31
      %s215 = smul.addr %s214, 4
      %s216 = scalar_lea.vmem %s4, %s215
      %p217 = pneg %p153
      %p218 = pneg %p150
      %p219 = scmp.lt.s32.totalorder %s17, 1
      %s220 = scalar_select %p219, %s17, 1
      %s221 = smul.addr %s220, 2
      %s222 = scalar_lea.vmem %s5, %s221
      %s223 = smul.u32 16, %s17
      %p224 = scmp.lt.s32.totalorder %s223, 31
      %s225 = scalar_select %p224, %s223, 31
      %s226 = smul.addr %s225, 4
      %s227 = scalar_lea.vmem %s0, %s226
      %s228 = smul.u32 16, %s17
      %s229 = smul.u32 16, %s17
      %p230 = scmp.lt.s32.totalorder %s229, 31
      %s231 = scalar_select %p230, %s229, 31
      %s232 = smul.addr %s231, 4
      %s233 = scalar_lea.vmem %s4, %s232
      %s234 = smul.u32 16, %s17
      %p235 = scmp.lt.s32.totalorder %s17, 1
      %s236 = scalar_select %p235, %s17, 1
      %s237 = smul.addr %s236, 2
      %s238 = scalar_lea.vmem %s5, %s237
      %v239 = vld [vmem:[%s227] sm:$0xf]
      %v240 = vld [vmem:[%s227 + $0x4] sm:$0xf]
      %v241 = vld [vmem:[%s227 + $0x8] sm:$0xf]
      %v242 = vld [vmem:[%s227 + $0xc] sm:$0xf]
      %v243 = vld [vmem:[%s227 + $0x10] sm:$0xf]
      %v244 = vld [vmem:[%s227 + $0x14] sm:$0xf]
      %v245 = vld [vmem:[%s227 + $0x18] sm:$0xf]
      %v246 = vld [vmem:[%s227 + $0x1c] sm:$0xf]
      %v247 = vld [vmem:[%s227 + $0x20] sm:$0xf]
      %v248 = vld [vmem:[%s227 + $0x24] sm:$0xf]
      %v249 = vld [vmem:[%s227 + $0x28] sm:$0xf]
      %v250 = vld [vmem:[%s227 + $0x2c] sm:$0xf]
      %v251 = vld [vmem:[%s227 + $0x30] sm:$0xf]
      %v252 = vld [vmem:[%s227 + $0x34] sm:$0xf]
      %v253 = vld [vmem:[%s227 + $0x38] sm:$0xf]
      %v254 = vld [vmem:[%s227 + $0x3c] sm:$0xf]
      %v255 = vunpack.c.l.bf16 %v239
      %v256 = vunpack.c.l.bf16 %v240
      %v257 = vunpack.c.l.bf16 %v241
      %v258 = vunpack.c.l.bf16 %v242
      %v259 = vunpack.c.l.bf16 %v243
      %v260 = vunpack.c.l.bf16 %v244
      %v261 = vunpack.c.l.bf16 %v245
      %v262 = vunpack.c.l.bf16 %v246
      %v263 = vunpack.c.l.bf16 %v247
      %v264 = vunpack.c.l.bf16 %v248
      %v265 = vunpack.c.l.bf16 %v249
      %v266 = vunpack.c.l.bf16 %v250
      %v267 = vunpack.c.l.bf16 %v251
      %v268 = vunpack.c.l.bf16 %v252
      %v269 = vunpack.c.l.bf16 %v253
      %v270 = vunpack.c.l.bf16 %v254
      %v271 = vld [vmem:[%s1] sm:$0x1]
      %v273 = vperm.slane %v271, 0
      %v275 = vmul.f32 %v255, %v273
      %v276 = vmul.f32 %v256, %v273
      %v277 = vmul.f32 %v257, %v273
      %v278 = vmul.f32 %v258, %v273
      %v279 = vmul.f32 %v259, %v273
      %v280 = vmul.f32 %v260, %v273
      %v281 = vmul.f32 %v261, %v273
      %v282 = vmul.f32 %v262, %v273
      %v283 = vmul.f32 %v263, %v273
      %v284 = vmul.f32 %v264, %v273
      %v285 = vmul.f32 %v265, %v273
      %v286 = vmul.f32 %v266, %v273
      %v287 = vmul.f32 %v267, %v273
      %v288 = vmul.f32 %v268, %v273
      %v289 = vmul.f32 %v269, %v273
      %v290 = vmul.f32 %v270, %v273
      %v291 = vld [vmem:[%s2] sm:$0x1]
      %v293 = vperm.slane %v291, 0
      %v295 = vadd.f32 %v275, %v293
      %v296 = vadd.f32 %v276, %v293
      %v297 = vadd.f32 %v277, %v293
      %v298 = vadd.f32 %v278, %v293
      %v299 = vadd.f32 %v279, %v293
      %v300 = vadd.f32 %v280, %v293
      %v301 = vadd.f32 %v281, %v293
      %v302 = vadd.f32 %v282, %v293
      %v303 = vadd.f32 %v283, %v293
      %v304 = vadd.f32 %v284, %v293
      %v305 = vadd.f32 %v285, %v293
      %v306 = vadd.f32 %v286, %v293
      %v307 = vadd.f32 %v287, %v293
      %v308 = vadd.f32 %v288, %v293
      %v309 = vadd.f32 %v289, %v293
      %v310 = vadd.f32 %v290, %v293
      %v311 = vmax.f32 %v295, 0.0
      %v312 = vmax.f32 %v296, 0.0
      %v313 = vmax.f32 %v297, 0.0
      %v314 = vmax.f32 %v298, 0.0
      %v315 = vmax.f32 %v299, 0.0
      %v316 = vmax.f32 %v300, 0.0
      %v317 = vmax.f32 %v301, 0.0
      %v318 = vmax.f32 %v302, 0.0
      %v319 = vmax.f32 %v303, 0.0
      %v320 = vmax.f32 %v304, 0.0
      %v321 = vmax.f32 %v305, 0.0
      %v322 = vmax.f32 %v306, 0.0
      %v323 = vmax.f32 %v307, 0.0
      %v324 = vmax.f32 %v308, 0.0
      %v325 = vmax.f32 %v309, 0.0
      %v326 = vmax.f32 %v310, 0.0
      %v327 = vpack.c.bf16 %v312, %v311
      %v328 = vpack.c.bf16 %v314, %v313
      %v329 = vpack.c.bf16 %v316, %v315
      %v330 = vpack.c.bf16 %v318, %v317
      %v331 = vpack.c.bf16 %v320, %v319
      %v332 = vpack.c.bf16 %v322, %v321
      %v333 = vpack.c.bf16 %v324, %v323
      %v334 = vpack.c.bf16 %v326, %v325
      %v335 = vld [vmem:[%s3] sm:$0xf]
      %v336 = vld [vmem:[%s3 + $0x4] sm:$0xf]
      %v337 = vld [vmem:[%s3 + $0x8] sm:$0xf]
      %v338 = vld [vmem:[%s3 + $0xc] sm:$0xf]
      %v339 = vld [vmem:[%s3 + $0x10] sm:$0xf]
      %v340 = vld [vmem:[%s3 + $0x14] sm:$0xf]
      %v341 = vld [vmem:[%s3 + $0x18] sm:$0xf]
      %v342 = vld [vmem:[%s3 + $0x1c] sm:$0xf]
      %v343 = vld [vmem:[%s3 + $0x20] sm:$0xf]
      %v344 = vld [vmem:[%s3 + $0x24] sm:$0xf]
      %v345 = vld [vmem:[%s3 + $0x28] sm:$0xf]
      %v346 = vld [vmem:[%s3 + $0x2c] sm:$0xf]
      %v347 = vld [vmem:[%s3 + $0x30] sm:$0xf]
      %v348 = vld [vmem:[%s3 + $0x34] sm:$0xf]
      %v349 = vld [vmem:[%s3 + $0x38] sm:$0xf]
      %v350 = vld [vmem:[%s3 + $0x3c] sm:$0xf]
      %v367 = vunpack.c.l.b16 %v335
      %v368 = vunpack.c.l.b16 %v336
      %v369 = vunpack.c.l.b16 %v337
      %v370 = vunpack.c.l.b16 %v338
      %v371 = vunpack.c.l.b16 %v339
      %v372 = vunpack.c.l.b16 %v340
      %v373 = vunpack.c.l.b16 %v341
      %v374 = vunpack.c.l.b16 %v342
      %v375 = vunpack.c.l.b16 %v343
      %v376 = vunpack.c.l.b16 %v344
      %v377 = vunpack.c.l.b16 %v345
      %v378 = vunpack.c.l.b16 %v346
      %v379 = vunpack.c.l.b16 %v347
      %v380 = vunpack.c.l.b16 %v348
      %v381 = vunpack.c.l.b16 %v349
      %v382 = vunpack.c.l.b16 %v350
      %v383 = vpack.c.b16 %v368, %v367
      %v384 = vpack.c.b16 %v370, %v369
      %v385 = vpack.c.b16 %v372, %v371
      %v386 = vpack.c.b16 %v374, %v373
      %v387 = vpack.c.b16 %v376, %v375
      %v388 = vpack.c.b16 %v378, %v377
      %v389 = vpack.c.b16 %v380, %v379
      %v390 = vpack.c.b16 %v382, %v381
      %399 = vmatpush.bf16.msra.mxu0 %v390
      %400 = vmatpush.bf16.msra.mxu0 %v389
      %401 = vmatpush.bf16.msra.mxu0 %v388
      %402 = vmatpush.bf16.msra.mxu0 %v387
      %403 = vmatpush.bf16.msra.mxu0 %v386
      %404 = vmatpush.bf16.msra.mxu0 %v385
      %405 = vmatpush.bf16.msra.mxu0 %v384
      %406 = vmatpush.bf16.msra.mxu0 %v383
      %407 = vmatmul.bf16.gmra.mxu0 %v327
      %v408 = vpop.f32.mrf.mxu0
      %v409 = vadd.f32 0.0, %v408
      %v410 = vpop.f32.mrf.mxu0
      %v411 = vadd.f32 0.0, %v410
      %412 = vmatmul.bf16.gmra.mxu0 %v328
      %v413 = vpop.f32.mrf.mxu0
      %v414 = vadd.f32 0.0, %v413
      %v415 = vpop.f32.mrf.mxu0
      %v416 = vadd.f32 0.0, %v415
      %417 = vmatmul.bf16.gmra.mxu0 %v329
      %v418 = vpop.f32.mrf.mxu0
      %v419 = vadd.f32 0.0, %v418
      %v420 = vpop.f32.mrf.mxu0
      %v421 = vadd.f32 0.0, %v420
      %422 = vmatmul.bf16.gmra.mxu0 %v330
      %v423 = vpop.f32.mrf.mxu0
      %v424 = vadd.f32 0.0, %v423
      %v425 = vpop.f32.mrf.mxu0
      %v426 = vadd.f32 0.0, %v425
      %427 = vmatmul.bf16.gmra.mxu0 %v331
      %v428 = vpop.f32.mrf.mxu0
      %v429 = vadd.f32 0.0, %v428
      %v430 = vpop.f32.mrf.mxu0
      %v431 = vadd.f32 0.0, %v430
      %432 = vmatmul.bf16.gmra.mxu0 %v332
      %v433 = vpop.f32.mrf.mxu0
      %v434 = vadd.f32 0.0, %v433
      %v435 = vpop.f32.mrf.mxu0
      %v436 = vadd.f32 0.0, %v435
      %437 = vmatmul.bf16.gmra.mxu0 %v333
      %v438 = vpop.f32.mrf.mxu0
      %v439 = vadd.f32 0.0, %v438
      %v440 = vpop.f32.mrf.mxu0
      %v441 = vadd.f32 0.0, %v440
      %442 = vmatmul.bf16.gmra.mxu0 %v334
      %v443 = vpop.f32.mrf.mxu0
      %v444 = vadd.f32 0.0, %v443
      %v445 = vpop.f32.mrf.mxu0
      %v446 = vadd.f32 0.0, %v445
      %447 = vdwg.mxu0
      %s448 = scalar_lea.vmem %s3, 64
      %v449 = vld [vmem:[%s448] sm:$0xf]
      %v450 = vld [vmem:[%s448 + $0x4] sm:$0xf]
      %v451 = vld [vmem:[%s448 + $0x8] sm:$0xf]
      %v452 = vld [vmem:[%s448 + $0xc] sm:$0xf]
      %v453 = vld [vmem:[%s448 + $0x10] sm:$0xf]
      %v454 = vld [vmem:[%s448 + $0x14] sm:$0xf]
      %v455 = vld [vmem:[%s448 + $0x18] sm:$0xf]
      %v456 = vld [vmem:[%s448 + $0x1c] sm:$0xf]
      %v457 = vld [vmem:[%s448 + $0x20] sm:$0xf]
      %v458 = vld [vmem:[%s448 + $0x24] sm:$0xf]
      %v459 = vld [vmem:[%s448 + $0x28] sm:$0xf]
      %v460 = vld [vmem:[%s448 + $0x2c] sm:$0xf]
      %v461 = vld [vmem:[%s448 + $0x30] sm:$0xf]
      %v462 = vld [vmem:[%s448 + $0x34] sm:$0xf]
      %v463 = vld [vmem:[%s448 + $0x38] sm:$0xf]
      %v464 = vld [vmem:[%s448 + $0x3c] sm:$0xf]
      %s465 = scalar_lea.vmem %s3, 128
      %v466 = vld [vmem:[%s465] sm:$0xf]
      %v467 = vld [vmem:[%s465 + $0x4] sm:$0xf]
      %v468 = vld [vmem:[%s465 + $0x8] sm:$0xf]
      %v469 = vld [vmem:[%s465 + $0xc] sm:$0xf]
      %v470 = vld [vmem:[%s465 + $0x10] sm:$0xf]
      %v471 = vld [vmem:[%s465 + $0x14] sm:$0xf]
      %v472 = vld [vmem:[%s465 + $0x18] sm:$0xf]
      %v473 = vld [vmem:[%s465 + $0x1c] sm:$0xf]
      %v474 = vld [vmem:[%s465 + $0x20] sm:$0xf]
      %v475 = vld [vmem:[%s465 + $0x24] sm:$0xf]
      %v476 = vld [vmem:[%s465 + $0x28] sm:$0xf]
      %v477 = vld [vmem:[%s465 + $0x2c] sm:$0xf]
      %v478 = vld [vmem:[%s465 + $0x30] sm:$0xf]
      %v479 = vld [vmem:[%s465 + $0x34] sm:$0xf]
      %v480 = vld [vmem:[%s465 + $0x38] sm:$0xf]
      %v481 = vld [vmem:[%s465 + $0x3c] sm:$0xf]
      %v498 = vunpack.c.l.b16 %v466
      %v499 = vunpack.c.l.b16 %v467
      %v500 = vunpack.c.l.b16 %v468
      %v501 = vunpack.c.l.b16 %v469
      %v502 = vunpack.c.l.b16 %v470
      %v503 = vunpack.c.l.b16 %v471
      %v504 = vunpack.c.l.b16 %v472
      %v505 = vunpack.c.l.b16 %v473
      %v506 = vunpack.c.l.b16 %v474
      %v507 = vunpack.c.l.b16 %v475
      %v508 = vunpack.c.l.b16 %v476
      %v509 = vunpack.c.l.b16 %v477
      %v510 = vunpack.c.l.b16 %v478
      %v511 = vunpack.c.l.b16 %v479
      %v512 = vunpack.c.l.b16 %v480
      %v513 = vunpack.c.l.b16 %v481
      %v514 = vpack.c.b16 %v499, %v498
      %v515 = vpack.c.b16 %v501, %v500
      %v516 = vpack.c.b16 %v503, %v502
      %v517 = vpack.c.b16 %v505, %v504
      %v518 = vpack.c.b16 %v507, %v506
      %v519 = vpack.c.b16 %v509, %v508
      %v520 = vpack.c.b16 %v511, %v510
      %v521 = vpack.c.b16 %v513, %v512
      %530 = vmatpush.bf16.msra.mxu0 %v521
      %531 = vmatpush.bf16.msra.mxu0 %v520
      %532 = vmatpush.bf16.msra.mxu0 %v519
      %533 = vmatpush.bf16.msra.mxu0 %v518
      %534 = vmatpush.bf16.msra.mxu0 %v517
      %535 = vmatpush.bf16.msra.mxu0 %v516
      %536 = vmatpush.bf16.msra.mxu0 %v515
      %537 = vmatpush.bf16.msra.mxu0 %v514
      %538 = vmatmul.bf16.gmra.mxu0 %v327
      %v539 = vpop.f32.mrf.mxu0
      %v540 = vadd.f32 0.0, %v539
      %v541 = vpop.f32.mrf.mxu0
      %v542 = vadd.f32 0.0, %v541
      %543 = vmatmul.bf16.gmra.mxu0 %v328
      %v544 = vpop.f32.mrf.mxu0
      %v545 = vadd.f32 0.0, %v544
      %v546 = vpop.f32.mrf.mxu0
      %v547 = vadd.f32 0.0, %v546
      %548 = vmatmul.bf16.gmra.mxu0 %v329
      %v549 = vpop.f32.mrf.mxu0
      %v550 = vadd.f32 0.0, %v549
      %v551 = vpop.f32.mrf.mxu0
      %v552 = vadd.f32 0.0, %v551
      %553 = vmatmul.bf16.gmra.mxu0 %v330
      %v554 = vpop.f32.mrf.mxu0
      %v555 = vadd.f32 0.0, %v554
      %v556 = vpop.f32.mrf.mxu0
      %v557 = vadd.f32 0.0, %v556
      %558 = vmatmul.bf16.gmra.mxu0 %v331
      %v559 = vpop.f32.mrf.mxu0
      %v560 = vadd.f32 0.0, %v559
      %v561 = vpop.f32.mrf.mxu0
      %v562 = vadd.f32 0.0, %v561
      %563 = vmatmul.bf16.gmra.mxu0 %v332
      %v564 = vpop.f32.mrf.mxu0
      %v565 = vadd.f32 0.0, %v564
      %v566 = vpop.f32.mrf.mxu0
      %v567 = vadd.f32 0.0, %v566
      %568 = vmatmul.bf16.gmra.mxu0 %v333
      %v569 = vpop.f32.mrf.mxu0
      %v570 = vadd.f32 0.0, %v569
      %v571 = vpop.f32.mrf.mxu0
      %v572 = vadd.f32 0.0, %v571
      %573 = vmatmul.bf16.gmra.mxu0 %v334
      %v574 = vpop.f32.mrf.mxu0
      %v575 = vadd.f32 0.0, %v574
      %v576 = vpop.f32.mrf.mxu0
      %v577 = vadd.f32 0.0, %v576
      %578 = vdwg.mxu0
      %v579 = vlaneseq
      %v580 = vshrl.u32 %v579, 7
      %v581 = vadd.s32 %v580, 8
      %v582 = vadd.s32 %v580, 16
      %v583 = vadd.s32 %v580, 24
      %v584 = vadd.s32 %v580, 32
      %v585 = vadd.s32 %v580, 40
      %v586 = vadd.s32 %v580, 48
      %v587 = vadd.s32 %v580, 56
      %v588 = vadd.s32 %v580, 64
      %v589 = vadd.s32 %v580, 72
      %v590 = vadd.s32 %v580, 80
      %v591 = vadd.s32 %v580, 88
      %v592 = vadd.s32 %v580, 96
      %v593 = vadd.s32 %v580, 104
      %v594 = vadd.s32 %v580, 112
      %v595 = vadd.s32 %v580, 120
      %vm596 = vcmp.lt.s32.totalorder %v580, 0
      %v597 = vsub.s32 0, %v580
      %v598 = vsel %vm596, %v597, %v580
      %v599 = vshrl.u32 %v598, 4
      %v600 = vand.u32 %v598, 15
      %v601 = vsub.s32 0, %v600
      %v602 = vsel %vm596, %v601, %v600
      %vm603 = vcmp.lt.s32.totalorder %v581, 0
      %v604 = vsub.s32 0, %v581
      %v605 = vsel %vm603, %v604, %v581
      %v606 = vshrl.u32 %v605, 4
      %v607 = vand.u32 %v605, 15
      %v608 = vsub.s32 0, %v607
      %v609 = vsel %vm603, %v608, %v607
      %vm610 = vcmp.lt.s32.totalorder %v582, 0
      %v611 = vsub.s32 0, %v582
      %v612 = vsel %vm610, %v611, %v582
      %v613 = vshrl.u32 %v612, 4
      %v614 = vand.u32 %v612, 15
      %v615 = vsub.s32 0, %v614
      %v616 = vsel %vm610, %v615, %v614
      %vm617 = vcmp.lt.s32.totalorder %v583, 0
      %v618 = vsub.s32 0, %v583
      %v619 = vsel %vm617, %v618, %v583
      %v620 = vshrl.u32 %v619, 4
      %v621 = vand.u32 %v619, 15
      %v622 = vsub.s32 0, %v621
      %v623 = vsel %vm617, %v622, %v621
      %vm624 = vcmp.lt.s32.totalorder %v584, 0
      %v625 = vsub.s32 0, %v584
      %v626 = vsel %vm624, %v625, %v584
      %v627 = vshrl.u32 %v626, 4
      %v628 = vand.u32 %v626, 15
      %v629 = vsub.s32 0, %v628
      %v630 = vsel %vm624, %v629, %v628
      %vm631 = vcmp.lt.s32.totalorder %v585, 0
      %v632 = vsub.s32 0, %v585
      %v633 = vsel %vm631, %v632, %v585
      %v634 = vshrl.u32 %v633, 4
      %v635 = vand.u32 %v633, 15
      %v636 = vsub.s32 0, %v635
      %v637 = vsel %vm631, %v636, %v635
      %vm638 = vcmp.lt.s32.totalorder %v586, 0
      %v639 = vsub.s32 0, %v586
      %v640 = vsel %vm638, %v639, %v586
      %v641 = vshrl.u32 %v640, 4
      %v642 = vand.u32 %v640, 15
      %v643 = vsub.s32 0, %v642
      %v644 = vsel %vm638, %v643, %v642
      %vm645 = vcmp.lt.s32.totalorder %v587, 0
      %v646 = vsub.s32 0, %v587
      %v647 = vsel %vm645, %v646, %v587
      %v648 = vshrl.u32 %v647, 4
      %v649 = vand.u32 %v647, 15
      %v650 = vsub.s32 0, %v649
      %v651 = vsel %vm645, %v650, %v649
      %vm652 = vcmp.lt.s32.totalorder %v588, 0
      %v653 = vsub.s32 0, %v588
      %v654 = vsel %vm652, %v653, %v588
      %v655 = vshrl.u32 %v654, 4
      %v656 = vand.u32 %v654, 15
      %v657 = vsub.s32 0, %v656
      %v658 = vsel %vm652, %v657, %v656
      %vm659 = vcmp.lt.s32.totalorder %v589, 0
      %v660 = vsub.s32 0, %v589
      %v661 = vsel %vm659, %v660, %v589
      %v662 = vshrl.u32 %v661, 4
      %v663 = vand.u32 %v661, 15
      %v664 = vsub.s32 0, %v663
      %v665 = vsel %vm659, %v664, %v663
      %vm666 = vcmp.lt.s32.totalorder %v590, 0
      %v667 = vsub.s32 0, %v590
      %v668 = vsel %vm666, %v667, %v590
      %v669 = vshrl.u32 %v668, 4
      %v670 = vand.u32 %v668, 15
      %v671 = vsub.s32 0, %v670
      %v672 = vsel %vm666, %v671, %v670
      %vm673 = vcmp.lt.s32.totalorder %v591, 0
      %v674 = vsub.s32 0, %v591
      %v675 = vsel %vm673, %v674, %v591
      %v676 = vshrl.u32 %v675, 4
      %v677 = vand.u32 %v675, 15
      %v678 = vsub.s32 0, %v677
      %v679 = vsel %vm673, %v678, %v677
      %vm680 = vcmp.lt.s32.totalorder %v592, 0
      %v681 = vsub.s32 0, %v592
      %v682 = vsel %vm680, %v681, %v592
      %v683 = vshrl.u32 %v682, 4
      %v684 = vand.u32 %v682, 15
      %v685 = vsub.s32 0, %v684
      %v686 = vsel %vm680, %v685, %v684
      %vm687 = vcmp.lt.s32.totalorder %v593, 0
      %v688 = vsub.s32 0, %v593
      %v689 = vsel %vm687, %v688, %v593
      %v690 = vshrl.u32 %v689, 4
      %v691 = vand.u32 %v689, 15
      %v692 = vsub.s32 0, %v691
      %v693 = vsel %vm687, %v692, %v691
      %vm694 = vcmp.lt.s32.totalorder %v594, 0
      %v695 = vsub.s32 0, %v594
      %v696 = vsel %vm694, %v695, %v594
      %v697 = vshrl.u32 %v696, 4
      %v698 = vand.u32 %v696, 15
      %v699 = vsub.s32 0, %v698
      %v700 = vsel %vm694, %v699, %v698
      %vm701 = vcmp.lt.s32.totalorder %v595, 0
      %v702 = vsub.s32 0, %v595
      %v703 = vsel %vm701, %v702, %v595
      %v704 = vshrl.u32 %v703, 4
      %v705 = vand.u32 %v703, 15
      %v706 = vsub.s32 0, %v705
      %v707 = vsel %vm701, %v706, %v705
      %vm708 = vcmp.ne.s32.totalorder %v602, 0
      %vm709 = vcmp.ne.s32.totalorder %v609, 0
      %vm710 = vcmp.ne.s32.totalorder %v616, 0
      %vm711 = vcmp.ne.s32.totalorder %v623, 0
      %vm712 = vcmp.ne.s32.totalorder %v630, 0
      %vm713 = vcmp.ne.s32.totalorder %v637, 0
      %vm714 = vcmp.ne.s32.totalorder %v644, 0
      %vm715 = vcmp.ne.s32.totalorder %v651, 0
      %vm716 = vcmp.ne.s32.totalorder %v658, 0
      %vm717 = vcmp.ne.s32.totalorder %v665, 0
      %vm718 = vcmp.ne.s32.totalorder %v672, 0
      %vm719 = vcmp.ne.s32.totalorder %v679, 0
      %vm720 = vcmp.ne.s32.totalorder %v686, 0
      %vm721 = vcmp.ne.s32.totalorder %v693, 0
      %vm722 = vcmp.ne.s32.totalorder %v700, 0
      %vm723 = vcmp.ne.s32.totalorder %v707, 0
      %vm724 = vcmp.lt.s32.totalorder %v602, 0
      %vm725 = vcmp.lt.s32.totalorder %v609, 0
      %vm726 = vcmp.lt.s32.totalorder %v616, 0
      %vm727 = vcmp.lt.s32.totalorder %v623, 0
      %vm728 = vcmp.lt.s32.totalorder %v630, 0
      %vm729 = vcmp.lt.s32.totalorder %v637, 0
      %vm730 = vcmp.lt.s32.totalorder %v644, 0
      %vm731 = vcmp.lt.s32.totalorder %v651, 0
      %vm732 = vcmp.lt.s32.totalorder %v658, 0
      %vm733 = vcmp.lt.s32.totalorder %v665, 0
      %vm734 = vcmp.lt.s32.totalorder %v672, 0
      %vm735 = vcmp.lt.s32.totalorder %v679, 0
      %vm736 = vcmp.lt.s32.totalorder %v686, 0
      %vm737 = vcmp.lt.s32.totalorder %v693, 0
      %vm738 = vcmp.lt.s32.totalorder %v700, 0
      %vm739 = vcmp.lt.s32.totalorder %v707, 0
      %vm740 = vmand %vm724, %vm708
      %vm741 = vmand %vm725, %vm709
      %vm742 = vmand %vm726, %vm710
      %vm743 = vmand %vm727, %vm711
      %vm744 = vmand %vm728, %vm712
      %vm745 = vmand %vm729, %vm713
      %vm746 = vmand %vm730, %vm714
      %vm747 = vmand %vm731, %vm715
      %vm748 = vmand %vm732, %vm716
      %vm749 = vmand %vm733, %vm717
      %vm750 = vmand %vm734, %vm718
      %vm751 = vmand %vm735, %vm719
      %vm752 = vmand %vm736, %vm720
      %vm753 = vmand %vm737, %vm721
      %vm754 = vmand %vm738, %vm722
      %vm755 = vmand %vm739, %vm723
      %v756 = vadd.s32 %v602, 16
      %v757 = vadd.s32 %v609, 16
      %v758 = vadd.s32 %v616, 16
      %v759 = vadd.s32 %v623, 16
      %v760 = vadd.s32 %v630, 16
      %v761 = vadd.s32 %v637, 16
      %v762 = vadd.s32 %v644, 16
      %v763 = vadd.s32 %v651, 16
      %v764 = vadd.s32 %v658, 16
      %v765 = vadd.s32 %v665, 16
      %v766 = vadd.s32 %v672, 16
      %v767 = vadd.s32 %v679, 16
      %v768 = vadd.s32 %v686, 16
      %v769 = vadd.s32 %v693, 16
      %v770 = vadd.s32 %v700, 16
      %v771 = vadd.s32 %v707, 16
      %v772 = vsel %vm740, %v756, %v602
      %v773 = vsel %vm741, %v757, %v609
      %v774 = vsel %vm742, %v758, %v616
      %v775 = vsel %vm743, %v759, %v623
      %v776 = vsel %vm744, %v760, %v630
      %v777 = vsel %vm745, %v761, %v637
      %v778 = vsel %vm746, %v762, %v644
      %v779 = vsel %vm747, %v763, %v651
      %v780 = vsel %vm748, %v764, %v658
      %v781 = vsel %vm749, %v765, %v665
      %v782 = vsel %vm750, %v766, %v672
      %v783 = vsel %vm751, %v767, %v679
      %v784 = vsel %vm752, %v768, %v686
      %v785 = vsel %vm753, %v769, %v693
      %v786 = vsel %vm754, %v770, %v700
      %v787 = vsel %vm755, %v771, %v707
      %vm788 = vcmp.ne.s32.totalorder %v772, 0
      %vm789 = vcmp.ne.s32.totalorder %v773, 0
      %vm790 = vcmp.ne.s32.totalorder %v774, 0
      %vm791 = vcmp.ne.s32.totalorder %v775, 0
      %vm792 = vcmp.ne.s32.totalorder %v776, 0
      %vm793 = vcmp.ne.s32.totalorder %v777, 0
      %vm794 = vcmp.ne.s32.totalorder %v778, 0
      %vm795 = vcmp.ne.s32.totalorder %v779, 0
      %vm796 = vcmp.ne.s32.totalorder %v780, 0
      %vm797 = vcmp.ne.s32.totalorder %v781, 0
      %vm798 = vcmp.ne.s32.totalorder %v782, 0
      %vm799 = vcmp.ne.s32.totalorder %v783, 0
      %vm800 = vcmp.ne.s32.totalorder %v784, 0
      %vm801 = vcmp.ne.s32.totalorder %v785, 0
      %vm802 = vcmp.ne.s32.totalorder %v786, 0
      %vm803 = vcmp.ne.s32.totalorder %v787, 0
      %vm804 = vcmp.ne.s32.totalorder %v772, 15
      %vm805 = vcmp.ne.s32.totalorder %v773, 15
      %vm806 = vcmp.ne.s32.totalorder %v774, 15
      %vm807 = vcmp.ne.s32.totalorder %v775, 15
      %vm808 = vcmp.ne.s32.totalorder %v776, 15
      %vm809 = vcmp.ne.s32.totalorder %v777, 15
      %vm810 = vcmp.ne.s32.totalorder %v778, 15
      %vm811 = vcmp.ne.s32.totalorder %v779, 15
      %vm812 = vcmp.ne.s32.totalorder %v780, 15
      %vm813 = vcmp.ne.s32.totalorder %v781, 15
      %vm814 = vcmp.ne.s32.totalorder %v782, 15
      %vm815 = vcmp.ne.s32.totalorder %v783, 15
      %vm816 = vcmp.ne.s32.totalorder %v784, 15
      %vm817 = vcmp.ne.s32.totalorder %v785, 15
      %vm818 = vcmp.ne.s32.totalorder %v786, 15
      %vm819 = vcmp.ne.s32.totalorder %v787, 15
      %v820 = vrot.slane %v409, 7
      %v821 = vrot.slane %v411, 7
      %v822 = vrot.slane %v414, 7
      %v823 = vrot.slane %v416, 7
      %v824 = vrot.slane %v419, 7
      %v825 = vrot.slane %v421, 7
      %v826 = vrot.slane %v424, 7
      %v827 = vrot.slane %v426, 7
      %v828 = vrot.slane %v429, 7
      %v829 = vrot.slane %v431, 7
      %v830 = vrot.slane %v434, 7
      %v831 = vrot.slane %v436, 7
      %v832 = vrot.slane %v439, 7
      %v833 = vrot.slane %v441, 7
      %v834 = vrot.slane %v444, 7
      %v835 = vrot.slane %v446, 7
      %vm836 = vcmp.lt.s32.totalorder %v580, 1
      %v837 = vsel %vm836, %v834, %v835
      %v838 = vsel %vm836, %v833, %v834
      %v839 = vsel %vm836, %v832, %v833
      %v840 = vsel %vm836, %v831, %v832
      %v841 = vsel %vm836, %v830, %v831
      %v842 = vsel %vm836, %v829, %v830
      %v843 = vsel %vm836, %v828, %v829
      %v844 = vsel %vm836, %v827, %v828
      %v845 = vsel %vm836, %v826, %v827
      %v846 = vsel %vm836, %v825, %v826
      %v847 = vsel %vm836, %v824, %v825
      %v848 = vsel %vm836, %v823, %v824
      %v849 = vsel %vm836, %v822, %v823
      %v850 = vsel %vm836, %v821, %v822
      %v851 = vsel %vm836, %v820, %v821
      %v852 = vsel %vm836, %v835, %v820
      %v853 = vrot.slane %v540, 1
      %v854 = vrot.slane %v542, 1
      %v855 = vrot.slane %v545, 1
      %v856 = vrot.slane %v547, 1
      %v857 = vrot.slane %v550, 1
      %v858 = vrot.slane %v552, 1
      %v859 = vrot.slane %v555, 1
      %v860 = vrot.slane %v557, 1
      %v861 = vrot.slane %v560, 1
      %v862 = vrot.slane %v562, 1
      %v863 = vrot.slane %v565, 1
      %v864 = vrot.slane %v567, 1
      %v865 = vrot.slane %v570, 1
      %v866 = vrot.slane %v572, 1
      %v867 = vrot.slane %v575, 1
      %v868 = vrot.slane %v577, 1
      %vm869 = vcmp.lt.s32.totalorder %v580, 7
      %v870 = vsel %vm869, %v867, %v868
      %v871 = vsel %vm869, %v866, %v867
      %v872 = vsel %vm869, %v865, %v866
      %v873 = vsel %vm869, %v864, %v865
      %v874 = vsel %vm869, %v863, %v864
      %v875 = vsel %vm869, %v862, %v863
      %v876 = vsel %vm869, %v861, %v862
      %v877 = vsel %vm869, %v860, %v861
      %v878 = vsel %vm869, %v859, %v860
      %v879 = vsel %vm869, %v858, %v859
      %v880 = vsel %vm869, %v857, %v858
      %v881 = vsel %vm869, %v856, %v857
      %v882 = vsel %vm869, %v855, %v856
      %v883 = vsel %vm869, %v854, %v855
      %v884 = vsel %vm869, %v853, %v854
      %v885 = vsel %vm869, %v868, %v853
      %v886 = vsel %vm788, %v852, 0.0
      %v887 = vsel %vm789, %v851, 0.0
      %v888 = vsel %vm790, %v850, 0.0
      %v889 = vsel %vm791, %v849, 0.0
      %v890 = vsel %vm792, %v848, 0.0
      %v891 = vsel %vm793, %v847, 0.0
      %v892 = vsel %vm794, %v846, 0.0
      %v893 = vsel %vm795, %v845, 0.0
      %v894 = vsel %vm796, %v844, 0.0
      %v895 = vsel %vm797, %v843, 0.0
      %v896 = vsel %vm798, %v842, 0.0
      %v897 = vsel %vm799, %v841, 0.0
      %v898 = vsel %vm800, %v840, 0.0
      %v899 = vsel %vm801, %v839, 0.0
      %v900 = vsel %vm802, %v838, 0.0
      %v901 = vsel %vm803, %v837, 0.0
      %v918 = vunpack.c.l.b16 %v449
      %v919 = vunpack.c.l.b16 %v450
      %v920 = vunpack.c.l.b16 %v451
      %v921 = vunpack.c.l.b16 %v452
      %v922 = vunpack.c.l.b16 %v453
      %v923 = vunpack.c.l.b16 %v454
      %v924 = vunpack.c.l.b16 %v455
      %v925 = vunpack.c.l.b16 %v456
      %v926 = vunpack.c.l.b16 %v457
      %v927 = vunpack.c.l.b16 %v458
      %v928 = vunpack.c.l.b16 %v459
      %v929 = vunpack.c.l.b16 %v460
      %v930 = vunpack.c.l.b16 %v461
      %v931 = vunpack.c.l.b16 %v462
      %v932 = vunpack.c.l.b16 %v463
      %v933 = vunpack.c.l.b16 %v464
      %v934 = vpack.c.b16 %v919, %v918
      %v935 = vpack.c.b16 %v921, %v920
      %v936 = vpack.c.b16 %v923, %v922
      %v937 = vpack.c.b16 %v925, %v924
      %v938 = vpack.c.b16 %v927, %v926
      %v939 = vpack.c.b16 %v929, %v928
      %v940 = vpack.c.b16 %v931, %v930
      %v941 = vpack.c.b16 %v933, %v932
      %950 = vmatpush.bf16.msra.mxu0 %v941
      %951 = vmatpush.bf16.msra.mxu0 %v940
      %952 = vmatpush.bf16.msra.mxu0 %v939
      %953 = vmatpush.bf16.msra.mxu0 %v938
      %954 = vmatpush.bf16.msra.mxu0 %v937
      %955 = vmatpush.bf16.msra.mxu0 %v936
      %956 = vmatpush.bf16.msra.mxu0 %v935
      %957 = vmatpush.bf16.msra.mxu0 %v934
      %958 = vmatmul.bf16.gmra.mxu0 %v327
      %v959 = vpop.f32.mrf.mxu0
      %v960 = vadd.f32 %v886, %v959
      %v961 = vpop.f32.mrf.mxu0
      %v962 = vadd.f32 %v887, %v961
      %963 = vmatmul.bf16.gmra.mxu0 %v328
      %v964 = vpop.f32.mrf.mxu0
      %v965 = vadd.f32 %v888, %v964
      %v966 = vpop.f32.mrf.mxu0
      %v967 = vadd.f32 %v889, %v966
      %968 = vmatmul.bf16.gmra.mxu0 %v329
      %v969 = vpop.f32.mrf.mxu0
      %v970 = vadd.f32 %v890, %v969
      %v971 = vpop.f32.mrf.mxu0
      %v972 = vadd.f32 %v891, %v971
      %973 = vmatmul.bf16.gmra.mxu0 %v330
      %v974 = vpop.f32.mrf.mxu0
      %v975 = vadd.f32 %v892, %v974
      %v976 = vpop.f32.mrf.mxu0
      %v977 = vadd.f32 %v893, %v976
      %978 = vmatmul.bf16.gmra.mxu0 %v331
      %v979 = vpop.f32.mrf.mxu0
      %v980 = vadd.f32 %v894, %v979
      %v981 = vpop.f32.mrf.mxu0
      %v982 = vadd.f32 %v895, %v981
      %983 = vmatmul.bf16.gmra.mxu0 %v332
      %v984 = vpop.f32.mrf.mxu0
      %v985 = vadd.f32 %v896, %v984
      %v986 = vpop.f32.mrf.mxu0
      %v987 = vadd.f32 %v897, %v986
      %988 = vmatmul.bf16.gmra.mxu0 %v333
      %v989 = vpop.f32.mrf.mxu0
      %v990 = vadd.f32 %v898, %v989
      %v991 = vpop.f32.mrf.mxu0
      %v992 = vadd.f32 %v899, %v991
      %993 = vmatmul.bf16.gmra.mxu0 %v334
      %v994 = vpop.f32.mrf.mxu0
      %v995 = vadd.f32 %v900, %v994
      %v996 = vpop.f32.mrf.mxu0
      %v997 = vadd.f32 %v901, %v996
      %998 = vdwg.mxu0
      %v999 = vsel %vm804, %v884, 0.0
      %v1000 = vsel %vm805, %v883, 0.0
      %v1001 = vsel %vm806, %v882, 0.0
      %v1002 = vsel %vm807, %v881, 0.0
      %v1003 = vsel %vm808, %v880, 0.0
      %v1004 = vsel %vm809, %v879, 0.0
      %v1005 = vsel %vm810, %v878, 0.0
      %v1006 = vsel %vm811, %v877, 0.0
      %v1007 = vsel %vm812, %v876, 0.0
      %v1008 = vsel %vm813, %v875, 0.0
      %v1009 = vsel %vm814, %v874, 0.0
      %v1010 = vsel %vm815, %v873, 0.0
      %v1011 = vsel %vm816, %v872, 0.0
      %v1012 = vsel %vm817, %v871, 0.0
      %v1013 = vsel %vm818, %v870, 0.0
      %v1014 = vsel %vm819, %v885, 0.0
      %v1015 = vadd.f32 %v960, %v999
      %v1016 = vadd.f32 %v962, %v1000
      %v1017 = vadd.f32 %v965, %v1001
      %v1018 = vadd.f32 %v967, %v1002
      %v1019 = vadd.f32 %v970, %v1003
      %v1020 = vadd.f32 %v972, %v1004
      %v1021 = vadd.f32 %v975, %v1005
      %v1022 = vadd.f32 %v977, %v1006
      %v1023 = vadd.f32 %v980, %v1007
      %v1024 = vadd.f32 %v982, %v1008
      %v1025 = vadd.f32 %v985, %v1009
      %v1026 = vadd.f32 %v987, %v1010
      %v1027 = vadd.f32 %v990, %v1011
      %v1028 = vadd.f32 %v992, %v1012
      %v1029 = vadd.f32 %v995, %v1013
      %v1030 = vadd.f32 %v997, %v1014
      %v1031 = vpack.c.bf16 %v1015, %v1015
      %v1032 = vpack.c.bf16 %v1016, %v1016
      %v1033 = vpack.c.bf16 %v1017, %v1017
      %v1034 = vpack.c.bf16 %v1018, %v1018
      %v1035 = vpack.c.bf16 %v1019, %v1019
      %v1036 = vpack.c.bf16 %v1020, %v1020
      %v1037 = vpack.c.bf16 %v1021, %v1021
      %v1038 = vpack.c.bf16 %v1022, %v1022
      %v1039 = vpack.c.bf16 %v1023, %v1023
      %v1040 = vpack.c.bf16 %v1024, %v1024
      %v1041 = vpack.c.bf16 %v1025, %v1025
      %v1042 = vpack.c.bf16 %v1026, %v1026
      %v1043 = vpack.c.bf16 %v1027, %v1027
      %v1044 = vpack.c.bf16 %v1028, %v1028
      %v1045 = vpack.c.bf16 %v1029, %v1029
      %v1046 = vpack.c.bf16 %v1030, %v1030
      %1047 = vst [vmem:[%s233] sm:$0xf] %v1031
      %1048 = vst [vmem:[%s233 + $0x4] sm:$0xf] %v1032
      %1049 = vst [vmem:[%s233 + $0x8] sm:$0xf] %v1033
      %1050 = vst [vmem:[%s233 + $0xc] sm:$0xf] %v1034
      %1051 = vst [vmem:[%s233 + $0x10] sm:$0xf] %v1035
      %1052 = vst [vmem:[%s233 + $0x14] sm:$0xf] %v1036
      %1053 = vst [vmem:[%s233 + $0x18] sm:$0xf] %v1037
      %1054 = vst [vmem:[%s233 + $0x1c] sm:$0xf] %v1038
      %1055 = vst [vmem:[%s233 + $0x20] sm:$0xf] %v1039
      %1056 = vst [vmem:[%s233 + $0x24] sm:$0xf] %v1040
      %1057 = vst [vmem:[%s233 + $0x28] sm:$0xf] %v1041
      %1058 = vst [vmem:[%s233 + $0x2c] sm:$0xf] %v1042
      %1059 = vst [vmem:[%s233 + $0x30] sm:$0xf] %v1043
      %1060 = vst [vmem:[%s233 + $0x34] sm:$0xf] %v1044
      %1061 = vst [vmem:[%s233 + $0x38] sm:$0xf] %v1045
      %1062 = vst [vmem:[%s233 + $0x3c] sm:$0xf] %v1046
      %v1063 = vunpack.c.l.bf16 %v1031
      %v1064 = vunpack.c.l.bf16 %v1032
      %v1065 = vunpack.c.l.bf16 %v1033
      %v1066 = vunpack.c.l.bf16 %v1034
      %v1067 = vunpack.c.l.bf16 %v1035
      %v1068 = vunpack.c.l.bf16 %v1036
      %v1069 = vunpack.c.l.bf16 %v1037
      %v1070 = vunpack.c.l.bf16 %v1038
      %v1071 = vunpack.c.l.bf16 %v1039
      %v1072 = vunpack.c.l.bf16 %v1040
      %v1073 = vunpack.c.l.bf16 %v1041
      %v1074 = vunpack.c.l.bf16 %v1042
      %v1075 = vunpack.c.l.bf16 %v1043
      %v1076 = vunpack.c.l.bf16 %v1044
      %v1077 = vunpack.c.l.bf16 %v1045
      %v1078 = vunpack.c.l.bf16 %v1046
      %v1079 = vadd.f32 %v1063, %v1064
      %v1080 = vadd.f32 %v1079, %v1065
      %v1081 = vadd.f32 %v1080, %v1066
      %v1082 = vadd.f32 %v1081, %v1067
      %v1083 = vadd.f32 %v1082, %v1068
      %v1084 = vadd.f32 %v1083, %v1069
      %v1085 = vadd.f32 %v1084, %v1070
      %v1086 = vadd.f32 %v1085, %v1071
      %v1087 = vadd.f32 %v1086, %v1072
      %v1088 = vadd.f32 %v1087, %v1073
      %v1089 = vadd.f32 %v1088, %v1074
      %v1090 = vadd.f32 %v1089, %v1075
      %v1091 = vadd.f32 %v1090, %v1076
      %v1092 = vadd.f32 %v1091, %v1077
      %v1093 = vadd.f32 %v1092, %v1078
      %v1094 = vrot.slane %v1093, 4
      %v1095 = vadd.f32 %v1093, %v1094
      %v1096 = vrot.slane %v1095, 2
      %v1097 = vadd.f32 %v1095, %v1096
      %v1098 = vrot.slane %v1097, 1
      %v1099 = vadd.f32 %v1097, %v1098
      %1100 = vst [vmem:[%s238] sm:$0x1] %v1099
      %v1101 = vmul.f32 %v1063, %v1063
      %v1102 = vmul.f32 %v1064, %v1064
      %v1103 = vmul.f32 %v1065, %v1065
      %v1104 = vmul.f32 %v1066, %v1066
      %v1105 = vmul.f32 %v1067, %v1067
      %v1106 = vmul.f32 %v1068, %v1068
      %v1107 = vmul.f32 %v1069, %v1069
      %v1108 = vmul.f32 %v1070, %v1070
      %v1109 = vmul.f32 %v1071, %v1071
      %v1110 = vmul.f32 %v1072, %v1072
      %v1111 = vmul.f32 %v1073, %v1073
      %v1112 = vmul.f32 %v1074, %v1074
      %v1113 = vmul.f32 %v1075, %v1075
      %v1114 = vmul.f32 %v1076, %v1076
      %v1115 = vmul.f32 %v1077, %v1077
      %v1116 = vmul.f32 %v1078, %v1078
      %v1117 = vadd.f32 %v1101, %v1102
      %v1118 = vadd.f32 %v1117, %v1103
      %v1119 = vadd.f32 %v1118, %v1104
      %v1120 = vadd.f32 %v1119, %v1105
      %v1121 = vadd.f32 %v1120, %v1106
      %v1122 = vadd.f32 %v1121, %v1107
      %v1123 = vadd.f32 %v1122, %v1108
      %v1124 = vadd.f32 %v1123, %v1109
      %v1125 = vadd.f32 %v1124, %v1110
      %v1126 = vadd.f32 %v1125, %v1111
      %v1127 = vadd.f32 %v1126, %v1112
      %v1128 = vadd.f32 %v1127, %v1113
      %v1129 = vadd.f32 %v1128, %v1114
      %v1130 = vadd.f32 %v1129, %v1115
      %v1131 = vadd.f32 %v1130, %v1116
      %v1132 = vrot.slane %v1131, 4
      %v1133 = vadd.f32 %v1131, %v1132
      %v1134 = vrot.slane %v1133, 2
      %v1135 = vadd.f32 %v1133, %v1134
      %v1136 = vrot.slane %v1135, 1
      %v1137 = vadd.f32 %v1135, %v1136
      %1138 = vst [vmem:[%s238 + $0x1] sm:$0x1] %v1137
      %s1139 = smul.u32 16, %s17
      %p1140 = scmp.lt.s32.totalorder %s1139, 31
      %s1141 = scalar_select %p1140, %s1139, 31
      %s1142 = smul.addr %s1141, 4
      %s1143 = scalar_lea.vmem %s4, %s1142
      %p1144 = scmp.lt.s32.totalorder %s17, 1
      %s1145 = scalar_select %p1144, %s17, 1
      %s1146 = smul.addr %s1145, 2
      %s1147 = scalar_lea.vmem %s5, %s1146
      // Predicated region
      $region37: #{basic_block_forward.4} parent=35 // pred_check
        %p1148 = pneg %p124
      $region38: #{basic_block_forward.4} parent=35 // pred_check_branch
        %1150 = sbr.rel (%p1148) target = $region40
      $region39: #{basic_block_forward.4} parent=35 // pred_region
        %s1151 = smul.u32 16, %s17
      $region40: #{basic_block_forward.4} parent=35 // pred_fallthru
        _
      // Predicated region
      $region41: #{basic_block_forward.4} parent=35 // pred_check
        %p1152 = pneg %p150
      $region42: #{basic_block_forward.4} parent=35 // pred_check_branch
        %1154 = sbr.rel (%p1152) target = $region44
      $region43: #{basic_block_forward.4} parent=35 // pred_region
        _
      $region44: #{basic_block_forward.4} parent=35 // pred_fallthru
        _
    $region36: #{basic_block_forward.4} parent=5 // pred_fallthru
      _
    %p1155 = scmp.le.s32.totalorder 2, %s12
    // Predicated region
    $region45: #{basic_block_forward.4} parent=5 // pred_check
      %p1156 = pneg %p1155
    $region46: #{basic_block_forward.4} parent=5 // pred_check_branch
      %1158 = sbr.rel (%p1156) target = $region48
    $region47: #{basic_block_forward.4} parent=5 // pred_region
      %s1159 = ssub.s32 %s12, 2
      // Predicated region
      $region49: #{basic_block_forward.4} parent=47 // pred_check
        %p1160 = pneg %p130
      $region50: #{basic_block_forward.4} parent=47 // pred_check_branch
        %1162 = sbr.rel (%p1160) target = $region52
      $region51: #{basic_block_forward.4} parent=47 // pred_region
        %s1163 = smul.u32 16, %s18
        %p1164 = scmp.lt.s32.totalorder %s1163, 31
        %s1165 = scalar_select %p1164, %s1163, 31
        %s1166 = smul.addr %s1165, 4
        %s1167 = scalar_lea.vmem %s4, %s1166
      $region52: #{basic_block_forward.4} parent=47 // pred_fallthru
        _
      // Predicated region
      $region53: #{basic_block_forward.4} parent=47 // pred_check
        %p1168 = pneg %p156
      $region54: #{basic_block_forward.4} parent=47 // pred_check_branch
        %1170 = sbr.rel (%p1168) target = $region56
      $region55: #{basic_block_forward.4} parent=47 // pred_region
        %p1171 = scmp.lt.s32.totalorder %s18, 1
        %s1172 = scalar_select %p1171, %s18, 1
        %s1173 = smul.addr %s1172, 2
        %s1174 = scalar_lea.vmem %s5, %s1173
      $region56: #{basic_block_forward.4} parent=47 // pred_fallthru
        _
    $region48: #{basic_block_forward.4} parent=5 // pred_fallthru
      _
  $region6: #{basic_block_forward.4} parent=0 // loop_footer
    %s16 = sadd.s32 1, %s12
  $region7: #{basic_block_forward.4} parent=0 // loop_footer_branch
    %11 = sbr.rel target = $region3
  $region8: #{basic_block_forward.4} parent=0 // loop_exit
    _

// kernel: basic_block_forward.5
$region0: #{basic_block_forward.5}
  #allocation0 [shape = 'u32[]', space=smem, size = 0x4, offset = 0x4, fixed_abs, tag = 'smem constant byte address 0x4 - core index']
  #allocation1 [shape = 'u32[72,128]{1,0:T(1,128)}', space=vmem, size = 0x9000, scoped, tag = 'internal scratch']
  %s0 = inlined_call_operand.vmem [shape: bf16[256,128], index: 0, kind: input, shape index: {}]
  %s1 = inlined_call_operand.vmem [shape: f32[1,128], index: 1, kind: input, shape index: {}]
  %s2 = inlined_call_operand.vmem [shape: f32[1,128], index: 2, kind: input, shape index: {}]
  %s3 = inlined_call_operand.vmem [shape: bf16[256,128], index: 3, kind: input, shape index: {}]
  %s4 = inlined_call_operand.vmem [shape: f32[256,128], index: 4, kind: output, shape index: {}]
  %s5 = sld [smem:[#allocation0]]
  $region49: #{basic_block_forward.5} parent=0
    _
  %s7 = ssub.s32 1, %s5
  %s8 = scalar_select 0, %s7, %s5
  loop: start=0, step=1, limit=4
  $region2: #{basic_block_forward.5} parent=0 // loop_pre_header
    _
  $region3: #{basic_block_forward.5} parent=0 // loop_header
    %s10 = sphi 0, %s14
    %p11 = scmp.ge.s32.totalorder %s10, 4
    %s20 = sphi 0, %s22
    %s23 = sphi 0, %s20
    %s24 = sphi 0, %s23
    %s40 = sphi 0, %s24
    %s44 = sphi 0, %s44
    %s46 = sphi 0, %s44
    %s47 = sphi 0, %s46
    %s61 = sphi 0, %s47
    %s65 = sphi 0, %s65
    %s67 = sphi 0, %s65
    %s68 = sphi 0, %s67
    %s82 = sphi 0, %s68
    %s88 = sphi 0, %s90
    %s91 = sphi 0, %s88
    %s92 = sphi 0, %s91
    %s108 = sphi 0, %s92
    %s114 = sphi 0, %s116
    %s117 = sphi 0, %s114
    %s118 = sphi 0, %s117
    %s134 = sphi 0, %s118
  $region4: #{basic_block_forward.5} parent=0 // loop_header_branch
    %13 = sbr.rel (%p11) target = $region8
  $region5: #{basic_block_forward.5} parent=0 // loop_body
    %s15 = ssub.s32 %s10, 1
    %s16 = ssub.s32 %s10, 2
    %s17 = sadd.s32 %s10, 1
    %s18 = ssub.s32 %s10, %s17
    %p19 = scmp.eq.s32.totalorder %s18, 0
    %s21 = sadd.s32 %s20, 1
    %s22 = scalar_select %p19, %s20, %s21
    %p25 = pneg %p19
    %p26 = scmp.eq.s32.totalorder %s10, 1
    %p27 = por %p25, %p26
    %p28 = scmp.ne.s32.totalorder %s20, %s23
    %p29 = scmp.eq.s32.totalorder %s10, 0
    %p30 = por %p28, %p29
    %p31 = scmp.ne.s32.totalorder %s20, %s23
    %p32 = scmp.eq.s32.totalorder %s15, 1
    %p33 = por %p31, %p32
    %p34 = scmp.ne.s32.totalorder %s23, %s24
    %p35 = scmp.eq.s32.totalorder %s15, 0
    %p36 = por %p34, %p35
    %p37 = scmp.ne.s32.totalorder %s23, %s24
    %p38 = scmp.eq.s32.totalorder %s16, 1
    %p39 = por %p37, %p38
    %p41 = scmp.ne.s32.totalorder %s24, %s40
    %p42 = scmp.eq.s32.totalorder %s16, 0
    %p43 = por %p41, %p42
    %s45 = sadd.s32 %s44, 1
    %p48 = scmp.eq.s32.totalorder %s10, 1
    %p49 = scmp.ne.s32.totalorder %s44, %s46
    %p50 = scmp.eq.s32.totalorder %s10, 0
    %p51 = por %p49, %p50
    %p52 = scmp.ne.s32.totalorder %s44, %s46
    %p53 = scmp.eq.s32.totalorder %s15, 1
    %p54 = por %p52, %p53
    %p55 = scmp.ne.s32.totalorder %s46, %s47
    %p56 = scmp.eq.s32.totalorder %s15, 0
    %p57 = por %p55, %p56
    %p58 = scmp.ne.s32.totalorder %s46, %s47
    %p59 = scmp.eq.s32.totalorder %s16, 1
    %p60 = por %p58, %p59
    %p62 = scmp.ne.s32.totalorder %s47, %s61
    %p63 = scmp.eq.s32.totalorder %s16, 0
    %p64 = por %p62, %p63
    %s66 = sadd.s32 %s65, 1
    %p69 = scmp.eq.s32.totalorder %s10, 1
    %p70 = scmp.ne.s32.totalorder %s65, %s67
    %p71 = scmp.eq.s32.totalorder %s10, 0
    %p72 = por %p70, %p71
    %p73 = scmp.ne.s32.totalorder %s65, %s67
    %p74 = scmp.eq.s32.totalorder %s15, 1
    %p75 = por %p73, %p74
    %p76 = scmp.ne.s32.totalorder %s67, %s68
    %p77 = scmp.eq.s32.totalorder %s15, 0
    %p78 = por %p76, %p77
    %p79 = scmp.ne.s32.totalorder %s67, %s68
    %p80 = scmp.eq.s32.totalorder %s16, 1
    %p81 = por %p79, %p80
    %p83 = scmp.ne.s32.totalorder %s68, %s82
    %p84 = scmp.eq.s32.totalorder %s16, 0
    %p85 = por %p83, %p84
    %s86 = ssub.s32 %s10, %s17
    %p87 = scmp.eq.s32.totalorder %s86, 0
    %s89 = sadd.s32 %s88, 1
    %s90 = scalar_select %p87, %s88, %s89
    %p93 = pneg %p87
    %p94 = scmp.eq.s32.totalorder %s10, 1
    %p95 = por %p93, %p94
    %p96 = scmp.ne.s32.totalorder %s88, %s91
    %p97 = scmp.eq.s32.totalorder %s10, 0
    %p98 = por %p96, %p97
    %p99 = scmp.ne.s32.totalorder %s88, %s91
    %p100 = scmp.eq.s32.totalorder %s15, 1
    %p101 = por %p99, %p100
    %p102 = scmp.ne.s32.totalorder %s91, %s92
    %p103 = scmp.eq.s32.totalorder %s15, 0
    %p104 = por %p102, %p103
    %p105 = scmp.ne.s32.totalorder %s91, %s92
    %p106 = scmp.eq.s32.totalorder %s16, 1
    %p107 = por %p105, %p106
    %p109 = scmp.ne.s32.totalorder %s92, %s108
    %p110 = scmp.eq.s32.totalorder %s16, 0
    %p111 = por %p109, %p110
    %s112 = ssub.s32 %s10, %s17
    %p113 = scmp.eq.s32.totalorder %s112, 0
    %s115 = sadd.s32 %s114, 1
    %s116 = scalar_select %p113, %s114, %s115
    %p119 = pneg %p113
    %p120 = scmp.eq.s32.totalorder %s10, 1
    %p121 = por %p119, %p120
    %p122 = scmp.ne.s32.totalorder %s114, %s117
    %p123 = scmp.eq.s32.totalorder %s10, 0
    %p124 = por %p122, %p123
    %p125 = scmp.ne.s32.totalorder %s114, %s117
    %p126 = scmp.eq.s32.totalorder %s15, 1
    %p127 = por %p125, %p126
    %p128 = scmp.ne.s32.totalorder %s117, %s118
    %p129 = scmp.eq.s32.totalorder %s15, 0
    %p130 = por %p128, %p129
    %p131 = scmp.ne.s32.totalorder %s117, %s118
    %p132 = scmp.eq.s32.totalorder %s16, 1
    %p133 = por %p131, %p132
    %p135 = scmp.ne.s32.totalorder %s118, %s134
    %p136 = scmp.eq.s32.totalorder %s16, 0
    %p137 = por %p135, %p136
    %p138 = scmp.le.s32.totalorder 1, %s10
    %p139 = scmp.lt.s32.totalorder %s10, 3
    %p140 = pnand %p138, %p139
    %p141 = pneg %p140
    // Predicated region
    $region9: #{basic_block_forward.5} parent=5 // pred_check
      _
    $region10: #{basic_block_forward.5} parent=5 // pred_check_branch
      %143 = sbr.rel (%p140) target = $region12
    $region11: #{basic_block_forward.5} parent=5 // pred_region
      %s144 = ssub.s32 %s10, 1
      // Predicated region
      $region13: #{basic_block_forward.5} parent=11 // pred_check
        %p145 = pneg %p57
      $region14: #{basic_block_forward.5} parent=11 // pred_check_branch
        %147 = sbr.rel (%p145) target = $region16
      $region15: #{basic_block_forward.5} parent=11 // pred_region
        _
      $region16: #{basic_block_forward.5} parent=11 // pred_fallthru
        _
      // Predicated region
      $region17: #{basic_block_forward.5} parent=11 // pred_check
        %p148 = pneg %p78
      $region18: #{basic_block_forward.5} parent=11 // pred_check_branch
        %150 = sbr.rel (%p148) target = $region20
      $region19: #{basic_block_forward.5} parent=11 // pred_region
        _
      $region20: #{basic_block_forward.5} parent=11 // pred_fallthru
        _
    $region12: #{basic_block_forward.5} parent=5 // pred_fallthru
      _
    %p151 = scmp.lt.s32.totalorder %s10, 2
    // Predicated region
    $region21: #{basic_block_forward.5} parent=5 // pred_check
      %p152 = pneg %p151
    $region22: #{basic_block_forward.5} parent=5 // pred_check_branch
      %154 = sbr.rel (%p152) target = $region24
    $region23: #{basic_block_forward.5} parent=5 // pred_region
      // Predicated region
      $region25: #{basic_block_forward.5} parent=23 // pred_check
        %p155 = pneg %p30
      $region26: #{basic_block_forward.5} parent=23 // pred_check_branch
        %157 = sbr.rel (%p155) target = $region28
      $region27: #{basic_block_forward.5} parent=23 // pred_region
        %s158 = smul.u32 16, %s10
        %p159 = scmp.lt.s32.totalorder %s158, 31
        %s160 = scalar_select %p159, %s158, 31
        %s161 = smul.addr %s160, 4
        %s162 = scalar_lea.vmem %s0, %s161
        %s163 = smul.u32 16, %s10
      $region28: #{basic_block_forward.5} parent=23 // pred_fallthru
        _
      // Predicated region
      $region29: #{basic_block_forward.5} parent=23 // pred_check
        %p164 = pneg %p98
      $region30: #{basic_block_forward.5} parent=23 // pred_check_branch
        %166 = sbr.rel (%p164) target = $region32
      $region31: #{basic_block_forward.5} parent=23 // pred_region
        %s167 = smul.u32 16, %s10
        %p168 = scmp.lt.s32.totalorder %s167, 31
        %s169 = scalar_select %p168, %s167, 31
        %s170 = smul.addr %s169, 4
        %s171 = scalar_lea.vmem %s3, %s170
        %s172 = smul.u32 16, %s10
      $region32: #{basic_block_forward.5} parent=23 // pred_fallthru
        _
    $region24: #{basic_block_forward.5} parent=5 // pred_fallthru
      _
    %p173 = scmp.le.s32.totalorder 1, %s10
    %p174 = scmp.lt.s32.totalorder %s10, 3
    %p175 = pnand %p173, %p174
    %p176 = pneg %p175
    // Predicated region
    $region33: #{basic_block_forward.5} parent=5 // pred_check
      _
    $region34: #{basic_block_forward.5} parent=5 // pred_check_branch
      %178 = sbr.rel (%p175) target = $region36
    $region35: #{basic_block_forward.5} parent=5 // pred_region
      %s179 = ssub.s32 %s10, 1
      %s180 = smul.u32 16, %s15
      %p181 = scmp.lt.s32.totalorder %s180, 31
      %s182 = scalar_select %p181, %s180, 31
      %s183 = smul.addr %s182, 4
      %s184 = scalar_lea.vmem %s0, %s183
      %p185 = pneg %p36
      %p186 = pneg %p33
      %p187 = pneg %p57
      %p188 = pneg %p54
      %p189 = pneg %p78
      %p190 = pneg %p75
      %s191 = smul.u32 16, %s15
      %p192 = scmp.lt.s32.totalorder %s191, 31
      %s193 = scalar_select %p192, %s191, 31
      %s194 = smul.addr %s193, 4
      %s195 = scalar_lea.vmem %s3, %s194
      %p196 = pneg %p104
      %p197 = pneg %p101
      %p198 = pneg %p130
      %p199 = pneg %p127
      %s200 = smul.u32 16, %s15
      %p201 = scmp.lt.s32.totalorder %s200, 31
      %s202 = scalar_select %p201, %s200, 31
      %s203 = smul.addr %s202, 8
      %s204 = scalar_lea.vmem %s4, %s203
      %s205 = smul.u32 16, %s15
      %p206 = scmp.lt.s32.totalorder %s205, 31
      %s207 = scalar_select %p206, %s205, 31
      %s208 = smul.addr %s207, 4
      %s209 = scalar_lea.vmem %s0, %s208
      %s210 = smul.u32 16, %s15
      %s211 = smul.u32 16, %s15
      %p212 = scmp.lt.s32.totalorder %s211, 31
      %s213 = scalar_select %p212, %s211, 31
      %s214 = smul.addr %s213, 4
      %s215 = scalar_lea.vmem %s3, %s214
      %s216 = smul.u32 16, %s15
      %s217 = smul.u32 16, %s15
      %p218 = scmp.lt.s32.totalorder %s217, 31
      %s219 = scalar_select %p218, %s217, 31
      %s220 = smul.addr %s219, 8
      %s221 = scalar_lea.vmem %s4, %s220
      %s222 = smul.u32 16, %s15
      %v223 = vld [vmem:[%s209] sm:$0xf]
      %v224 = vld [vmem:[%s209 + $0x4] sm:$0xf]
      %v225 = vld [vmem:[%s209 + $0x8] sm:$0xf]
      %v226 = vld [vmem:[%s209 + $0xc] sm:$0xf]
      %v227 = vld [vmem:[%s209 + $0x10] sm:$0xf]
      %v228 = vld [vmem:[%s209 + $0x14] sm:$0xf]
      %v229 = vld [vmem:[%s209 + $0x18] sm:$0xf]
      %v230 = vld [vmem:[%s209 + $0x1c] sm:$0xf]
      %v231 = vld [vmem:[%s209 + $0x20] sm:$0xf]
      %v232 = vld [vmem:[%s209 + $0x24] sm:$0xf]
      %v233 = vld [vmem:[%s209 + $0x28] sm:$0xf]
      %v234 = vld [vmem:[%s209 + $0x2c] sm:$0xf]
      %v235 = vld [vmem:[%s209 + $0x30] sm:$0xf]
      %v236 = vld [vmem:[%s209 + $0x34] sm:$0xf]
      %v237 = vld [vmem:[%s209 + $0x38] sm:$0xf]
      %v238 = vld [vmem:[%s209 + $0x3c] sm:$0xf]
      %v239 = vunpack.c.l.bf16 %v223
      %v240 = vunpack.c.l.bf16 %v224
      %v241 = vunpack.c.l.bf16 %v225
      %v242 = vunpack.c.l.bf16 %v226
      %v243 = vunpack.c.l.bf16 %v227
      %v244 = vunpack.c.l.bf16 %v228
      %v245 = vunpack.c.l.bf16 %v229
      %v246 = vunpack.c.l.bf16 %v230
      %v247 = vunpack.c.l.bf16 %v231
      %v248 = vunpack.c.l.bf16 %v232
      %v249 = vunpack.c.l.bf16 %v233
      %v250 = vunpack.c.l.bf16 %v234
      %v251 = vunpack.c.l.bf16 %v235
      %v252 = vunpack.c.l.bf16 %v236
      %v253 = vunpack.c.l.bf16 %v237
      %v254 = vunpack.c.l.bf16 %v238
      %v255 = vld [vmem:[%s1] sm:$0x1]
      %v257 = vperm.slane %v255, 0
      %v259 = vmul.f32 %v239, %v257
      %v260 = vmul.f32 %v240, %v257
      %v261 = vmul.f32 %v241, %v257
      %v262 = vmul.f32 %v242, %v257
      %v263 = vmul.f32 %v243, %v257
      %v264 = vmul.f32 %v244, %v257
      %v265 = vmul.f32 %v245, %v257
      %v266 = vmul.f32 %v246, %v257
      %v267 = vmul.f32 %v247, %v257
      %v268 = vmul.f32 %v248, %v257
      %v269 = vmul.f32 %v249, %v257
      %v270 = vmul.f32 %v250, %v257
      %v271 = vmul.f32 %v251, %v257
      %v272 = vmul.f32 %v252, %v257
      %v273 = vmul.f32 %v253, %v257
      %v274 = vmul.f32 %v254, %v257
      %v275 = vld [vmem:[%s2] sm:$0x1]
      %v277 = vperm.slane %v275, 0
      %v279 = vadd.f32 %v259, %v277
      %v280 = vadd.f32 %v260, %v277
      %v281 = vadd.f32 %v261, %v277
      %v282 = vadd.f32 %v262, %v277
      %v283 = vadd.f32 %v263, %v277
      %v284 = vadd.f32 %v264, %v277
      %v285 = vadd.f32 %v265, %v277
      %v286 = vadd.f32 %v266, %v277
      %v287 = vadd.f32 %v267, %v277
      %v288 = vadd.f32 %v268, %v277
      %v289 = vadd.f32 %v269, %v277
      %v290 = vadd.f32 %v270, %v277
      %v291 = vadd.f32 %v271, %v277
      %v292 = vadd.f32 %v272, %v277
      %v293 = vadd.f32 %v273, %v277
      %v294 = vadd.f32 %v274, %v277
      %v295 = vld [vmem:[%s215] sm:$0xf]
      %v296 = vld [vmem:[%s215 + $0x4] sm:$0xf]
      %v297 = vld [vmem:[%s215 + $0x8] sm:$0xf]
      %v298 = vld [vmem:[%s215 + $0xc] sm:$0xf]
      %v299 = vld [vmem:[%s215 + $0x10] sm:$0xf]
      %v300 = vld [vmem:[%s215 + $0x14] sm:$0xf]
      %v301 = vld [vmem:[%s215 + $0x18] sm:$0xf]
      %v302 = vld [vmem:[%s215 + $0x1c] sm:$0xf]
      %v303 = vld [vmem:[%s215 + $0x20] sm:$0xf]
      %v304 = vld [vmem:[%s215 + $0x24] sm:$0xf]
      %v305 = vld [vmem:[%s215 + $0x28] sm:$0xf]
      %v306 = vld [vmem:[%s215 + $0x2c] sm:$0xf]
      %v307 = vld [vmem:[%s215 + $0x30] sm:$0xf]
      %v308 = vld [vmem:[%s215 + $0x34] sm:$0xf]
      %v309 = vld [vmem:[%s215 + $0x38] sm:$0xf]
      %v310 = vld [vmem:[%s215 + $0x3c] sm:$0xf]
      %v311 = vunpack.c.l.bf16 %v295
      %v312 = vunpack.c.l.bf16 %v296
      %v313 = vunpack.c.l.bf16 %v297
      %v314 = vunpack.c.l.bf16 %v298
      %v315 = vunpack.c.l.bf16 %v299
      %v316 = vunpack.c.l.bf16 %v300
      %v317 = vunpack.c.l.bf16 %v301
      %v318 = vunpack.c.l.bf16 %v302
      %v319 = vunpack.c.l.bf16 %v303
      %v320 = vunpack.c.l.bf16 %v304
      %v321 = vunpack.c.l.bf16 %v305
      %v322 = vunpack.c.l.bf16 %v306
      %v323 = vunpack.c.l.bf16 %v307
      %v324 = vunpack.c.l.bf16 %v308
      %v325 = vunpack.c.l.bf16 %v309
      %v326 = vunpack.c.l.bf16 %v310
      %v327 = vadd.f32 %v279, %v311
      %v328 = vadd.f32 %v280, %v312
      %v329 = vadd.f32 %v281, %v313
      %v330 = vadd.f32 %v282, %v314
      %v331 = vadd.f32 %v283, %v315
      %v332 = vadd.f32 %v284, %v316
      %v333 = vadd.f32 %v285, %v317
      %v334 = vadd.f32 %v286, %v318
      %v335 = vadd.f32 %v287, %v319
      %v336 = vadd.f32 %v288, %v320
      %v337 = vadd.f32 %v289, %v321
      %v338 = vadd.f32 %v290, %v322
      %v339 = vadd.f32 %v291, %v323
      %v340 = vadd.f32 %v292, %v324
      %v341 = vadd.f32 %v293, %v325
      %v342 = vadd.f32 %v294, %v326
      %v343 = vmax.f32 %v327, 0.0
      %v344 = vmax.f32 %v328, 0.0
      %v345 = vmax.f32 %v329, 0.0
      %v346 = vmax.f32 %v330, 0.0
      %v347 = vmax.f32 %v331, 0.0
      %v348 = vmax.f32 %v332, 0.0
      %v349 = vmax.f32 %v333, 0.0
      %v350 = vmax.f32 %v334, 0.0
      %v351 = vmax.f32 %v335, 0.0
      %v352 = vmax.f32 %v336, 0.0
      %v353 = vmax.f32 %v337, 0.0
      %v354 = vmax.f32 %v338, 0.0
      %v355 = vmax.f32 %v339, 0.0
      %v356 = vmax.f32 %v340, 0.0
      %v357 = vmax.f32 %v341, 0.0
      %v358 = vmax.f32 %v342, 0.0
      %359 = vst [vmem:[%s221] sm:$0xff] %v343
      %360 = vst [vmem:[%s221 + $0x8] sm:$0xff] %v344
      %361 = vst [vmem:[%s221 + $0x10] sm:$0xff] %v345
      %362 = vst [vmem:[%s221 + $0x18] sm:$0xff] %v346
      %363 = vst [vmem:[%s221 + $0x20] sm:$0xff] %v347
      %364 = vst [vmem:[%s221 + $0x28] sm:$0xff] %v348
      %365 = vst [vmem:[%s221 + $0x30] sm:$0xff] %v349
      %366 = vst [vmem:[%s221 + $0x38] sm:$0xff] %v350
      %367 = vst [vmem:[%s221 + $0x40] sm:$0xff] %v351
      %368 = vst [vmem:[%s221 + $0x48] sm:$0xff] %v352
      %369 = vst [vmem:[%s221 + $0x50] sm:$0xff] %v353
      %370 = vst [vmem:[%s221 + $0x58] sm:$0xff] %v354
      %371 = vst [vmem:[%s221 + $0x60] sm:$0xff] %v355
      %372 = vst [vmem:[%s221 + $0x68] sm:$0xff] %v356
      %373 = vst [vmem:[%s221 + $0x70] sm:$0xff] %v357
      %374 = vst [vmem:[%s221 + $0x78] sm:$0xff] %v358
      %s375 = smul.u32 16, %s15
      %p376 = scmp.lt.s32.totalorder %s375, 31
      %s377 = scalar_select %p376, %s375, 31
      %s378 = smul.addr %s377, 8
      %s379 = scalar_lea.vmem %s4, %s378
      // Predicated region
      $region37: #{basic_block_forward.5} parent=35 // pred_check
        %p380 = pneg %p127
      $region38: #{basic_block_forward.5} parent=35 // pred_check_branch
        %382 = sbr.rel (%p380) target = $region40
      $region39: #{basic_block_forward.5} parent=35 // pred_region
        %s383 = smul.u32 16, %s15
      $region40: #{basic_block_forward.5} parent=35 // pred_fallthru
        _
    $region36: #{basic_block_forward.5} parent=5 // pred_fallthru
      _
    %p384 = scmp.le.s32.totalorder 2, %s10
    // Predicated region
    $region41: #{basic_block_forward.5} parent=5 // pred_check
      %p385 = pneg %p384
    $region42: #{basic_block_forward.5} parent=5 // pred_check_branch
      %387 = sbr.rel (%p385) target = $region44
    $region43: #{basic_block_forward.5} parent=5 // pred_region
      %s388 = ssub.s32 %s10, 2
      // Predicated region
      $region45: #{basic_block_forward.5} parent=43 // pred_check
        %p389 = pneg %p133
      $region46: #{basic_block_forward.5} parent=43 // pred_check_branch
        %391 = sbr.rel (%p389) target = $region48
      $region47: #{basic_block_forward.5} parent=43 // pred_region
        %s392 = smul.u32 16, %s16
        %p393 = scmp.lt.s32.totalorder %s392, 31
        %s394 = scalar_select %p393, %s392, 31
        %s395 = smul.addr %s394, 8
        %s396 = scalar_lea.vmem %s4, %s395
      $region48: #{basic_block_forward.5} parent=43 // pred_fallthru
        _
    $region44: #{basic_block_forward.5} parent=5 // pred_fallthru
      _
  $region6: #{basic_block_forward.5} parent=0 // loop_footer
    %s14 = sadd.s32 1, %s10
  $region7: #{basic_block_forward.5} parent=0 // loop_footer_branch
    %9 = sbr.rel target = $region3
  $region8: #{basic_block_forward.5} parent=0 // loop_exit
    _

</llo_original>
